<compile_context>
chip_gen: v5e
topology: v5e:2x2
jax: 0.10.0
libtpu: 0.0.40
codegen_flags: <defaults>
</compile_context>

<pallas_src>
import functools

import jax
import jax.numpy as jnp
from jax import lax
from jax.experimental import pallas as pl
from jax.experimental.pallas import tpu as pltpu


# --------------------------- fused decoder kernel ---------------------------
def _decoder_kernel(num_layers, T, N, H, emb_ref, ctx_ref, *rest):
    # Unpack refs: per layer (w_ih_g, w_hh_g, b_g), attention weights, outputs, scratch.
    w_ih_refs, w_hh_refs, b_refs = [], [], []
    idx = 0
    for _ in range(num_layers):
        w_ih_refs.append(rest[idx + 0])      # (4, D_in, H)  pre-transposed, per-gate (i,f,g,o)
        w_hh_refs.append(rest[idx + 1])      # (4, H, H)     pre-transposed, per-gate
        b_refs.append(rest[idx + 2])         # (4, 1, H)     b_ih + b_hh, per-gate
        idx += 3
    w_in_ref, w_out_c_ref, w_out_q_ref = rest[idx:idx + 3]
    out_h_ref, out_a_ref = rest[idx + 3:idx + 5]
    gp_refs = rest[idx + 5:idx + 9]          # 4 x (T, N, H) per-gate input projections
    hseq_refs = rest[idx + 9:idx + 11]       # 2 x (T, N, H) ping-pong per-layer outputs

    # ------------------------- stacked LSTM (layer-major) -------------------------
    x = emb_ref[...]                         # (T, N, D_in)
    for l in range(num_layers):
        d_in = x.shape[-1]
        x2d = x.reshape(T * N, d_in)

        # Hoisted input projection for all timesteps: one matmul per gate.
        for k in range(4):
            gp = jnp.dot(x2d, w_ih_refs[l][k],
                         preferred_element_type=jnp.float32) + b_refs[l][k]
            gp_refs[k][...] = gp.reshape(T, N, H)

        w_hh = [w_hh_refs[l][k] for k in range(4)]   # hoisted weight loads
        hseq = hseq_refs[l % 2]

        def step(t, carry, w_hh=w_hh, hseq=hseq):
            h, c = carry
            g_i = gp_refs[0][t] + jnp.dot(h, w_hh[0], preferred_element_type=jnp.float32)
            g_f = gp_refs[1][t] + jnp.dot(h, w_hh[1], preferred_element_type=jnp.float32)
            g_g = gp_refs[2][t] + jnp.dot(h, w_hh[2], preferred_element_type=jnp.float32)
            g_o = gp_refs[3][t] + jnp.dot(h, w_hh[3], preferred_element_type=jnp.float32)
            i_g = jax.nn.sigmoid(g_i)
            f_g = jax.nn.sigmoid(g_f)
            g_c = jnp.tanh(g_g)
            o_g = jax.nn.sigmoid(g_o)
            c_new = f_g * c + i_g * g_c
            h_new = o_g * jnp.tanh(c_new)
            hseq[t] = h_new
            return (h_new, c_new)

        zeros = jnp.zeros((N, H), jnp.float32)
        lax.fori_loop(0, T, step, (zeros, zeros), unroll=True)
        # Inter-layer dropout: identity in eval mode.
        x = hseq[...]                        # (T, N, H): next layer input / attention query

    # ------------------------- global attention ('general') -------------------------
    h_all = x                                # (T, N, H) last-layer hidden states
    ctx = ctx_ref[...]                       # (S, N, H) native layout (no wrapper transpose)
    w_in = w_in_ref[...]                     # (H, H) = linear_in.weight.T
    w_oc = w_out_c_ref[...]                  # (H, H) = linear_out.weight[:, :H].T
    w_oq = w_out_q_ref[...]                  # (H, H) = linear_out.weight[:, H:].T

    dn_last = (((1,), (1,)), ((), ()))       # contract last dims — no in-kernel transpose

    outs_h, outs_a = [], []
    for b in range(N):
        q = h_all[:, b, :]                   # (T, H)
        cb = ctx[:, b, :]                    # (S, H)
        qp = jnp.dot(q, w_in, preferred_element_type=jnp.float32)            # (T, H)
        scores = lax.dot_general(qp, cb, dn_last,
                                 preferred_element_type=jnp.float32)         # (T, S)
        m = jnp.max(scores, axis=-1, keepdims=True)
        e = jnp.exp(scores - m)
        s = jnp.sum(e, axis=-1, keepdims=True)
        inv = pl.reciprocal(s, approx=True)  # EUP slot
        inv = inv * (2.0 - s * inv)          # one Newton step -> ~f32 accuracy
        p = e * inv                          # softmax (T, S)
        cvec = jnp.dot(p, cb, preferred_element_type=jnp.float32)            # (T, H)
        attn_h = jnp.tanh(
            jnp.dot(cvec, w_oc, preferred_element_type=jnp.float32)
            + jnp.dot(q, w_oq, preferred_element_type=jnp.float32))
        outs_h.append(attn_h)
        outs_a.append(p)

    # Single full-tile writeback per output (no per-step partial stores).
    out_h_ref[...] = jnp.stack(outs_h, axis=1)    # (T, N, H)
    out_a_ref[...] = jnp.stack(outs_a, axis=1)    # (T, N, S)


# ------------------------------- wrapper / glue -------------------------------
def _prep_kernel_params(params, num_layers, hidden):
    """Hoist all transposes / per-gate splits out of the kernel (done once, in XLA)."""
    H = hidden
    flat = []
    for l in range(num_layers):
        w_ih = params["w_ih"][l]                       # (4H, D_in)  gate order i,f,g,o
        w_hh = params["w_hh"][l]                       # (4H, H)
        b = params["b"][l].reshape(4 * H)              # b_ih + b_hh
        w_ih_g = jnp.stack([w_ih[k * H:(k + 1) * H, :].T for k in range(4)], axis=0)
        w_hh_g = jnp.stack([w_hh[k * H:(k + 1) * H, :].T for k in range(4)], axis=0)
        b_g = jnp.stack([b[k * H:(k + 1) * H].reshape(1, H) for k in range(4)], axis=0)
        flat += [w_ih_g, w_hh_g, b_g]
    flat += [params["w_in"].T, params["w_out_c"].T, params["w_out_q"].T]
    return flat


def rnn_decoder_forward(tgt, context, params, num_layers, hidden):
    """tgt: (T, N) int32, context: (S, N, H) f32 -> (dec_outs (T,N,H), attn (T,N,S))."""
    emb = jnp.take(params["embedding"], tgt, axis=0)   # (T, N, D) — glue gather
    T, N, _ = emb.shape
    S = context.shape[0]
    flat = _prep_kernel_params(params, num_layers, hidden)

    kernel = functools.partial(_decoder_kernel, num_layers, T, N, hidden)
    dec_outs, attn = pl.pallas_call(
        kernel,
        out_shape=(jax.ShapeDtypeStruct((T, N, hidden), jnp.float32),
                   jax.ShapeDtypeStruct((T, N, S), jnp.float32)),
        scratch_shapes=[pltpu.VMEM((T, N, hidden), jnp.float32) for _ in range(6)],
    )(emb, context, *flat)
    # Output dropout: identity (eval mode).
    return dec_outs, attn


# ----------------------------- pure-JAX reference -----------------------------
def _ref_forward(tgt, context, params, num_layers, hidden):
    emb = jnp.take(params["embedding"], tgt, axis=0)
    T, N, _ = emb.shape
    x = emb
    for l in range(num_layers):
        w_ih, w_hh, b = params["w_ih"][l], params["w_hh"][l], params["b"][l][0]

        def step(carry, xt, w_ih=w_ih, w_hh=w_hh, b=b):
            h, c = carry
            gates = xt @ w_ih.T + h @ w_hh.T + b
            i_g = jax.nn.sigmoid(gates[:, 0:hidden])
            f_g = jax.nn.sigmoid(gates[:, hidden:2 * hidden])
            g_g = jnp.tanh(gates[:, 2 * hidden:3 * hidden])
            o_g = jax.nn.sigmoid(gates[:, 3 * hidden:4 * hidden])
            c_new = f_g * c + i_g * g_g
            h_new = o_g * jnp.tanh(c_new)
            return (h_new, c_new), h_new

        init = (jnp.zeros((N, hidden), jnp.float32), jnp.zeros((N, hidden), jnp.float32))
        _, x = lax.scan(step, init, x)
    q = jnp.transpose(x, (1, 0, 2))
    ctx_b = jnp.transpose(context, (1, 0, 2))
    qp = jnp.einsum("btd,ed->bte", q, params["w_in"])
    scores = jnp.einsum("btd,bsd->bts", qp, ctx_b)
    p = jax.nn.softmax(scores, axis=-1)
    c = jnp.einsum("bts,bsd->btd", p, ctx_b)
    attn_h = jnp.tanh(jnp.einsum("btd,ed->bte", c, params["w_out_c"])
                      + jnp.einsum("btd,ed->bte", q, params["w_out_q"]))
    return jnp.transpose(attn_h, (1, 0, 2)), jnp.transpose(p, (1, 0, 2))


# ------------------------------------ main -----------------------------------
if __name__ == "__main__":
    # Small shapes consistent with the module
    T, N, S = 8, 2, 8            # tgt_len, batch, src_len
    D, H, L = 32, 32, 2          # input_size, hidden_size, num_layers
    VOCAB = 20

    key = jax.random.PRNGKey(0)
    keys = jax.random.split(key, 16)

    # Deterministic parameter init (synthetic, not a checkpoint)
    emb_table = 0.1 * jax.random.normal(keys[0], (VOCAB, D), jnp.float32)
    emb_table = emb_table.at[1].set(0.0)  # padding_idx=1

    w_ihs, w_hhs, biases = [], [], []
    scale = 1.0 / jnp.sqrt(H)
    for l in range(L):
        in_sz = D if l == 0 else H
        w_ihs.append(scale * jax.random.normal(keys[1 + 3 * l], (4 * H, in_sz), jnp.float32))
        w_hhs.append(scale * jax.random.normal(keys[2 + 3 * l], (4 * H, H), jnp.float32))
        b_ih = scale * jax.random.normal(keys[3 + 3 * l], (4 * H,), jnp.float32)
        b_hh = scale * jax.random.normal(keys[3 + 3 * l], (4 * H,), jnp.float32) * 0.5
        biases.append((b_ih + b_hh).reshape(1, 4 * H))

    w_in = 0.1 * jax.random.normal(keys[10], (H, H), jnp.float32)        # linear_in (H, H)
    w_out = 0.1 * jax.random.normal(keys[11], (H, 2 * H), jnp.float32)   # linear_out (H, 2H)
    w_out_c = w_out[:, :H]   # acts on context vector c
    w_out_q = w_out[:, H:]   # acts on query

    params = {
        "embedding": emb_table,
        "w_ih": w_ihs, "w_hh": w_hhs, "b": biases,
        "w_in": w_in, "w_out_c": w_out_c, "w_out_q": w_out_q,
    }

    tgt = jax.random.randint(keys[12], (T, N), 0, VOCAB, dtype=jnp.int32)
    context = jax.random.normal(keys[13], (S, N, H), jnp.float32)

    fwd = jax.jit(functools.partial(rnn_decoder_forward, num_layers=L, hidden=H))
    dec_outs, attn = fwd(tgt, context, params)
    dec_outs = jax.block_until_ready(dec_outs)
    attn = jax.block_until_ready(attn)

    ref_outs, ref_attn = _ref_forward(tgt, context, params, L, H)
    assert dec_outs.shape == (T, N, H) and attn.shape == (T, N, S)
    # Tolerance covers MXU f32 accumulation-order differences and the Newton-refined
    # EUP reciprocal in the softmax.
    assert jnp.allclose(dec_outs, ref_outs, atol=5e-4, rtol=5e-4)
    assert jnp.allclose(attn, ref_attn, atol=5e-4, rtol=5e-4)

    print("KERNEL_OK")
</pallas_src>

<mosaic_0001>
module attributes {stable_mosaic.version = 11 : i64} {
  func.func @_decoder_kernel(%arg0: memref<8x2x32xf32, #tpu.memory_space<vmem>>, %arg1: memref<8x2x32xf32, #tpu.memory_space<vmem>>, %arg2: memref<4x32x32xf32, #tpu.memory_space<vmem>>, %arg3: memref<4x32x32xf32, #tpu.memory_space<vmem>>, %arg4: memref<4x1x32xf32, #tpu.memory_space<vmem>>, %arg5: memref<4x32x32xf32, #tpu.memory_space<vmem>>, %arg6: memref<4x32x32xf32, #tpu.memory_space<vmem>>, %arg7: memref<4x1x32xf32, #tpu.memory_space<vmem>>, %arg8: memref<32x32xf32, #tpu.memory_space<vmem>>, %arg9: memref<32x32xf32, #tpu.memory_space<vmem>>, %arg10: memref<32x32xf32, #tpu.memory_space<vmem>>, %arg11: memref<8x2x32xf32, #tpu.memory_space<vmem>>, %arg12: memref<8x2x8xf32, #tpu.memory_space<vmem>>, %arg13: memref<8x2x32xf32, #tpu.memory_space<vmem>>, %arg14: memref<8x2x32xf32, #tpu.memory_space<vmem>>, %arg15: memref<8x2x32xf32, #tpu.memory_space<vmem>>, %arg16: memref<8x2x32xf32, #tpu.memory_space<vmem>>, %arg17: memref<8x2x32xf32, #tpu.memory_space<vmem>>, %arg18: memref<8x2x32xf32, #tpu.memory_space<vmem>>) attributes {dimension_semantics = [], scalar_prefetch = 0 : i64, scratch_operands = 6 : i64, tpu.core_type = #tpu.core_type<tc>} {
    %c0 = arith.constant 0 : index
    %c0_0 = arith.constant 0 : index
    %c0_1 = arith.constant 0 : index
    %0 = vector.load %arg0[%c0, %c0_0, %c0_1] : memref<8x2x32xf32, #tpu.memory_space<vmem>>, vector<8x2x32xf32>
    %1 = vector.shape_cast %0 : vector<8x2x32xf32> to vector<16x32xf32>
    %c0_2 = arith.constant 0 : index
    %c0_3 = arith.constant 0 : index
    %c0_4 = arith.constant 0 : index
    %2 = vector.load %arg2[%c0_2, %c0_3, %c0_4] : memref<4x32x32xf32, #tpu.memory_space<vmem>>, vector<1x32x32xf32>
    %3 = vector.shape_cast %2 : vector<1x32x32xf32> to vector<32x32xf32>
    %cst = arith.constant dense<0.000000e+00> : vector<16x32xf32>
    %4 = tpu.matmul %1, %3, %cst {dimension_numbers = #tpu.dot_dimension_numbers<[1], [0], [0], [1], [0, 0, 1, 1], [], []>} : vector<16x32xf32>, vector<32x32xf32>, vector<16x32xf32> -> vector<16x32xf32>
    %c0_5 = arith.constant 0 : index
    %c0_6 = arith.constant 0 : index
    %c0_7 = arith.constant 0 : index
    %5 = vector.load %arg4[%c0_5, %c0_6, %c0_7] : memref<4x1x32xf32, #tpu.memory_space<vmem>>, vector<1x1x32xf32>
    %6 = vector.shape_cast %5 : vector<1x1x32xf32> to vector<1x32xf32>
    %7 = vector.broadcast %6 : vector<1x32xf32> to vector<16x32xf32>
    %8 = arith.addf %4, %7 : vector<16x32xf32>
    %9 = vector.shape_cast %8 : vector<16x32xf32> to vector<8x2x32xf32>
    %c0_8 = arith.constant 0 : index
    %c0_9 = arith.constant 0 : index
    %c0_10 = arith.constant 0 : index
    %10 = vector.load %arg13[%c0_8, %c0_9, %c0_10] : memref<8x2x32xf32, #tpu.memory_space<vmem>>, vector<8x2x32xf32>
    tpu.vector_store %arg13[%c0_8, %c0_9, %c0_10], %9 {strides = array<i32>} : memref<8x2x32xf32, #tpu.memory_space<vmem>>, vector<8x2x32xf32>,
    %c1 = arith.constant 1 : index
    %c0_11 = arith.constant 0 : index
    %c0_12 = arith.constant 0 : index
    %11 = vector.load %arg2[%c1, %c0_11, %c0_12] : memref<4x32x32xf32, #tpu.memory_space<vmem>>, vector<1x32x32xf32>
    %12 = vector.shape_cast %11 : vector<1x32x32xf32> to vector<32x32xf32>
    %cst_13 = arith.constant dense<0.000000e+00> : vector<16x32xf32>
    %13 = tpu.matmul %1, %12, %cst_13 {dimension_numbers = #tpu.dot_dimension_numbers<[1], [0], [0], [1], [0, 0, 1, 1], [], []>} : vector<16x32xf32>, vector<32x32xf32>, vector<16x32xf32> -> vector<16x32xf32>
    %c1_14 = arith.constant 1 : index
    %c0_15 = arith.constant 0 : index
    %c0_16 = arith.constant 0 : index
    %14 = vector.load %arg4[%c1_14, %c0_15, %c0_16] : memref<4x1x32xf32, #tpu.memory_space<vmem>>, vector<1x1x32xf32>
    %15 = vector.shape_cast %14 : vector<1x1x32xf32> to vector<1x32xf32>
    %16 = vector.broadcast %15 : vector<1x32xf32> to vector<16x32xf32>
    %17 = arith.addf %13, %16 : vector<16x32xf32>
    %18 = vector.shape_cast %17 : vector<16x32xf32> to vector<8x2x32xf32>
    %c0_17 = arith.constant 0 : index
    %c0_18 = arith.constant 0 : index
    %c0_19 = arith.constant 0 : index
    %19 = vector.load %arg14[%c0_17, %c0_18, %c0_19] : memref<8x2x32xf32, #tpu.memory_space<vmem>>, vector<8x2x32xf32>
    tpu.vector_store %arg14[%c0_17, %c0_18, %c0_19], %18 {strides = array<i32>} : memref<8x2x32xf32, #tpu.memory_space<vmem>>, vector<8x2x32xf32>,
    %c2 = arith.constant 2 : index
    %c0_20 = arith.constant 0 : index
    %c0_21 = arith.constant 0 : index
    %20 = vector.load %arg2[%c2, %c0_20, %c0_21] : memref<4x32x32xf32, #tpu.memory_space<vmem>>, vector<1x32x32xf32>
    %21 = vector.shape_cast %20 : vector<1x32x32xf32> to vector<32x32xf32>
    %cst_22 = arith.constant dense<0.000000e+00> : vector<16x32xf32>
    %22 = tpu.matmul %1, %21, %cst_22 {dimension_numbers = #tpu.dot_dimension_numbers<[1], [0], [0], [1], [0, 0, 1, 1], [], []>} : vector<16x32xf32>, vector<32x32xf32>, vector<16x32xf32> -> vector<16x32xf32>
    %c2_23 = arith.constant 2 : index
    %c0_24 = arith.constant 0 : index
    %c0_25 = arith.constant 0 : index
    %23 = vector.load %arg4[%c2_23, %c0_24, %c0_25] : memref<4x1x32xf32, #tpu.memory_space<vmem>>, vector<1x1x32xf32>
    %24 = vector.shape_cast %23 : vector<1x1x32xf32> to vector<1x32xf32>
    %25 = vector.broadcast %24 : vector<1x32xf32> to vector<16x32xf32>
    %26 = arith.addf %22, %25 : vector<16x32xf32>
    %27 = vector.shape_cast %26 : vector<16x32xf32> to vector<8x2x32xf32>
    %c0_26 = arith.constant 0 : index
    %c0_27 = arith.constant 0 : index
    %c0_28 = arith.constant 0 : index
    %28 = vector.load %arg15[%c0_26, %c0_27, %c0_28] : memref<8x2x32xf32, #tpu.memory_space<vmem>>, vector<8x2x32xf32>
    tpu.vector_store %arg15[%c0_26, %c0_27, %c0_28], %27 {strides = array<i32>} : memref<8x2x32xf32, #tpu.memory_space<vmem>>, vector<8x2x32xf32>,
    %c3 = arith.constant 3 : index
    %c0_29 = arith.constant 0 : index
    %c0_30 = arith.constant 0 : index
    %29 = vector.load %arg2[%c3, %c0_29, %c0_30] : memref<4x32x32xf32, #tpu.memory_space<vmem>>, vector<1x32x32xf32>
    %30 = vector.shape_cast %29 : vector<1x32x32xf32> to vector<32x32xf32>
    %cst_31 = arith.constant dense<0.000000e+00> : vector<16x32xf32>
    %31 = tpu.matmul %1, %30, %cst_31 {dimension_numbers = #tpu.dot_dimension_numbers<[1], [0], [0], [1], [0, 0, 1, 1], [], []>} : vector<16x32xf32>, vector<32x32xf32>, vector<16x32xf32> -> vector<16x32xf32>
    %c3_32 = arith.constant 3 : index
    %c0_33 = arith.constant 0 : index
    %c0_34 = arith.constant 0 : index
    %32 = vector.load %arg4[%c3_32, %c0_33, %c0_34] : memref<4x1x32xf32, #tpu.memory_space<vmem>>, vector<1x1x32xf32>
    %33 = vector.shape_cast %32 : vector<1x1x32xf32> to vector<1x32xf32>
    %34 = vector.broadcast %33 : vector<1x32xf32> to vector<16x32xf32>
    %35 = arith.addf %31, %34 : vector<16x32xf32>
    %36 = vector.shape_cast %35 : vector<16x32xf32> to vector<8x2x32xf32>
    %c0_35 = arith.constant 0 : index
    %c0_36 = arith.constant 0 : index
    %c0_37 = arith.constant 0 : index
    %37 = vector.load %arg16[%c0_35, %c0_36, %c0_37] : memref<8x2x32xf32, #tpu.memory_space<vmem>>, vector<8x2x32xf32>
    tpu.vector_store %arg16[%c0_35, %c0_36, %c0_37], %36 {strides = array<i32>} : memref<8x2x32xf32, #tpu.memory_space<vmem>>, vector<8x2x32xf32>,
    %c0_38 = arith.constant 0 : index
    %c0_39 = arith.constant 0 : index
    %c0_40 = arith.constant 0 : index
    %38 = vector.load %arg3[%c0_38, %c0_39, %c0_40] : memref<4x32x32xf32, #tpu.memory_space<vmem>>, vector<1x32x32xf32>
    %39 = vector.shape_cast %38 : vector<1x32x32xf32> to vector<32x32xf32>
    %c1_41 = arith.constant 1 : index
    %c0_42 = arith.constant 0 : index
    %c0_43 = arith.constant 0 : index
    %40 = vector.load %arg3[%c1_41, %c0_42, %c0_43] : memref<4x32x32xf32, #tpu.memory_space<vmem>>, vector<1x32x32xf32>
    %41 = vector.shape_cast %40 : vector<1x32x32xf32> to vector<32x32xf32>
    %c2_44 = arith.constant 2 : index
    %c0_45 = arith.constant 0 : index
    %c0_46 = arith.constant 0 : index
    %42 = vector.load %arg3[%c2_44, %c0_45, %c0_46] : memref<4x32x32xf32, #tpu.memory_space<vmem>>, vector<1x32x32xf32>
    %43 = vector.shape_cast %42 : vector<1x32x32xf32> to vector<32x32xf32>
    %c3_47 = arith.constant 3 : index
    %c0_48 = arith.constant 0 : index
    %c0_49 = arith.constant 0 : index
    %44 = vector.load %arg3[%c3_47, %c0_48, %c0_49] : memref<4x32x32xf32, #tpu.memory_space<vmem>>, vector<1x32x32xf32>
    %45 = vector.shape_cast %44 : vector<1x32x32xf32> to vector<32x32xf32>
    %cst_50 = arith.constant 0.000000e+00 : f32
    %46 = vector.broadcast %cst_50 : f32 to vector<2x32xf32>
    %c0_i32 = arith.constant 0 : i32
    %47 = arith.index_cast %c0_i32 : i32 to index
    %c0_51 = arith.constant 0 : index
    %c0_52 = arith.constant 0 : index
    %48 = vector.load %arg13[%47, %c0_51, %c0_52] : memref<8x2x32xf32, #tpu.memory_space<vmem>>, vector<1x2x32xf32>
    %49 = vector.shape_cast %48 : vector<1x2x32xf32> to vector<2x32xf32>
    %cst_53 = arith.constant dense<0.000000e+00> : vector<2x32xf32>
    %50 = tpu.matmul %46, %39, %cst_53 {dimension_numbers = #tpu.dot_dimension_numbers<[1], [0], [0], [1], [0, 0, 1, 1], [], []>} : vector<2x32xf32>, vector<32x32xf32>, vector<2x32xf32> -> vector<2x32xf32>
    %51 = arith.addf %49, %50 : vector<2x32xf32>
    %52 = arith.index_cast %c0_i32 : i32 to index
    %c0_54 = arith.constant 0 : index
    %c0_55 = arith.constant 0 : index
    %53 = vector.load %arg14[%52, %c0_54, %c0_55] : memref<8x2x32xf32, #tpu.memory_space<vmem>>, vector<1x2x32xf32>
    %54 = vector.shape_cast %53 : vector<1x2x32xf32> to vector<2x32xf32>
    %cst_56 = arith.constant dense<0.000000e+00> : vector<2x32xf32>
    %55 = tpu.matmul %46, %41, %cst_56 {dimension_numbers = #tpu.dot_dimension_numbers<[1], [0], [0], [1], [0, 0, 1, 1], [], []>} : vector<2x32xf32>, vector<32x32xf32>, vector<2x32xf32> -> vector<2x32xf32>
    %56 = arith.addf %54, %55 : vector<2x32xf32>
    %57 = arith.index_cast %c0_i32 : i32 to index
    %c0_57 = arith.constant 0 : index
    %c0_58 = arith.constant 0 : index
    %58 = vector.load %arg15[%57, %c0_57, %c0_58] : memref<8x2x32xf32, #tpu.memory_space<vmem>>, vector<1x2x32xf32>
    %59 = vector.shape_cast %58 : vector<1x2x32xf32> to vector<2x32xf32>
    %cst_59 = arith.constant dense<0.000000e+00> : vector<2x32xf32>
    %60 = tpu.matmul %46, %43, %cst_59 {dimension_numbers = #tpu.dot_dimension_numbers<[1], [0], [0], [1], [0, 0, 1, 1], [], []>} : vector<2x32xf32>, vector<32x32xf32>, vector<2x32xf32> -> vector<2x32xf32>
    %61 = arith.addf %59, %60 : vector<2x32xf32>
    %62 = arith.index_cast %c0_i32 : i32 to index
    %c0_60 = arith.constant 0 : index
    %c0_61 = arith.constant 0 : index
    %63 = vector.load %arg16[%62, %c0_60, %c0_61] : memref<8x2x32xf32, #tpu.memory_space<vmem>>, vector<1x2x32xf32>
    %64 = vector.shape_cast %63 : vector<1x2x32xf32> to vector<2x32xf32>
    %cst_62 = arith.constant dense<0.000000e+00> : vector<2x32xf32>
    %65 = tpu.matmul %46, %45, %cst_62 {dimension_numbers = #tpu.dot_dimension_numbers<[1], [0], [0], [1], [0, 0, 1, 1], [], []>} : vector<2x32xf32>, vector<32x32xf32>, vector<2x32xf32> -> vector<2x32xf32>
    %66 = arith.addf %64, %65 : vector<2x32xf32>
    %67 = arith.negf %51 : vector<2x32xf32>
    %68 = math.exp %67 : vector<2x32xf32>
    %cst_63 = arith.constant 1.000000e+00 : f32
    %69 = vector.broadcast %cst_63 : f32 to vector<2x32xf32>
    %70 = arith.addf %69, %68 : vector<2x32xf32>
    %71 = arith.divf %69, %70 : vector<2x32xf32>
    %72 = arith.negf %56 : vector<2x32xf32>
    %73 = math.exp %72 : vector<2x32xf32>
    %cst_64 = arith.constant 1.000000e+00 : f32
    %74 = vector.broadcast %cst_64 : f32 to vector<2x32xf32>
    %75 = arith.addf %74, %73 : vector<2x32xf32>
    %76 = arith.divf %74, %75 : vector<2x32xf32>
    %77 = math.tanh %61 : vector<2x32xf32>
    %78 = arith.negf %66 : vector<2x32xf32>
    %79 = math.exp %78 : vector<2x32xf32>
    %cst_65 = arith.constant 1.000000e+00 : f32
    %80 = vector.broadcast %cst_65 : f32 to vector<2x32xf32>
    %81 = arith.addf %80, %79 : vector<2x32xf32>
    %82 = arith.divf %80, %81 : vector<2x32xf32>
    %83 = arith.mulf %76, %46 : vector<2x32xf32>
    %84 = arith.mulf %71, %77 : vector<2x32xf32>
    %85 = arith.addf %83, %84 : vector<2x32xf32>
    %86 = math.tanh %85 : vector<2x32xf32>
    %87 = arith.mulf %82, %86 : vector<2x32xf32>
    %88 = arith.index_cast %c0_i32 : i32 to index
    %c0_66 = arith.constant 0 : index
    %c0_67 = arith.constant 0 : index
    %89 = vector.load %arg17[%88, %c0_66, %c0_67] : memref<8x2x32xf32, #tpu.memory_space<vmem>>, vector<1x2x32xf32>
    %90 = vector.shape_cast %89 : vector<1x2x32xf32> to vector<2x32xf32>
    %91 = vector.shape_cast %87 : vector<2x32xf32> to vector<1x2x32xf32>
    tpu.vector_store %arg17[%88, %c0_66, %c0_67], %91 {strides = array<i32>} : memref<8x2x32xf32, #tpu.memory_space<vmem>>, vector<1x2x32xf32>,
    %c1_i32 = arith.constant 1 : i32
    %92 = arith.index_cast %c1_i32 : i32 to index
    %c0_68 = arith.constant 0 : index
    %c0_69 = arith.constant 0 : index
    %93 = vector.load %arg13[%92, %c0_68, %c0_69] : memref<8x2x32xf32, #tpu.memory_space<vmem>>, vector<1x2x32xf32>
    %94 = vector.shape_cast %93 : vector<1x2x32xf32> to vector<2x32xf32>
    %cst_70 = arith.constant dense<0.000000e+00> : vector<2x32xf32>
    %95 = tpu.matmul %87, %39, %cst_70 {dimension_numbers = #tpu.dot_dimension_numbers<[1], [0], [0], [1], [0, 0, 1, 1], [], []>} : vector<2x32xf32>, vector<32x32xf32>, vector<2x32xf32> -> vector<2x32xf32>
    %96 = arith.addf %94, %95 : vector<2x32xf32>
    %97 = arith.index_cast %c1_i32 : i32 to index
    %c0_71 = arith.constant 0 : index
    %c0_72 = arith.constant 0 : index
    %98 = vector.load %arg14[%97, %c0_71, %c0_72] : memref<8x2x32xf32, #tpu.memory_space<vmem>>, vector<1x2x32xf32>
    %99 = vector.shape_cast %98 : vector<1x2x32xf32> to vector<2x32xf32>
    %cst_73 = arith.constant dense<0.000000e+00> : vector<2x32xf32>
    %100 = tpu.matmul %87, %41, %cst_73 {dimension_numbers = #tpu.dot_dimension_numbers<[1], [0], [0], [1], [0, 0, 1, 1], [], []>} : vector<2x32xf32>, vector<32x32xf32>, vector<2x32xf32> -> vector<2x32xf32>
    %101 = arith.addf %99, %100 : vector<2x32xf32>
    %102 = arith.index_cast %c1_i32 : i32 to index
    %c0_74 = arith.constant 0 : index
    %c0_75 = arith.constant 0 : index
    %103 = vector.load %arg15[%102, %c0_74, %c0_75] : memref<8x2x32xf32, #tpu.memory_space<vmem>>, vector<1x2x32xf32>
    %104 = vector.shape_cast %103 : vector<1x2x32xf32> to vector<2x32xf32>
    %cst_76 = arith.constant dense<0.000000e+00> : vector<2x32xf32>
    %105 = tpu.matmul %87, %43, %cst_76 {dimension_numbers = #tpu.dot_dimension_numbers<[1], [0], [0], [1], [0, 0, 1, 1], [], []>} : vector<2x32xf32>, vector<32x32xf32>, vector<2x32xf32> -> vector<2x32xf32>
    %106 = arith.addf %104, %105 : vector<2x32xf32>
    %107 = arith.index_cast %c1_i32 : i32 to index
    %c0_77 = arith.constant 0 : index
    %c0_78 = arith.constant 0 : index
    %108 = vector.load %arg16[%107, %c0_77, %c0_78] : memref<8x2x32xf32, #tpu.memory_space<vmem>>, vector<1x2x32xf32>
    %109 = vector.shape_cast %108 : vector<1x2x32xf32> to vector<2x32xf32>
    %cst_79 = arith.constant dense<0.000000e+00> : vector<2x32xf32>
    %110 = tpu.matmul %87, %45, %cst_79 {dimension_numbers = #tpu.dot_dimension_numbers<[1], [0], [0], [1], [0, 0, 1, 1], [], []>} : vector<2x32xf32>, vector<32x32xf32>, vector<2x32xf32> -> vector<2x32xf32>
    %111 = arith.addf %109, %110 : vector<2x32xf32>
    %112 = arith.negf %96 : vector<2x32xf32>
    %113 = math.exp %112 : vector<2x32xf32>
    %cst_80 = arith.constant 1.000000e+00 : f32
    %114 = vector.broadcast %cst_80 : f32 to vector<2x32xf32>
    %115 = arith.addf %114, %113 : vector<2x32xf32>
    %116 = arith.divf %114, %115 : vector<2x32xf32>
    %117 = arith.negf %101 : vector<2x32xf32>
    %118 = math.exp %117 : vector<2x32xf32>
    %cst_81 = arith.constant 1.000000e+00 : f32
    %119 = vector.broadcast %cst_81 : f32 to vector<2x32xf32>
    %120 = arith.addf %119, %118 : vector<2x32xf32>
    %121 = arith.divf %119, %120 : vector<2x32xf32>
    %122 = math.tanh %106 : vector<2x32xf32>
    %123 = arith.negf %111 : vector<2x32xf32>
    %124 = math.exp %123 : vector<2x32xf32>
    %cst_82 = arith.constant 1.000000e+00 : f32
    %125 = vector.broadcast %cst_82 : f32 to vector<2x32xf32>
    %126 = arith.addf %125, %124 : vector<2x32xf32>
    %127 = arith.divf %125, %126 : vector<2x32xf32>
    %128 = arith.mulf %121, %85 : vector<2x32xf32>
    %129 = arith.mulf %116, %122 : vector<2x32xf32>
    %130 = arith.addf %128, %129 : vector<2x32xf32>
    %131 = math.tanh %130 : vector<2x32xf32>
    %132 = arith.mulf %127, %131 : vector<2x32xf32>
    %133 = arith.index_cast %c1_i32 : i32 to index
    %c0_83 = arith.constant 0 : index
    %c0_84 = arith.constant 0 : index
    %134 = vector.load %arg17[%133, %c0_83, %c0_84] : memref<8x2x32xf32, #tpu.memory_space<vmem>>, vector<1x2x32xf32>
    %135 = vector.shape_cast %134 : vector<1x2x32xf32> to vector<2x32xf32>
    %136 = vector.shape_cast %132 : vector<2x32xf32> to vector<1x2x32xf32>
    tpu.vector_store %arg17[%133, %c0_83, %c0_84], %136 {strides = array<i32>} : memref<8x2x32xf32, #tpu.memory_space<vmem>>, vector<1x2x32xf32>,
    %c2_i32 = arith.constant 2 : i32
    %137 = arith.index_cast %c2_i32 : i32 to index
    %c0_85 = arith.constant 0 : index
    %c0_86 = arith.constant 0 : index
    %138 = vector.load %arg13[%137, %c0_85, %c0_86] : memref<8x2x32xf32, #tpu.memory_space<vmem>>, vector<1x2x32xf32>
    %139 = vector.shape_cast %138 : vector<1x2x32xf32> to vector<2x32xf32>
    %cst_87 = arith.constant dense<0.000000e+00> : vector<2x32xf32>
    %140 = tpu.matmul %132, %39, %cst_87 {dimension_numbers = #tpu.dot_dimension_numbers<[1], [0], [0], [1], [0, 0, 1, 1], [], []>} : vector<2x32xf32>, vector<32x32xf32>, vector<2x32xf32> -> vector<2x32xf32>
    %141 = arith.addf %139, %140 : vector<2x32xf32>
    %142 = arith.index_cast %c2_i32 : i32 to index
    %c0_88 = arith.constant 0 : index
    %c0_89 = arith.constant 0 : index
    %143 = vector.load %arg14[%142, %c0_88, %c0_89] : memref<8x2x32xf32, #tpu.memory_space<vmem>>, vector<1x2x32xf32>
    %144 = vector.shape_cast %143 : vector<1x2x32xf32> to vector<2x32xf32>
    %cst_90 = arith.constant dense<0.000000e+00> : vector<2x32xf32>
    %145 = tpu.matmul %132, %41, %cst_90 {dimension_numbers = #tpu.dot_dimension_numbers<[1], [0], [0], [1], [0, 0, 1, 1], [], []>} : vector<2x32xf32>, vector<32x32xf32>, vector<2x32xf32> -> vector<2x32xf32>
    %146 = arith.addf %144, %145 : vector<2x32xf32>
    %147 = arith.index_cast %c2_i32 : i32 to index
    %c0_91 = arith.constant 0 : index
    %c0_92 = arith.constant 0 : index
    %148 = vector.load %arg15[%147, %c0_91, %c0_92] : memref<8x2x32xf32, #tpu.memory_space<vmem>>, vector<1x2x32xf32>
    %149 = vector.shape_cast %148 : vector<1x2x32xf32> to vector<2x32xf32>
    %cst_93 = arith.constant dense<0.000000e+00> : vector<2x32xf32>
    %150 = tpu.matmul %132, %43, %cst_93 {dimension_numbers = #tpu.dot_dimension_numbers<[1], [0], [0], [1], [0, 0, 1, 1], [], []>} : vector<2x32xf32>, vector<32x32xf32>, vector<2x32xf32> -> vector<2x32xf32>
    %151 = arith.addf %149, %150 : vector<2x32xf32>
    %152 = arith.index_cast %c2_i32 : i32 to index
    %c0_94 = arith.constant 0 : index
    %c0_95 = arith.constant 0 : index
    %153 = vector.load %arg16[%152, %c0_94, %c0_95] : memref<8x2x32xf32, #tpu.memory_space<vmem>>, vector<1x2x32xf32>
    %154 = vector.shape_cast %153 : vector<1x2x32xf32> to vector<2x32xf32>
    %cst_96 = arith.constant dense<0.000000e+00> : vector<2x32xf32>
    %155 = tpu.matmul %132, %45, %cst_96 {dimension_numbers = #tpu.dot_dimension_numbers<[1], [0], [0], [1], [0, 0, 1, 1], [], []>} : vector<2x32xf32>, vector<32x32xf32>, vector<2x32xf32> -> vector<2x32xf32>
    %156 = arith.addf %154, %155 : vector<2x32xf32>
    %157 = arith.negf %141 : vector<2x32xf32>
    %158 = math.exp %157 : vector<2x32xf32>
    %cst_97 = arith.constant 1.000000e+00 : f32
    %159 = vector.broadcast %cst_97 : f32 to vector<2x32xf32>
    %160 = arith.addf %159, %158 : vector<2x32xf32>
    %161 = arith.divf %159, %160 : vector<2x32xf32>
    %162 = arith.negf %146 : vector<2x32xf32>
    %163 = math.exp %162 : vector<2x32xf32>
    %cst_98 = arith.constant 1.000000e+00 : f32
    %164 = vector.broadcast %cst_98 : f32 to vector<2x32xf32>
    %165 = arith.addf %164, %163 : vector<2x32xf32>
    %166 = arith.divf %164, %165 : vector<2x32xf32>
    %167 = math.tanh %151 : vector<2x32xf32>
    %168 = arith.negf %156 : vector<2x32xf32>
    %169 = math.exp %168 : vector<2x32xf32>
    %cst_99 = arith.constant 1.000000e+00 : f32
    %170 = vector.broadcast %cst_99 : f32 to vector<2x32xf32>
    %171 = arith.addf %170, %169 : vector<2x32xf32>
    %172 = arith.divf %170, %171 : vector<2x32xf32>
    %173 = arith.mulf %166, %130 : vector<2x32xf32>
    %174 = arith.mulf %161, %167 : vector<2x32xf32>
    %175 = arith.addf %173, %174 : vector<2x32xf32>
    %176 = math.tanh %175 : vector<2x32xf32>
    %177 = arith.mulf %172, %176 : vector<2x32xf32>
    %178 = arith.index_cast %c2_i32 : i32 to index
    %c0_100 = arith.constant 0 : index
    %c0_101 = arith.constant 0 : index
    %179 = vector.load %arg17[%178, %c0_100, %c0_101] : memref<8x2x32xf32, #tpu.memory_space<vmem>>, vector<1x2x32xf32>
    %180 = vector.shape_cast %179 : vector<1x2x32xf32> to vector<2x32xf32>
    %181 = vector.shape_cast %177 : vector<2x32xf32> to vector<1x2x32xf32>
    tpu.vector_store %arg17[%178, %c0_100, %c0_101], %181 {strides = array<i32>} : memref<8x2x32xf32, #tpu.memory_space<vmem>>, vector<1x2x32xf32>,
    %c3_i32 = arith.constant 3 : i32
    %182 = arith.index_cast %c3_i32 : i32 to index
    %c0_102 = arith.constant 0 : index
    %c0_103 = arith.constant 0 : index
    %183 = vector.load %arg13[%182, %c0_102, %c0_103] : memref<8x2x32xf32, #tpu.memory_space<vmem>>, vector<1x2x32xf32>
    %184 = vector.shape_cast %183 : vector<1x2x32xf32> to vector<2x32xf32>
    %cst_104 = arith.constant dense<0.000000e+00> : vector<2x32xf32>
    %185 = tpu.matmul %177, %39, %cst_104 {dimension_numbers = #tpu.dot_dimension_numbers<[1], [0], [0], [1], [0, 0, 1, 1], [], []>} : vector<2x32xf32>, vector<32x32xf32>, vector<2x32xf32> -> vector<2x32xf32>
    %186 = arith.addf %184, %185 : vector<2x32xf32>
    %187 = arith.index_cast %c3_i32 : i32 to index
    %c0_105 = arith.constant 0 : index
    %c0_106 = arith.constant 0 : index
    %188 = vector.load %arg14[%187, %c0_105, %c0_106] : memref<8x2x32xf32, #tpu.memory_space<vmem>>, vector<1x2x32xf32>
    %189 = vector.shape_cast %188 : vector<1x2x32xf32> to vector<2x32xf32>
    %cst_107 = arith.constant dense<0.000000e+00> : vector<2x32xf32>
    %190 = tpu.matmul %177, %41, %cst_107 {dimension_numbers = #tpu.dot_dimension_numbers<[1], [0], [0], [1], [0, 0, 1, 1], [], []>} : vector<2x32xf32>, vector<32x32xf32>, vector<2x32xf32> -> vector<2x32xf32>
    %191 = arith.addf %189, %190 : vector<2x32xf32>
    %192 = arith.index_cast %c3_i32 : i32 to index
    %c0_108 = arith.constant 0 : index
    %c0_109 = arith.constant 0 : index
    %193 = vector.load %arg15[%192, %c0_108, %c0_109] : memref<8x2x32xf32, #tpu.memory_space<vmem>>, vector<1x2x32xf32>
    %194 = vector.shape_cast %193 : vector<1x2x32xf32> to vector<2x32xf32>
    %cst_110 = arith.constant dense<0.000000e+00> : vector<2x32xf32>
    %195 = tpu.matmul %177, %43, %cst_110 {dimension_numbers = #tpu.dot_dimension_numbers<[1], [0], [0], [1], [0, 0, 1, 1], [], []>} : vector<2x32xf32>, vector<32x32xf32>, vector<2x32xf32> -> vector<2x32xf32>
    %196 = arith.addf %194, %195 : vector<2x32xf32>
    %197 = arith.index_cast %c3_i32 : i32 to index
    %c0_111 = arith.constant 0 : index
    %c0_112 = arith.constant 0 : index
    %198 = vector.load %arg16[%197, %c0_111, %c0_112] : memref<8x2x32xf32, #tpu.memory_space<vmem>>, vector<1x2x32xf32>
    %199 = vector.shape_cast %198 : vector<1x2x32xf32> to vector<2x32xf32>
    %cst_113 = arith.constant dense<0.000000e+00> : vector<2x32xf32>
    %200 = tpu.matmul %177, %45, %cst_113 {dimension_numbers = #tpu.dot_dimension_numbers<[1], [0], [0], [1], [0, 0, 1, 1], [], []>} : vector<2x32xf32>, vector<32x32xf32>, vector<2x32xf32> -> vector<2x32xf32>
    %201 = arith.addf %199, %200 : vector<2x32xf32>
    %202 = arith.negf %186 : vector<2x32xf32>
    %203 = math.exp %202 : vector<2x32xf32>
    %cst_114 = arith.constant 1.000000e+00 : f32
    %204 = vector.broadcast %cst_114 : f32 to vector<2x32xf32>
    %205 = arith.addf %204, %203 : vector<2x32xf32>
    %206 = arith.divf %204, %205 : vector<2x32xf32>
    %207 = arith.negf %191 : vector<2x32xf32>
    %208 = math.exp %207 : vector<2x32xf32>
    %cst_115 = arith.constant 1.000000e+00 : f32
    %209 = vector.broadcast %cst_115 : f32 to vector<2x32xf32>
    %210 = arith.addf %209, %208 : vector<2x32xf32>
    %211 = arith.divf %209, %210 : vector<2x32xf32>
    %212 = math.tanh %196 : vector<2x32xf32>
    %213 = arith.negf %201 : vector<2x32xf32>
    %214 = math.exp %213 : vector<2x32xf32>
    %cst_116 = arith.constant 1.000000e+00 : f32
    %215 = vector.broadcast %cst_116 : f32 to vector<2x32xf32>
    %216 = arith.addf %215, %214 : vector<2x32xf32>
    %217 = arith.divf %215, %216 : vector<2x32xf32>
    %218 = arith.mulf %211, %175 : vector<2x32xf32>
    %219 = arith.mulf %206, %212 : vector<2x32xf32>
    %220 = arith.addf %218, %219 : vector<2x32xf32>
    %221 = math.tanh %220 : vector<2x32xf32>
    %222 = arith.mulf %217, %221 : vector<2x32xf32>
    %223 = arith.index_cast %c3_i32 : i32 to index
    %c0_117 = arith.constant 0 : index
    %c0_118 = arith.constant 0 : index
    %224 = vector.load %arg17[%223, %c0_117, %c0_118] : memref<8x2x32xf32, #tpu.memory_space<vmem>>, vector<1x2x32xf32>
    %225 = vector.shape_cast %224 : vector<1x2x32xf32> to vector<2x32xf32>
    %226 = vector.shape_cast %222 : vector<2x32xf32> to vector<1x2x32xf32>
    tpu.vector_store %arg17[%223, %c0_117, %c0_118], %226 {strides = array<i32>} : memref<8x2x32xf32, #tpu.memory_space<vmem>>, vector<1x2x32xf32>,
    %c4_i32 = arith.constant 4 : i32
    %227 = arith.index_cast %c4_i32 : i32 to index
    %c0_119 = arith.constant 0 : index
    %c0_120 = arith.constant 0 : index
    %228 = vector.load %arg13[%227, %c0_119, %c0_120] : memref<8x2x32xf32, #tpu.memory_space<vmem>>, vector<1x2x32xf32>
    %229 = vector.shape_cast %228 : vector<1x2x32xf32> to vector<2x32xf32>
    %cst_121 = arith.constant dense<0.000000e+00> : vector<2x32xf32>
    %230 = tpu.matmul %222, %39, %cst_121 {dimension_numbers = #tpu.dot_dimension_numbers<[1], [0], [0], [1], [0, 0, 1, 1], [], []>} : vector<2x32xf32>, vector<32x32xf32>, vector<2x32xf32> -> vector<2x32xf32>
    %231 = arith.addf %229, %230 : vector<2x32xf32>
    %232 = arith.index_cast %c4_i32 : i32 to index
    %c0_122 = arith.constant 0 : index
    %c0_123 = arith.constant 0 : index
    %233 = vector.load %arg14[%232, %c0_122, %c0_123] : memref<8x2x32xf32, #tpu.memory_space<vmem>>, vector<1x2x32xf32>
    %234 = vector.shape_cast %233 : vector<1x2x32xf32> to vector<2x32xf32>
    %cst_124 = arith.constant dense<0.000000e+00> : vector<2x32xf32>
    %235 = tpu.matmul %222, %41, %cst_124 {dimension_numbers = #tpu.dot_dimension_numbers<[1], [0], [0], [1], [0, 0, 1, 1], [], []>} : vector<2x32xf32>, vector<32x32xf32>, vector<2x32xf32> -> vector<2x32xf32>
    %236 = arith.addf %234, %235 : vector<2x32xf32>
    %237 = arith.index_cast %c4_i32 : i32 to index
    %c0_125 = arith.constant 0 : index
    %c0_126 = arith.constant 0 : index
    %238 = vector.load %arg15[%237, %c0_125, %c0_126] : memref<8x2x32xf32, #tpu.memory_space<vmem>>, vector<1x2x32xf32>
    %239 = vector.shape_cast %238 : vector<1x2x32xf32> to vector<2x32xf32>
    %cst_127 = arith.constant dense<0.000000e+00> : vector<2x32xf32>
    %240 = tpu.matmul %222, %43, %cst_127 {dimension_numbers = #tpu.dot_dimension_numbers<[1], [0], [0], [1], [0, 0, 1, 1], [], []>} : vector<2x32xf32>, vector<32x32xf32>, vector<2x32xf32> -> vector<2x32xf32>
    %241 = arith.addf %239, %240 : vector<2x32xf32>
    %242 = arith.index_cast %c4_i32 : i32 to index
    %c0_128 = arith.constant 0 : index
    %c0_129 = arith.constant 0 : index
    %243 = vector.load %arg16[%242, %c0_128, %c0_129] : memref<8x2x32xf32, #tpu.memory_space<vmem>>, vector<1x2x32xf32>
    %244 = vector.shape_cast %243 : vector<1x2x32xf32> to vector<2x32xf32>
    %cst_130 = arith.constant dense<0.000000e+00> : vector<2x32xf32>
    %245 = tpu.matmul %222, %45, %cst_130 {dimension_numbers = #tpu.dot_dimension_numbers<[1], [0], [0], [1], [0, 0, 1, 1], [], []>} : vector<2x32xf32>, vector<32x32xf32>, vector<2x32xf32> -> vector<2x32xf32>
    %246 = arith.addf %244, %245 : vector<2x32xf32>
    %247 = arith.negf %231 : vector<2x32xf32>
    %248 = math.exp %247 : vector<2x32xf32>
    %cst_131 = arith.constant 1.000000e+00 : f32
    %249 = vector.broadcast %cst_131 : f32 to vector<2x32xf32>
    %250 = arith.addf %249, %248 : vector<2x32xf32>
    %251 = arith.divf %249, %250 : vector<2x32xf32>
    %252 = arith.negf %236 : vector<2x32xf32>
    %253 = math.exp %252 : vector<2x32xf32>
    %cst_132 = arith.constant 1.000000e+00 : f32
    %254 = vector.broadcast %cst_132 : f32 to vector<2x32xf32>
    %255 = arith.addf %254, %253 : vector<2x32xf32>
    %256 = arith.divf %254, %255 : vector<2x32xf32>
    %257 = math.tanh %241 : vector<2x32xf32>
    %258 = arith.negf %246 : vector<2x32xf32>
    %259 = math.exp %258 : vector<2x32xf32>
    %cst_133 = arith.constant 1.000000e+00 : f32
    %260 = vector.broadcast %cst_133 : f32 to vector<2x32xf32>
    %261 = arith.addf %260, %259 : vector<2x32xf32>
    %262 = arith.divf %260, %261 : vector<2x32xf32>
    %263 = arith.mulf %256, %220 : vector<2x32xf32>
    %264 = arith.mulf %251, %257 : vector<2x32xf32>
    %265 = arith.addf %263, %264 : vector<2x32xf32>
    %266 = math.tanh %265 : vector<2x32xf32>
    %267 = arith.mulf %262, %266 : vector<2x32xf32>
    %268 = arith.index_cast %c4_i32 : i32 to index
    %c0_134 = arith.constant 0 : index
    %c0_135 = arith.constant 0 : index
    %269 = vector.load %arg17[%268, %c0_134, %c0_135] : memref<8x2x32xf32, #tpu.memory_space<vmem>>, vector<1x2x32xf32>
    %270 = vector.shape_cast %269 : vector<1x2x32xf32> to vector<2x32xf32>
    %271 = vector.shape_cast %267 : vector<2x32xf32> to vector<1x2x32xf32>
    tpu.vector_store %arg17[%268, %c0_134, %c0_135], %271 {strides = array<i32>} : memref<8x2x32xf32, #tpu.memory_space<vmem>>, vector<1x2x32xf32>,
    %c5_i32 = arith.constant 5 : i32
    %272 = arith.index_cast %c5_i32 : i32 to index
    %c0_136 = arith.constant 0 : index
    %c0_137 = arith.constant 0 : index
    %273 = vector.load %arg13[%272, %c0_136, %c0_137] : memref<8x2x32xf32, #tpu.memory_space<vmem>>, vector<1x2x32xf32>
    %274 = vector.shape_cast %273 : vector<1x2x32xf32> to vector<2x32xf32>
    %cst_138 = arith.constant dense<0.000000e+00> : vector<2x32xf32>
    %275 = tpu.matmul %267, %39, %cst_138 {dimension_numbers = #tpu.dot_dimension_numbers<[1], [0], [0], [1], [0, 0, 1, 1], [], []>} : vector<2x32xf32>, vector<32x32xf32>, vector<2x32xf32> -> vector<2x32xf32>
    %276 = arith.addf %274, %275 : vector<2x32xf32>
    %277 = arith.index_cast %c5_i32 : i32 to index
    %c0_139 = arith.constant 0 : index
    %c0_140 = arith.constant 0 : index
    %278 = vector.load %arg14[%277, %c0_139, %c0_140] : memref<8x2x32xf32, #tpu.memory_space<vmem>>, vector<1x2x32xf32>
    %279 = vector.shape_cast %278 : vector<1x2x32xf32> to vector<2x32xf32>
    %cst_141 = arith.constant dense<0.000000e+00> : vector<2x32xf32>
    %280 = tpu.matmul %267, %41, %cst_141 {dimension_numbers = #tpu.dot_dimension_numbers<[1], [0], [0], [1], [0, 0, 1, 1], [], []>} : vector<2x32xf32>, vector<32x32xf32>, vector<2x32xf32> -> vector<2x32xf32>
    %281 = arith.addf %279, %280 : vector<2x32xf32>
    %282 = arith.index_cast %c5_i32 : i32 to index
    %c0_142 = arith.constant 0 : index
    %c0_143 = arith.constant 0 : index
    %283 = vector.load %arg15[%282, %c0_142, %c0_143] : memref<8x2x32xf32, #tpu.memory_space<vmem>>, vector<1x2x32xf32>
    %284 = vector.shape_cast %283 : vector<1x2x32xf32> to vector<2x32xf32>
    %cst_144 = arith.constant dense<0.000000e+00> : vector<2x32xf32>
    %285 = tpu.matmul %267, %43, %cst_144 {dimension_numbers = #tpu.dot_dimension_numbers<[1], [0], [0], [1], [0, 0, 1, 1], [], []>} : vector<2x32xf32>, vector<32x32xf32>, vector<2x32xf32> -> vector<2x32xf32>
    %286 = arith.addf %284, %285 : vector<2x32xf32>
    %287 = arith.index_cast %c5_i32 : i32 to index
    %c0_145 = arith.constant 0 : index
    %c0_146 = arith.constant 0 : index
    %288 = vector.load %arg16[%287, %c0_145, %c0_146] : memref<8x2x32xf32, #tpu.memory_space<vmem>>, vector<1x2x32xf32>
    %289 = vector.shape_cast %288 : vector<1x2x32xf32> to vector<2x32xf32>
    %cst_147 = arith.constant dense<0.000000e+00> : vector<2x32xf32>
    %290 = tpu.matmul %267, %45, %cst_147 {dimension_numbers = #tpu.dot_dimension_numbers<[1], [0], [0], [1], [0, 0, 1, 1], [], []>} : vector<2x32xf32>, vector<32x32xf32>, vector<2x32xf32> -> vector<2x32xf32>
    %291 = arith.addf %289, %290 : vector<2x32xf32>
    %292 = arith.negf %276 : vector<2x32xf32>
    %293 = math.exp %292 : vector<2x32xf32>
    %cst_148 = arith.constant 1.000000e+00 : f32
    %294 = vector.broadcast %cst_148 : f32 to vector<2x32xf32>
    %295 = arith.addf %294, %293 : vector<2x32xf32>
    %296 = arith.divf %294, %295 : vector<2x32xf32>
    %297 = arith.negf %281 : vector<2x32xf32>
    %298 = math.exp %297 : vector<2x32xf32>
    %cst_149 = arith.constant 1.000000e+00 : f32
    %299 = vector.broadcast %cst_149 : f32 to vector<2x32xf32>
    %300 = arith.addf %299, %298 : vector<2x32xf32>
    %301 = arith.divf %299, %300 : vector<2x32xf32>
    %302 = math.tanh %286 : vector<2x32xf32>
    %303 = arith.negf %291 : vector<2x32xf32>
    %304 = math.exp %303 : vector<2x32xf32>
    %cst_150 = arith.constant 1.000000e+00 : f32
    %305 = vector.broadcast %cst_150 : f32 to vector<2x32xf32>
    %306 = arith.addf %305, %304 : vector<2x32xf32>
    %307 = arith.divf %305, %306 : vector<2x32xf32>
    %308 = arith.mulf %301, %265 : vector<2x32xf32>
    %309 = arith.mulf %296, %302 : vector<2x32xf32>
    %310 = arith.addf %308, %309 : vector<2x32xf32>
    %311 = math.tanh %310 : vector<2x32xf32>
    %312 = arith.mulf %307, %311 : vector<2x32xf32>
    %313 = arith.index_cast %c5_i32 : i32 to index
    %c0_151 = arith.constant 0 : index
    %c0_152 = arith.constant 0 : index
    %314 = vector.load %arg17[%313, %c0_151, %c0_152] : memref<8x2x32xf32, #tpu.memory_space<vmem>>, vector<1x2x32xf32>
    %315 = vector.shape_cast %314 : vector<1x2x32xf32> to vector<2x32xf32>
    %316 = vector.shape_cast %312 : vector<2x32xf32> to vector<1x2x32xf32>
    tpu.vector_store %arg17[%313, %c0_151, %c0_152], %316 {strides = array<i32>} : memref<8x2x32xf32, #tpu.memory_space<vmem>>, vector<1x2x32xf32>,
    %c6_i32 = arith.constant 6 : i32
    %317 = arith.index_cast %c6_i32 : i32 to index
    %c0_153 = arith.constant 0 : index
    %c0_154 = arith.constant 0 : index
    %318 = vector.load %arg13[%317, %c0_153, %c0_154] : memref<8x2x32xf32, #tpu.memory_space<vmem>>, vector<1x2x32xf32>
    %319 = vector.shape_cast %318 : vector<1x2x32xf32> to vector<2x32xf32>
    %cst_155 = arith.constant dense<0.000000e+00> : vector<2x32xf32>
    %320 = tpu.matmul %312, %39, %cst_155 {dimension_numbers = #tpu.dot_dimension_numbers<[1], [0], [0], [1], [0, 0, 1, 1], [], []>} : vector<2x32xf32>, vector<32x32xf32>, vector<2x32xf32> -> vector<2x32xf32>
    %321 = arith.addf %319, %320 : vector<2x32xf32>
    %322 = arith.index_cast %c6_i32 : i32 to index
    %c0_156 = arith.constant 0 : index
    %c0_157 = arith.constant 0 : index
    %323 = vector.load %arg14[%322, %c0_156, %c0_157] : memref<8x2x32xf32, #tpu.memory_space<vmem>>, vector<1x2x32xf32>
    %324 = vector.shape_cast %323 : vector<1x2x32xf32> to vector<2x32xf32>
    %cst_158 = arith.constant dense<0.000000e+00> : vector<2x32xf32>
    %325 = tpu.matmul %312, %41, %cst_158 {dimension_numbers = #tpu.dot_dimension_numbers<[1], [0], [0], [1], [0, 0, 1, 1], [], []>} : vector<2x32xf32>, vector<32x32xf32>, vector<2x32xf32> -> vector<2x32xf32>
    %326 = arith.addf %324, %325 : vector<2x32xf32>
    %327 = arith.index_cast %c6_i32 : i32 to index
    %c0_159 = arith.constant 0 : index
    %c0_160 = arith.constant 0 : index
    %328 = vector.load %arg15[%327, %c0_159, %c0_160] : memref<8x2x32xf32, #tpu.memory_space<vmem>>, vector<1x2x32xf32>
    %329 = vector.shape_cast %328 : vector<1x2x32xf32> to vector<2x32xf32>
    %cst_161 = arith.constant dense<0.000000e+00> : vector<2x32xf32>
    %330 = tpu.matmul %312, %43, %cst_161 {dimension_numbers = #tpu.dot_dimension_numbers<[1], [0], [0], [1], [0, 0, 1, 1], [], []>} : vector<2x32xf32>, vector<32x32xf32>, vector<2x32xf32> -> vector<2x32xf32>
    %331 = arith.addf %329, %330 : vector<2x32xf32>
    %332 = arith.index_cast %c6_i32 : i32 to index
    %c0_162 = arith.constant 0 : index
    %c0_163 = arith.constant 0 : index
    %333 = vector.load %arg16[%332, %c0_162, %c0_163] : memref<8x2x32xf32, #tpu.memory_space<vmem>>, vector<1x2x32xf32>
    %334 = vector.shape_cast %333 : vector<1x2x32xf32> to vector<2x32xf32>
    %cst_164 = arith.constant dense<0.000000e+00> : vector<2x32xf32>
    %335 = tpu.matmul %312, %45, %cst_164 {dimension_numbers = #tpu.dot_dimension_numbers<[1], [0], [0], [1], [0, 0, 1, 1], [], []>} : vector<2x32xf32>, vector<32x32xf32>, vector<2x32xf32> -> vector<2x32xf32>
    %336 = arith.addf %334, %335 : vector<2x32xf32>
    %337 = arith.negf %321 : vector<2x32xf32>
    %338 = math.exp %337 : vector<2x32xf32>
    %cst_165 = arith.constant 1.000000e+00 : f32
    %339 = vector.broadcast %cst_165 : f32 to vector<2x32xf32>
    %340 = arith.addf %339, %338 : vector<2x32xf32>
    %341 = arith.divf %339, %340 : vector<2x32xf32>
    %342 = arith.negf %326 : vector<2x32xf32>
    %343 = math.exp %342 : vector<2x32xf32>
    %cst_166 = arith.constant 1.000000e+00 : f32
    %344 = vector.broadcast %cst_166 : f32 to vector<2x32xf32>
    %345 = arith.addf %344, %343 : vector<2x32xf32>
    %346 = arith.divf %344, %345 : vector<2x32xf32>
    %347 = math.tanh %331 : vector<2x32xf32>
    %348 = arith.negf %336 : vector<2x32xf32>
    %349 = math.exp %348 : vector<2x32xf32>
    %cst_167 = arith.constant 1.000000e+00 : f32
    %350 = vector.broadcast %cst_167 : f32 to vector<2x32xf32>
    %351 = arith.addf %350, %349 : vector<2x32xf32>
    %352 = arith.divf %350, %351 : vector<2x32xf32>
    %353 = arith.mulf %346, %310 : vector<2x32xf32>
    %354 = arith.mulf %341, %347 : vector<2x32xf32>
    %355 = arith.addf %353, %354 : vector<2x32xf32>
    %356 = math.tanh %355 : vector<2x32xf32>
    %357 = arith.mulf %352, %356 : vector<2x32xf32>
    %358 = arith.index_cast %c6_i32 : i32 to index
    %c0_168 = arith.constant 0 : index
    %c0_169 = arith.constant 0 : index
    %359 = vector.load %arg17[%358, %c0_168, %c0_169] : memref<8x2x32xf32, #tpu.memory_space<vmem>>, vector<1x2x32xf32>
    %360 = vector.shape_cast %359 : vector<1x2x32xf32> to vector<2x32xf32>
    %361 = vector.shape_cast %357 : vector<2x32xf32> to vector<1x2x32xf32>
    tpu.vector_store %arg17[%358, %c0_168, %c0_169], %361 {strides = array<i32>} : memref<8x2x32xf32, #tpu.memory_space<vmem>>, vector<1x2x32xf32>,
    %c7_i32 = arith.constant 7 : i32
    %362 = arith.index_cast %c7_i32 : i32 to index
    %c0_170 = arith.constant 0 : index
    %c0_171 = arith.constant 0 : index
    %363 = vector.load %arg13[%362, %c0_170, %c0_171] : memref<8x2x32xf32, #tpu.memory_space<vmem>>, vector<1x2x32xf32>
    %364 = vector.shape_cast %363 : vector<1x2x32xf32> to vector<2x32xf32>
    %cst_172 = arith.constant dense<0.000000e+00> : vector<2x32xf32>
    %365 = tpu.matmul %357, %39, %cst_172 {dimension_numbers = #tpu.dot_dimension_numbers<[1], [0], [0], [1], [0, 0, 1, 1], [], []>} : vector<2x32xf32>, vector<32x32xf32>, vector<2x32xf32> -> vector<2x32xf32>
    %366 = arith.addf %364, %365 : vector<2x32xf32>
    %367 = arith.index_cast %c7_i32 : i32 to index
    %c0_173 = arith.constant 0 : index
    %c0_174 = arith.constant 0 : index
    %368 = vector.load %arg14[%367, %c0_173, %c0_174] : memref<8x2x32xf32, #tpu.memory_space<vmem>>, vector<1x2x32xf32>
    %369 = vector.shape_cast %368 : vector<1x2x32xf32> to vector<2x32xf32>
    %cst_175 = arith.constant dense<0.000000e+00> : vector<2x32xf32>
    %370 = tpu.matmul %357, %41, %cst_175 {dimension_numbers = #tpu.dot_dimension_numbers<[1], [0], [0], [1], [0, 0, 1, 1], [], []>} : vector<2x32xf32>, vector<32x32xf32>, vector<2x32xf32> -> vector<2x32xf32>
    %371 = arith.addf %369, %370 : vector<2x32xf32>
    %372 = arith.index_cast %c7_i32 : i32 to index
    %c0_176 = arith.constant 0 : index
    %c0_177 = arith.constant 0 : index
    %373 = vector.load %arg15[%372, %c0_176, %c0_177] : memref<8x2x32xf32, #tpu.memory_space<vmem>>, vector<1x2x32xf32>
    %374 = vector.shape_cast %373 : vector<1x2x32xf32> to vector<2x32xf32>
    %cst_178 = arith.constant dense<0.000000e+00> : vector<2x32xf32>
    %375 = tpu.matmul %357, %43, %cst_178 {dimension_numbers = #tpu.dot_dimension_numbers<[1], [0], [0], [1], [0, 0, 1, 1], [], []>} : vector<2x32xf32>, vector<32x32xf32>, vector<2x32xf32> -> vector<2x32xf32>
    %376 = arith.addf %374, %375 : vector<2x32xf32>
    %377 = arith.index_cast %c7_i32 : i32 to index
    %c0_179 = arith.constant 0 : index
    %c0_180 = arith.constant 0 : index
    %378 = vector.load %arg16[%377, %c0_179, %c0_180] : memref<8x2x32xf32, #tpu.memory_space<vmem>>, vector<1x2x32xf32>
    %379 = vector.shape_cast %378 : vector<1x2x32xf32> to vector<2x32xf32>
    %cst_181 = arith.constant dense<0.000000e+00> : vector<2x32xf32>
    %380 = tpu.matmul %357, %45, %cst_181 {dimension_numbers = #tpu.dot_dimension_numbers<[1], [0], [0], [1], [0, 0, 1, 1], [], []>} : vector<2x32xf32>, vector<32x32xf32>, vector<2x32xf32> -> vector<2x32xf32>
    %381 = arith.addf %379, %380 : vector<2x32xf32>
    %382 = arith.negf %366 : vector<2x32xf32>
    %383 = math.exp %382 : vector<2x32xf32>
    %cst_182 = arith.constant 1.000000e+00 : f32
    %384 = vector.broadcast %cst_182 : f32 to vector<2x32xf32>
    %385 = arith.addf %384, %383 : vector<2x32xf32>
    %386 = arith.divf %384, %385 : vector<2x32xf32>
    %387 = arith.negf %371 : vector<2x32xf32>
    %388 = math.exp %387 : vector<2x32xf32>
    %cst_183 = arith.constant 1.000000e+00 : f32
    %389 = vector.broadcast %cst_183 : f32 to vector<2x32xf32>
    %390 = arith.addf %389, %388 : vector<2x32xf32>
    %391 = arith.divf %389, %390 : vector<2x32xf32>
    %392 = math.tanh %376 : vector<2x32xf32>
    %393 = arith.negf %381 : vector<2x32xf32>
    %394 = math.exp %393 : vector<2x32xf32>
    %cst_184 = arith.constant 1.000000e+00 : f32
    %395 = vector.broadcast %cst_184 : f32 to vector<2x32xf32>
    %396 = arith.addf %395, %394 : vector<2x32xf32>
    %397 = arith.divf %395, %396 : vector<2x32xf32>
    %398 = arith.mulf %391, %355 : vector<2x32xf32>
    %399 = arith.mulf %386, %392 : vector<2x32xf32>
    %400 = arith.addf %398, %399 : vector<2x32xf32>
    %401 = math.tanh %400 : vector<2x32xf32>
    %402 = arith.mulf %397, %401 : vector<2x32xf32>
    %403 = arith.index_cast %c7_i32 : i32 to index
    %c0_185 = arith.constant 0 : index
    %c0_186 = arith.constant 0 : index
    %404 = vector.load %arg17[%403, %c0_185, %c0_186] : memref<8x2x32xf32, #tpu.memory_space<vmem>>, vector<1x2x32xf32>
    %405 = vector.shape_cast %404 : vector<1x2x32xf32> to vector<2x32xf32>
    %406 = vector.shape_cast %402 : vector<2x32xf32> to vector<1x2x32xf32>
    tpu.vector_store %arg17[%403, %c0_185, %c0_186], %406 {strides = array<i32>} : memref<8x2x32xf32, #tpu.memory_space<vmem>>, vector<1x2x32xf32>,
    %c8_i32 = arith.constant 8 : i32
    %c0_187 = arith.constant 0 : index
    %c0_188 = arith.constant 0 : index
    %c0_189 = arith.constant 0 : index
    %407 = vector.load %arg17[%c0_187, %c0_188, %c0_189] : memref<8x2x32xf32, #tpu.memory_space<vmem>>, vector<8x2x32xf32>
    %408 = vector.shape_cast %407 : vector<8x2x32xf32> to vector<16x32xf32>
    %c0_190 = arith.constant 0 : index
    %c0_191 = arith.constant 0 : index
    %c0_192 = arith.constant 0 : index
    %409 = vector.load %arg5[%c0_190, %c0_191, %c0_192] : memref<4x32x32xf32, #tpu.memory_space<vmem>>, vector<1x32x32xf32>
    %410 = vector.shape_cast %409 : vector<1x32x32xf32> to vector<32x32xf32>
    %cst_193 = arith.constant dense<0.000000e+00> : vector<16x32xf32>
    %411 = tpu.matmul %408, %410, %cst_193 {dimension_numbers = #tpu.dot_dimension_numbers<[1], [0], [0], [1], [0, 0, 1, 1], [], []>} : vector<16x32xf32>, vector<32x32xf32>, vector<16x32xf32> -> vector<16x32xf32>
    %c0_194 = arith.constant 0 : index
    %c0_195 = arith.constant 0 : index
    %c0_196 = arith.constant 0 : index
    %412 = vector.load %arg7[%c0_194, %c0_195, %c0_196] : memref<4x1x32xf32, #tpu.memory_space<vmem>>, vector<1x1x32xf32>
    %413 = vector.shape_cast %412 : vector<1x1x32xf32> to vector<1x32xf32>
    %414 = vector.broadcast %413 : vector<1x32xf32> to vector<16x32xf32>
    %415 = arith.addf %411, %414 : vector<16x32xf32>
    %416 = vector.shape_cast %415 : vector<16x32xf32> to vector<8x2x32xf32>
    %c0_197 = arith.constant 0 : index
    %c0_198 = arith.constant 0 : index
    %c0_199 = arith.constant 0 : index
    %417 = vector.load %arg13[%c0_197, %c0_198, %c0_199] : memref<8x2x32xf32, #tpu.memory_space<vmem>>, vector<8x2x32xf32>
    tpu.vector_store %arg13[%c0_197, %c0_198, %c0_199], %416 {strides = array<i32>} : memref<8x2x32xf32, #tpu.memory_space<vmem>>, vector<8x2x32xf32>,
    %c1_200 = arith.constant 1 : index
    %c0_201 = arith.constant 0 : index
    %c0_202 = arith.constant 0 : index
    %418 = vector.load %arg5[%c1_200, %c0_201, %c0_202] : memref<4x32x32xf32, #tpu.memory_space<vmem>>, vector<1x32x32xf32>
    %419 = vector.shape_cast %418 : vector<1x32x32xf32> to vector<32x32xf32>
    %cst_203 = arith.constant dense<0.000000e+00> : vector<16x32xf32>
    %420 = tpu.matmul %408, %419, %cst_203 {dimension_numbers = #tpu.dot_dimension_numbers<[1], [0], [0], [1], [0, 0, 1, 1], [], []>} : vector<16x32xf32>, vector<32x32xf32>, vector<16x32xf32> -> vector<16x32xf32>
    %c1_204 = arith.constant 1 : index
    %c0_205 = arith.constant 0 : index
    %c0_206 = arith.constant 0 : index
    %421 = vector.load %arg7[%c1_204, %c0_205, %c0_206] : memref<4x1x32xf32, #tpu.memory_space<vmem>>, vector<1x1x32xf32>
    %422 = vector.shape_cast %421 : vector<1x1x32xf32> to vector<1x32xf32>
    %423 = vector.broadcast %422 : vector<1x32xf32> to vector<16x32xf32>
    %424 = arith.addf %420, %423 : vector<16x32xf32>
    %425 = vector.shape_cast %424 : vector<16x32xf32> to vector<8x2x32xf32>
    %c0_207 = arith.constant 0 : index
    %c0_208 = arith.constant 0 : index
    %c0_209 = arith.constant 0 : index
    %426 = vector.load %arg14[%c0_207, %c0_208, %c0_209] : memref<8x2x32xf32, #tpu.memory_space<vmem>>, vector<8x2x32xf32>
    tpu.vector_store %arg14[%c0_207, %c0_208, %c0_209], %425 {strides = array<i32>} : memref<8x2x32xf32, #tpu.memory_space<vmem>>, vector<8x2x32xf32>,
    %c2_210 = arith.constant 2 : index
    %c0_211 = arith.constant 0 : index
    %c0_212 = arith.constant 0 : index
    %427 = vector.load %arg5[%c2_210, %c0_211, %c0_212] : memref<4x32x32xf32, #tpu.memory_space<vmem>>, vector<1x32x32xf32>
    %428 = vector.shape_cast %427 : vector<1x32x32xf32> to vector<32x32xf32>
    %cst_213 = arith.constant dense<0.000000e+00> : vector<16x32xf32>
    %429 = tpu.matmul %408, %428, %cst_213 {dimension_numbers = #tpu.dot_dimension_numbers<[1], [0], [0], [1], [0, 0, 1, 1], [], []>} : vector<16x32xf32>, vector<32x32xf32>, vector<16x32xf32> -> vector<16x32xf32>
    %c2_214 = arith.constant 2 : index
    %c0_215 = arith.constant 0 : index
    %c0_216 = arith.constant 0 : index
    %430 = vector.load %arg7[%c2_214, %c0_215, %c0_216] : memref<4x1x32xf32, #tpu.memory_space<vmem>>, vector<1x1x32xf32>
    %431 = vector.shape_cast %430 : vector<1x1x32xf32> to vector<1x32xf32>
    %432 = vector.broadcast %431 : vector<1x32xf32> to vector<16x32xf32>
    %433 = arith.addf %429, %432 : vector<16x32xf32>
    %434 = vector.shape_cast %433 : vector<16x32xf32> to vector<8x2x32xf32>
    %c0_217 = arith.constant 0 : index
    %c0_218 = arith.constant 0 : index
    %c0_219 = arith.constant 0 : index
    %435 = vector.load %arg15[%c0_217, %c0_218, %c0_219] : memref<8x2x32xf32, #tpu.memory_space<vmem>>, vector<8x2x32xf32>
    tpu.vector_store %arg15[%c0_217, %c0_218, %c0_219], %434 {strides = array<i32>} : memref<8x2x32xf32, #tpu.memory_space<vmem>>, vector<8x2x32xf32>,
    %c3_220 = arith.constant 3 : index
    %c0_221 = arith.constant 0 : index
    %c0_222 = arith.constant 0 : index
    %436 = vector.load %arg5[%c3_220, %c0_221, %c0_222] : memref<4x32x32xf32, #tpu.memory_space<vmem>>, vector<1x32x32xf32>
    %437 = vector.shape_cast %436 : vector<1x32x32xf32> to vector<32x32xf32>
    %cst_223 = arith.constant dense<0.000000e+00> : vector<16x32xf32>
    %438 = tpu.matmul %408, %437, %cst_223 {dimension_numbers = #tpu.dot_dimension_numbers<[1], [0], [0], [1], [0, 0, 1, 1], [], []>} : vector<16x32xf32>, vector<32x32xf32>, vector<16x32xf32> -> vector<16x32xf32>
    %c3_224 = arith.constant 3 : index
    %c0_225 = arith.constant 0 : index
    %c0_226 = arith.constant 0 : index
    %439 = vector.load %arg7[%c3_224, %c0_225, %c0_226] : memref<4x1x32xf32, #tpu.memory_space<vmem>>, vector<1x1x32xf32>
    %440 = vector.shape_cast %439 : vector<1x1x32xf32> to vector<1x32xf32>
    %441 = vector.broadcast %440 : vector<1x32xf32> to vector<16x32xf32>
    %442 = arith.addf %438, %441 : vector<16x32xf32>
    %443 = vector.shape_cast %442 : vector<16x32xf32> to vector<8x2x32xf32>
    %c0_227 = arith.constant 0 : index
    %c0_228 = arith.constant 0 : index
    %c0_229 = arith.constant 0 : index
    %444 = vector.load %arg16[%c0_227, %c0_228, %c0_229] : memref<8x2x32xf32, #tpu.memory_space<vmem>>, vector<8x2x32xf32>
    tpu.vector_store %arg16[%c0_227, %c0_228, %c0_229], %443 {strides = array<i32>} : memref<8x2x32xf32, #tpu.memory_space<vmem>>, vector<8x2x32xf32>,
    %c0_230 = arith.constant 0 : index
    %c0_231 = arith.constant 0 : index
    %c0_232 = arith.constant 0 : index
    %445 = vector.load %arg6[%c0_230, %c0_231, %c0_232] : memref<4x32x32xf32, #tpu.memory_space<vmem>>, vector<1x32x32xf32>
    %446 = vector.shape_cast %445 : vector<1x32x32xf32> to vector<32x32xf32>
    %c1_233 = arith.constant 1 : index
    %c0_234 = arith.constant 0 : index
    %c0_235 = arith.constant 0 : index
    %447 = vector.load %arg6[%c1_233, %c0_234, %c0_235] : memref<4x32x32xf32, #tpu.memory_space<vmem>>, vector<1x32x32xf32>
    %448 = vector.shape_cast %447 : vector<1x32x32xf32> to vector<32x32xf32>
    %c2_236 = arith.constant 2 : index
    %c0_237 = arith.constant 0 : index
    %c0_238 = arith.constant 0 : index
    %449 = vector.load %arg6[%c2_236, %c0_237, %c0_238] : memref<4x32x32xf32, #tpu.memory_space<vmem>>, vector<1x32x32xf32>
    %450 = vector.shape_cast %449 : vector<1x32x32xf32> to vector<32x32xf32>
    %c3_239 = arith.constant 3 : index
    %c0_240 = arith.constant 0 : index
    %c0_241 = arith.constant 0 : index
    %451 = vector.load %arg6[%c3_239, %c0_240, %c0_241] : memref<4x32x32xf32, #tpu.memory_space<vmem>>, vector<1x32x32xf32>
    %452 = vector.shape_cast %451 : vector<1x32x32xf32> to vector<32x32xf32>
    %cst_242 = arith.constant 0.000000e+00 : f32
    %453 = vector.broadcast %cst_242 : f32 to vector<2x32xf32>
    %c0_i32_243 = arith.constant 0 : i32
    %454 = arith.index_cast %c0_i32_243 : i32 to index
    %c0_244 = arith.constant 0 : index
    %c0_245 = arith.constant 0 : index
    %455 = vector.load %arg13[%454, %c0_244, %c0_245] : memref<8x2x32xf32, #tpu.memory_space<vmem>>, vector<1x2x32xf32>
    %456 = vector.shape_cast %455 : vector<1x2x32xf32> to vector<2x32xf32>
    %cst_246 = arith.constant dense<0.000000e+00> : vector<2x32xf32>
    %457 = tpu.matmul %453, %446, %cst_246 {dimension_numbers = #tpu.dot_dimension_numbers<[1], [0], [0], [1], [0, 0, 1, 1], [], []>} : vector<2x32xf32>, vector<32x32xf32>, vector<2x32xf32> -> vector<2x32xf32>
    %458 = arith.addf %456, %457 : vector<2x32xf32>
    %459 = arith.index_cast %c0_i32_243 : i32 to index
    %c0_247 = arith.constant 0 : index
    %c0_248 = arith.constant 0 : index
    %460 = vector.load %arg14[%459, %c0_247, %c0_248] : memref<8x2x32xf32, #tpu.memory_space<vmem>>, vector<1x2x32xf32>
    %461 = vector.shape_cast %460 : vector<1x2x32xf32> to vector<2x32xf32>
    %cst_249 = arith.constant dense<0.000000e+00> : vector<2x32xf32>
    %462 = tpu.matmul %453, %448, %cst_249 {dimension_numbers = #tpu.dot_dimension_numbers<[1], [0], [0], [1], [0, 0, 1, 1], [], []>} : vector<2x32xf32>, vector<32x32xf32>, vector<2x32xf32> -> vector<2x32xf32>
    %463 = arith.addf %461, %462 : vector<2x32xf32>
    %464 = arith.index_cast %c0_i32_243 : i32 to index
    %c0_250 = arith.constant 0 : index
    %c0_251 = arith.constant 0 : index
    %465 = vector.load %arg15[%464, %c0_250, %c0_251] : memref<8x2x32xf32, #tpu.memory_space<vmem>>, vector<1x2x32xf32>
    %466 = vector.shape_cast %465 : vector<1x2x32xf32> to vector<2x32xf32>
    %cst_252 = arith.constant dense<0.000000e+00> : vector<2x32xf32>
    %467 = tpu.matmul %453, %450, %cst_252 {dimension_numbers = #tpu.dot_dimension_numbers<[1], [0], [0], [1], [0, 0, 1, 1], [], []>} : vector<2x32xf32>, vector<32x32xf32>, vector<2x32xf32> -> vector<2x32xf32>
    %468 = arith.addf %466, %467 : vector<2x32xf32>
    %469 = arith.index_cast %c0_i32_243 : i32 to index
    %c0_253 = arith.constant 0 : index
    %c0_254 = arith.constant 0 : index
    %470 = vector.load %arg16[%469, %c0_253, %c0_254] : memref<8x2x32xf32, #tpu.memory_space<vmem>>, vector<1x2x32xf32>
    %471 = vector.shape_cast %470 : vector<1x2x32xf32> to vector<2x32xf32>
    %cst_255 = arith.constant dense<0.000000e+00> : vector<2x32xf32>
    %472 = tpu.matmul %453, %452, %cst_255 {dimension_numbers = #tpu.dot_dimension_numbers<[1], [0], [0], [1], [0, 0, 1, 1], [], []>} : vector<2x32xf32>, vector<32x32xf32>, vector<2x32xf32> -> vector<2x32xf32>
    %473 = arith.addf %471, %472 : vector<2x32xf32>
    %474 = arith.negf %458 : vector<2x32xf32>
    %475 = math.exp %474 : vector<2x32xf32>
    %cst_256 = arith.constant 1.000000e+00 : f32
    %476 = vector.broadcast %cst_256 : f32 to vector<2x32xf32>
    %477 = arith.addf %476, %475 : vector<2x32xf32>
    %478 = arith.divf %476, %477 : vector<2x32xf32>
    %479 = arith.negf %463 : vector<2x32xf32>
    %480 = math.exp %479 : vector<2x32xf32>
    %cst_257 = arith.constant 1.000000e+00 : f32
    %481 = vector.broadcast %cst_257 : f32 to vector<2x32xf32>
    %482 = arith.addf %481, %480 : vector<2x32xf32>
    %483 = arith.divf %481, %482 : vector<2x32xf32>
    %484 = math.tanh %468 : vector<2x32xf32>
    %485 = arith.negf %473 : vector<2x32xf32>
    %486 = math.exp %485 : vector<2x32xf32>
    %cst_258 = arith.constant 1.000000e+00 : f32
    %487 = vector.broadcast %cst_258 : f32 to vector<2x32xf32>
    %488 = arith.addf %487, %486 : vector<2x32xf32>
    %489 = arith.divf %487, %488 : vector<2x32xf32>
    %490 = arith.mulf %483, %453 : vector<2x32xf32>
    %491 = arith.mulf %478, %484 : vector<2x32xf32>
    %492 = arith.addf %490, %491 : vector<2x32xf32>
    %493 = math.tanh %492 : vector<2x32xf32>
    %494 = arith.mulf %489, %493 : vector<2x32xf32>
    %495 = arith.index_cast %c0_i32_243 : i32 to index
    %c0_259 = arith.constant 0 : index
    %c0_260 = arith.constant 0 : index
    %496 = vector.load %arg18[%495, %c0_259, %c0_260] : memref<8x2x32xf32, #tpu.memory_space<vmem>>, vector<1x2x32xf32>
    %497 = vector.shape_cast %496 : vector<1x2x32xf32> to vector<2x32xf32>
    %498 = vector.shape_cast %494 : vector<2x32xf32> to vector<1x2x32xf32>
    tpu.vector_store %arg18[%495, %c0_259, %c0_260], %498 {strides = array<i32>} : memref<8x2x32xf32, #tpu.memory_space<vmem>>, vector<1x2x32xf32>,
    %c1_i32_261 = arith.constant 1 : i32
    %499 = arith.index_cast %c1_i32_261 : i32 to index
    %c0_262 = arith.constant 0 : index
    %c0_263 = arith.constant 0 : index
    %500 = vector.load %arg13[%499, %c0_262, %c0_263] : memref<8x2x32xf32, #tpu.memory_space<vmem>>, vector<1x2x32xf32>
    %501 = vector.shape_cast %500 : vector<1x2x32xf32> to vector<2x32xf32>
    %cst_264 = arith.constant dense<0.000000e+00> : vector<2x32xf32>
    %502 = tpu.matmul %494, %446, %cst_264 {dimension_numbers = #tpu.dot_dimension_numbers<[1], [0], [0], [1], [0, 0, 1, 1], [], []>} : vector<2x32xf32>, vector<32x32xf32>, vector<2x32xf32> -> vector<2x32xf32>
    %503 = arith.addf %501, %502 : vector<2x32xf32>
    %504 = arith.index_cast %c1_i32_261 : i32 to index
    %c0_265 = arith.constant 0 : index
    %c0_266 = arith.constant 0 : index
    %505 = vector.load %arg14[%504, %c0_265, %c0_266] : memref<8x2x32xf32, #tpu.memory_space<vmem>>, vector<1x2x32xf32>
    %506 = vector.shape_cast %505 : vector<1x2x32xf32> to vector<2x32xf32>
    %cst_267 = arith.constant dense<0.000000e+00> : vector<2x32xf32>
    %507 = tpu.matmul %494, %448, %cst_267 {dimension_numbers = #tpu.dot_dimension_numbers<[1], [0], [0], [1], [0, 0, 1, 1], [], []>} : vector<2x32xf32>, vector<32x32xf32>, vector<2x32xf32> -> vector<2x32xf32>
    %508 = arith.addf %506, %507 : vector<2x32xf32>
    %509 = arith.index_cast %c1_i32_261 : i32 to index
    %c0_268 = arith.constant 0 : index
    %c0_269 = arith.constant 0 : index
    %510 = vector.load %arg15[%509, %c0_268, %c0_269] : memref<8x2x32xf32, #tpu.memory_space<vmem>>, vector<1x2x32xf32>
    %511 = vector.shape_cast %510 : vector<1x2x32xf32> to vector<2x32xf32>
    %cst_270 = arith.constant dense<0.000000e+00> : vector<2x32xf32>
    %512 = tpu.matmul %494, %450, %cst_270 {dimension_numbers = #tpu.dot_dimension_numbers<[1], [0], [0], [1], [0, 0, 1, 1], [], []>} : vector<2x32xf32>, vector<32x32xf32>, vector<2x32xf32> -> vector<2x32xf32>
    %513 = arith.addf %511, %512 : vector<2x32xf32>
    %514 = arith.index_cast %c1_i32_261 : i32 to index
    %c0_271 = arith.constant 0 : index
    %c0_272 = arith.constant 0 : index
    %515 = vector.load %arg16[%514, %c0_271, %c0_272] : memref<8x2x32xf32, #tpu.memory_space<vmem>>, vector<1x2x32xf32>
    %516 = vector.shape_cast %515 : vector<1x2x32xf32> to vector<2x32xf32>
    %cst_273 = arith.constant dense<0.000000e+00> : vector<2x32xf32>
    %517 = tpu.matmul %494, %452, %cst_273 {dimension_numbers = #tpu.dot_dimension_numbers<[1], [0], [0], [1], [0, 0, 1, 1], [], []>} : vector<2x32xf32>, vector<32x32xf32>, vector<2x32xf32> -> vector<2x32xf32>
    %518 = arith.addf %516, %517 : vector<2x32xf32>
    %519 = arith.negf %503 : vector<2x32xf32>
    %520 = math.exp %519 : vector<2x32xf32>
    %cst_274 = arith.constant 1.000000e+00 : f32
    %521 = vector.broadcast %cst_274 : f32 to vector<2x32xf32>
    %522 = arith.addf %521, %520 : vector<2x32xf32>
    %523 = arith.divf %521, %522 : vector<2x32xf32>
    %524 = arith.negf %508 : vector<2x32xf32>
    %525 = math.exp %524 : vector<2x32xf32>
    %cst_275 = arith.constant 1.000000e+00 : f32
    %526 = vector.broadcast %cst_275 : f32 to vector<2x32xf32>
    %527 = arith.addf %526, %525 : vector<2x32xf32>
    %528 = arith.divf %526, %527 : vector<2x32xf32>
    %529 = math.tanh %513 : vector<2x32xf32>
    %530 = arith.negf %518 : vector<2x32xf32>
    %531 = math.exp %530 : vector<2x32xf32>
    %cst_276 = arith.constant 1.000000e+00 : f32
    %532 = vector.broadcast %cst_276 : f32 to vector<2x32xf32>
    %533 = arith.addf %532, %531 : vector<2x32xf32>
    %534 = arith.divf %532, %533 : vector<2x32xf32>
    %535 = arith.mulf %528, %492 : vector<2x32xf32>
    %536 = arith.mulf %523, %529 : vector<2x32xf32>
    %537 = arith.addf %535, %536 : vector<2x32xf32>
    %538 = math.tanh %537 : vector<2x32xf32>
    %539 = arith.mulf %534, %538 : vector<2x32xf32>
    %540 = arith.index_cast %c1_i32_261 : i32 to index
    %c0_277 = arith.constant 0 : index
    %c0_278 = arith.constant 0 : index
    %541 = vector.load %arg18[%540, %c0_277, %c0_278] : memref<8x2x32xf32, #tpu.memory_space<vmem>>, vector<1x2x32xf32>
    %542 = vector.shape_cast %541 : vector<1x2x32xf32> to vector<2x32xf32>
    %543 = vector.shape_cast %539 : vector<2x32xf32> to vector<1x2x32xf32>
    tpu.vector_store %arg18[%540, %c0_277, %c0_278], %543 {strides = array<i32>} : memref<8x2x32xf32, #tpu.memory_space<vmem>>, vector<1x2x32xf32>,
    %c2_i32_279 = arith.constant 2 : i32
    %544 = arith.index_cast %c2_i32_279 : i32 to index
    %c0_280 = arith.constant 0 : index
    %c0_281 = arith.constant 0 : index
    %545 = vector.load %arg13[%544, %c0_280, %c0_281] : memref<8x2x32xf32, #tpu.memory_space<vmem>>, vector<1x2x32xf32>
    %546 = vector.shape_cast %545 : vector<1x2x32xf32> to vector<2x32xf32>
    %cst_282 = arith.constant dense<0.000000e+00> : vector<2x32xf32>
    %547 = tpu.matmul %539, %446, %cst_282 {dimension_numbers = #tpu.dot_dimension_numbers<[1], [0], [0], [1], [0, 0, 1, 1], [], []>} : vector<2x32xf32>, vector<32x32xf32>, vector<2x32xf32> -> vector<2x32xf32>
    %548 = arith.addf %546, %547 : vector<2x32xf32>
    %549 = arith.index_cast %c2_i32_279 : i32 to index
    %c0_283 = arith.constant 0 : index
    %c0_284 = arith.constant 0 : index
    %550 = vector.load %arg14[%549, %c0_283, %c0_284] : memref<8x2x32xf32, #tpu.memory_space<vmem>>, vector<1x2x32xf32>
    %551 = vector.shape_cast %550 : vector<1x2x32xf32> to vector<2x32xf32>
    %cst_285 = arith.constant dense<0.000000e+00> : vector<2x32xf32>
    %552 = tpu.matmul %539, %448, %cst_285 {dimension_numbers = #tpu.dot_dimension_numbers<[1], [0], [0], [1], [0, 0, 1, 1], [], []>} : vector<2x32xf32>, vector<32x32xf32>, vector<2x32xf32> -> vector<2x32xf32>
    %553 = arith.addf %551, %552 : vector<2x32xf32>
    %554 = arith.index_cast %c2_i32_279 : i32 to index
    %c0_286 = arith.constant 0 : index
    %c0_287 = arith.constant 0 : index
    %555 = vector.load %arg15[%554, %c0_286, %c0_287] : memref<8x2x32xf32, #tpu.memory_space<vmem>>, vector<1x2x32xf32>
    %556 = vector.shape_cast %555 : vector<1x2x32xf32> to vector<2x32xf32>
    %cst_288 = arith.constant dense<0.000000e+00> : vector<2x32xf32>
    %557 = tpu.matmul %539, %450, %cst_288 {dimension_numbers = #tpu.dot_dimension_numbers<[1], [0], [0], [1], [0, 0, 1, 1], [], []>} : vector<2x32xf32>, vector<32x32xf32>, vector<2x32xf32> -> vector<2x32xf32>
    %558 = arith.addf %556, %557 : vector<2x32xf32>
    %559 = arith.index_cast %c2_i32_279 : i32 to index
    %c0_289 = arith.constant 0 : index
    %c0_290 = arith.constant 0 : index
    %560 = vector.load %arg16[%559, %c0_289, %c0_290] : memref<8x2x32xf32, #tpu.memory_space<vmem>>, vector<1x2x32xf32>
    %561 = vector.shape_cast %560 : vector<1x2x32xf32> to vector<2x32xf32>
    %cst_291 = arith.constant dense<0.000000e+00> : vector<2x32xf32>
    %562 = tpu.matmul %539, %452, %cst_291 {dimension_numbers = #tpu.dot_dimension_numbers<[1], [0], [0], [1], [0, 0, 1, 1], [], []>} : vector<2x32xf32>, vector<32x32xf32>, vector<2x32xf32> -> vector<2x32xf32>
    %563 = arith.addf %561, %562 : vector<2x32xf32>
    %564 = arith.negf %548 : vector<2x32xf32>
    %565 = math.exp %564 : vector<2x32xf32>
    %cst_292 = arith.constant 1.000000e+00 : f32
    %566 = vector.broadcast %cst_292 : f32 to vector<2x32xf32>
    %567 = arith.addf %566, %565 : vector<2x32xf32>
    %568 = arith.divf %566, %567 : vector<2x32xf32>
    %569 = arith.negf %553 : vector<2x32xf32>
    %570 = math.exp %569 : vector<2x32xf32>
    %cst_293 = arith.constant 1.000000e+00 : f32
    %571 = vector.broadcast %cst_293 : f32 to vector<2x32xf32>
    %572 = arith.addf %571, %570 : vector<2x32xf32>
    %573 = arith.divf %571, %572 : vector<2x32xf32>
    %574 = math.tanh %558 : vector<2x32xf32>
    %575 = arith.negf %563 : vector<2x32xf32>
    %576 = math.exp %575 : vector<2x32xf32>
    %cst_294 = arith.constant 1.000000e+00 : f32
    %577 = vector.broadcast %cst_294 : f32 to vector<2x32xf32>
    %578 = arith.addf %577, %576 : vector<2x32xf32>
    %579 = arith.divf %577, %578 : vector<2x32xf32>
    %580 = arith.mulf %573, %537 : vector<2x32xf32>
    %581 = arith.mulf %568, %574 : vector<2x32xf32>
    %582 = arith.addf %580, %581 : vector<2x32xf32>
    %583 = math.tanh %582 : vector<2x32xf32>
    %584 = arith.mulf %579, %583 : vector<2x32xf32>
    %585 = arith.index_cast %c2_i32_279 : i32 to index
    %c0_295 = arith.constant 0 : index
    %c0_296 = arith.constant 0 : index
    %586 = vector.load %arg18[%585, %c0_295, %c0_296] : memref<8x2x32xf32, #tpu.memory_space<vmem>>, vector<1x2x32xf32>
    %587 = vector.shape_cast %586 : vector<1x2x32xf32> to vector<2x32xf32>
    %588 = vector.shape_cast %584 : vector<2x32xf32> to vector<1x2x32xf32>
    tpu.vector_store %arg18[%585, %c0_295, %c0_296], %588 {strides = array<i32>} : memref<8x2x32xf32, #tpu.memory_space<vmem>>, vector<1x2x32xf32>,
    %c3_i32_297 = arith.constant 3 : i32
    %589 = arith.index_cast %c3_i32_297 : i32 to index
    %c0_298 = arith.constant 0 : index
    %c0_299 = arith.constant 0 : index
    %590 = vector.load %arg13[%589, %c0_298, %c0_299] : memref<8x2x32xf32, #tpu.memory_space<vmem>>, vector<1x2x32xf32>
    %591 = vector.shape_cast %590 : vector<1x2x32xf32> to vector<2x32xf32>
    %cst_300 = arith.constant dense<0.000000e+00> : vector<2x32xf32>
    %592 = tpu.matmul %584, %446, %cst_300 {dimension_numbers = #tpu.dot_dimension_numbers<[1], [0], [0], [1], [0, 0, 1, 1], [], []>} : vector<2x32xf32>, vector<32x32xf32>, vector<2x32xf32> -> vector<2x32xf32>
    %593 = arith.addf %591, %592 : vector<2x32xf32>
    %594 = arith.index_cast %c3_i32_297 : i32 to index
    %c0_301 = arith.constant 0 : index
    %c0_302 = arith.constant 0 : index
    %595 = vector.load %arg14[%594, %c0_301, %c0_302] : memref<8x2x32xf32, #tpu.memory_space<vmem>>, vector<1x2x32xf32>
    %596 = vector.shape_cast %595 : vector<1x2x32xf32> to vector<2x32xf32>
    %cst_303 = arith.constant dense<0.000000e+00> : vector<2x32xf32>
    %597 = tpu.matmul %584, %448, %cst_303 {dimension_numbers = #tpu.dot_dimension_numbers<[1], [0], [0], [1], [0, 0, 1, 1], [], []>} : vector<2x32xf32>, vector<32x32xf32>, vector<2x32xf32> -> vector<2x32xf32>
    %598 = arith.addf %596, %597 : vector<2x32xf32>
    %599 = arith.index_cast %c3_i32_297 : i32 to index
    %c0_304 = arith.constant 0 : index
    %c0_305 = arith.constant 0 : index
    %600 = vector.load %arg15[%599, %c0_304, %c0_305] : memref<8x2x32xf32, #tpu.memory_space<vmem>>, vector<1x2x32xf32>
    %601 = vector.shape_cast %600 : vector<1x2x32xf32> to vector<2x32xf32>
    %cst_306 = arith.constant dense<0.000000e+00> : vector<2x32xf32>
    %602 = tpu.matmul %584, %450, %cst_306 {dimension_numbers = #tpu.dot_dimension_numbers<[1], [0], [0], [1], [0, 0, 1, 1], [], []>} : vector<2x32xf32>, vector<32x32xf32>, vector<2x32xf32> -> vector<2x32xf32>
    %603 = arith.addf %601, %602 : vector<2x32xf32>
    %604 = arith.index_cast %c3_i32_297 : i32 to index
    %c0_307 = arith.constant 0 : index
    %c0_308 = arith.constant 0 : index
    %605 = vector.load %arg16[%604, %c0_307, %c0_308] : memref<8x2x32xf32, #tpu.memory_space<vmem>>, vector<1x2x32xf32>
    %606 = vector.shape_cast %605 : vector<1x2x32xf32> to vector<2x32xf32>
    %cst_309 = arith.constant dense<0.000000e+00> : vector<2x32xf32>
    %607 = tpu.matmul %584, %452, %cst_309 {dimension_numbers = #tpu.dot_dimension_numbers<[1], [0], [0], [1], [0, 0, 1, 1], [], []>} : vector<2x32xf32>, vector<32x32xf32>, vector<2x32xf32> -> vector<2x32xf32>
    %608 = arith.addf %606, %607 : vector<2x32xf32>
    %609 = arith.negf %593 : vector<2x32xf32>
    %610 = math.exp %609 : vector<2x32xf32>
    %cst_310 = arith.constant 1.000000e+00 : f32
    %611 = vector.broadcast %cst_310 : f32 to vector<2x32xf32>
    %612 = arith.addf %611, %610 : vector<2x32xf32>
    %613 = arith.divf %611, %612 : vector<2x32xf32>
    %614 = arith.negf %598 : vector<2x32xf32>
    %615 = math.exp %614 : vector<2x32xf32>
    %cst_311 = arith.constant 1.000000e+00 : f32
    %616 = vector.broadcast %cst_311 : f32 to vector<2x32xf32>
    %617 = arith.addf %616, %615 : vector<2x32xf32>
    %618 = arith.divf %616, %617 : vector<2x32xf32>
    %619 = math.tanh %603 : vector<2x32xf32>
    %620 = arith.negf %608 : vector<2x32xf32>
    %621 = math.exp %620 : vector<2x32xf32>
    %cst_312 = arith.constant 1.000000e+00 : f32
    %622 = vector.broadcast %cst_312 : f32 to vector<2x32xf32>
    %623 = arith.addf %622, %621 : vector<2x32xf32>
    %624 = arith.divf %622, %623 : vector<2x32xf32>
    %625 = arith.mulf %618, %582 : vector<2x32xf32>
    %626 = arith.mulf %613, %619 : vector<2x32xf32>
    %627 = arith.addf %625, %626 : vector<2x32xf32>
    %628 = math.tanh %627 : vector<2x32xf32>
    %629 = arith.mulf %624, %628 : vector<2x32xf32>
    %630 = arith.index_cast %c3_i32_297 : i32 to index
    %c0_313 = arith.constant 0 : index
    %c0_314 = arith.constant 0 : index
    %631 = vector.load %arg18[%630, %c0_313, %c0_314] : memref<8x2x32xf32, #tpu.memory_space<vmem>>, vector<1x2x32xf32>
    %632 = vector.shape_cast %631 : vector<1x2x32xf32> to vector<2x32xf32>
    %633 = vector.shape_cast %629 : vector<2x32xf32> to vector<1x2x32xf32>
    tpu.vector_store %arg18[%630, %c0_313, %c0_314], %633 {strides = array<i32>} : memref<8x2x32xf32, #tpu.memory_space<vmem>>, vector<1x2x32xf32>,
    %c4_i32_315 = arith.constant 4 : i32
    %634 = arith.index_cast %c4_i32_315 : i32 to index
    %c0_316 = arith.constant 0 : index
    %c0_317 = arith.constant 0 : index
    %635 = vector.load %arg13[%634, %c0_316, %c0_317] : memref<8x2x32xf32, #tpu.memory_space<vmem>>, vector<1x2x32xf32>
    %636 = vector.shape_cast %635 : vector<1x2x32xf32> to vector<2x32xf32>
    %cst_318 = arith.constant dense<0.000000e+00> : vector<2x32xf32>
    %637 = tpu.matmul %629, %446, %cst_318 {dimension_numbers = #tpu.dot_dimension_numbers<[1], [0], [0], [1], [0, 0, 1, 1], [], []>} : vector<2x32xf32>, vector<32x32xf32>, vector<2x32xf32> -> vector<2x32xf32>
    %638 = arith.addf %636, %637 : vector<2x32xf32>
    %639 = arith.index_cast %c4_i32_315 : i32 to index
    %c0_319 = arith.constant 0 : index
    %c0_320 = arith.constant 0 : index
    %640 = vector.load %arg14[%639, %c0_319, %c0_320] : memref<8x2x32xf32, #tpu.memory_space<vmem>>, vector<1x2x32xf32>
    %641 = vector.shape_cast %640 : vector<1x2x32xf32> to vector<2x32xf32>
    %cst_321 = arith.constant dense<0.000000e+00> : vector<2x32xf32>
    %642 = tpu.matmul %629, %448, %cst_321 {dimension_numbers = #tpu.dot_dimension_numbers<[1], [0], [0], [1], [0, 0, 1, 1], [], []>} : vector<2x32xf32>, vector<32x32xf32>, vector<2x32xf32> -> vector<2x32xf32>
    %643 = arith.addf %641, %642 : vector<2x32xf32>
    %644 = arith.index_cast %c4_i32_315 : i32 to index
    %c0_322 = arith.constant 0 : index
    %c0_323 = arith.constant 0 : index
    %645 = vector.load %arg15[%644, %c0_322, %c0_323] : memref<8x2x32xf32, #tpu.memory_space<vmem>>, vector<1x2x32xf32>
    %646 = vector.shape_cast %645 : vector<1x2x32xf32> to vector<2x32xf32>
    %cst_324 = arith.constant dense<0.000000e+00> : vector<2x32xf32>
    %647 = tpu.matmul %629, %450, %cst_324 {dimension_numbers = #tpu.dot_dimension_numbers<[1], [0], [0], [1], [0, 0, 1, 1], [], []>} : vector<2x32xf32>, vector<32x32xf32>, vector<2x32xf32> -> vector<2x32xf32>
    %648 = arith.addf %646, %647 : vector<2x32xf32>
    %649 = arith.index_cast %c4_i32_315 : i32 to index
    %c0_325 = arith.constant 0 : index
    %c0_326 = arith.constant 0 : index
    %650 = vector.load %arg16[%649, %c0_325, %c0_326] : memref<8x2x32xf32, #tpu.memory_space<vmem>>, vector<1x2x32xf32>
    %651 = vector.shape_cast %650 : vector<1x2x32xf32> to vector<2x32xf32>
    %cst_327 = arith.constant dense<0.000000e+00> : vector<2x32xf32>
    %652 = tpu.matmul %629, %452, %cst_327 {dimension_numbers = #tpu.dot_dimension_numbers<[1], [0], [0], [1], [0, 0, 1, 1], [], []>} : vector<2x32xf32>, vector<32x32xf32>, vector<2x32xf32> -> vector<2x32xf32>
    %653 = arith.addf %651, %652 : vector<2x32xf32>
    %654 = arith.negf %638 : vector<2x32xf32>
    %655 = math.exp %654 : vector<2x32xf32>
    %cst_328 = arith.constant 1.000000e+00 : f32
    %656 = vector.broadcast %cst_328 : f32 to vector<2x32xf32>
    %657 = arith.addf %656, %655 : vector<2x32xf32>
    %658 = arith.divf %656, %657 : vector<2x32xf32>
    %659 = arith.negf %643 : vector<2x32xf32>
    %660 = math.exp %659 : vector<2x32xf32>
    %cst_329 = arith.constant 1.000000e+00 : f32
    %661 = vector.broadcast %cst_329 : f32 to vector<2x32xf32>
    %662 = arith.addf %661, %660 : vector<2x32xf32>
    %663 = arith.divf %661, %662 : vector<2x32xf32>
    %664 = math.tanh %648 : vector<2x32xf32>
    %665 = arith.negf %653 : vector<2x32xf32>
    %666 = math.exp %665 : vector<2x32xf32>
    %cst_330 = arith.constant 1.000000e+00 : f32
    %667 = vector.broadcast %cst_330 : f32 to vector<2x32xf32>
    %668 = arith.addf %667, %666 : vector<2x32xf32>
    %669 = arith.divf %667, %668 : vector<2x32xf32>
    %670 = arith.mulf %663, %627 : vector<2x32xf32>
    %671 = arith.mulf %658, %664 : vector<2x32xf32>
    %672 = arith.addf %670, %671 : vector<2x32xf32>
    %673 = math.tanh %672 : vector<2x32xf32>
    %674 = arith.mulf %669, %673 : vector<2x32xf32>
    %675 = arith.index_cast %c4_i32_315 : i32 to index
    %c0_331 = arith.constant 0 : index
    %c0_332 = arith.constant 0 : index
    %676 = vector.load %arg18[%675, %c0_331, %c0_332] : memref<8x2x32xf32, #tpu.memory_space<vmem>>, vector<1x2x32xf32>
    %677 = vector.shape_cast %676 : vector<1x2x32xf32> to vector<2x32xf32>
    %678 = vector.shape_cast %674 : vector<2x32xf32> to vector<1x2x32xf32>
    tpu.vector_store %arg18[%675, %c0_331, %c0_332], %678 {strides = array<i32>} : memref<8x2x32xf32, #tpu.memory_space<vmem>>, vector<1x2x32xf32>,
    %c5_i32_333 = arith.constant 5 : i32
    %679 = arith.index_cast %c5_i32_333 : i32 to index
    %c0_334 = arith.constant 0 : index
    %c0_335 = arith.constant 0 : index
    %680 = vector.load %arg13[%679, %c0_334, %c0_335] : memref<8x2x32xf32, #tpu.memory_space<vmem>>, vector<1x2x32xf32>
    %681 = vector.shape_cast %680 : vector<1x2x32xf32> to vector<2x32xf32>
    %cst_336 = arith.constant dense<0.000000e+00> : vector<2x32xf32>
    %682 = tpu.matmul %674, %446, %cst_336 {dimension_numbers = #tpu.dot_dimension_numbers<[1], [0], [0], [1], [0, 0, 1, 1], [], []>} : vector<2x32xf32>, vector<32x32xf32>, vector<2x32xf32> -> vector<2x32xf32>
    %683 = arith.addf %681, %682 : vector<2x32xf32>
    %684 = arith.index_cast %c5_i32_333 : i32 to index
    %c0_337 = arith.constant 0 : index
    %c0_338 = arith.constant 0 : index
    %685 = vector.load %arg14[%684, %c0_337, %c0_338] : memref<8x2x32xf32, #tpu.memory_space<vmem>>, vector<1x2x32xf32>
    %686 = vector.shape_cast %685 : vector<1x2x32xf32> to vector<2x32xf32>
    %cst_339 = arith.constant dense<0.000000e+00> : vector<2x32xf32>
    %687 = tpu.matmul %674, %448, %cst_339 {dimension_numbers = #tpu.dot_dimension_numbers<[1], [0], [0], [1], [0, 0, 1, 1], [], []>} : vector<2x32xf32>, vector<32x32xf32>, vector<2x32xf32> -> vector<2x32xf32>
    %688 = arith.addf %686, %687 : vector<2x32xf32>
    %689 = arith.index_cast %c5_i32_333 : i32 to index
    %c0_340 = arith.constant 0 : index
    %c0_341 = arith.constant 0 : index
    %690 = vector.load %arg15[%689, %c0_340, %c0_341] : memref<8x2x32xf32, #tpu.memory_space<vmem>>, vector<1x2x32xf32>
    %691 = vector.shape_cast %690 : vector<1x2x32xf32> to vector<2x32xf32>
    %cst_342 = arith.constant dense<0.000000e+00> : vector<2x32xf32>
    %692 = tpu.matmul %674, %450, %cst_342 {dimension_numbers = #tpu.dot_dimension_numbers<[1], [0], [0], [1], [0, 0, 1, 1], [], []>} : vector<2x32xf32>, vector<32x32xf32>, vector<2x32xf32> -> vector<2x32xf32>
    %693 = arith.addf %691, %692 : vector<2x32xf32>
    %694 = arith.index_cast %c5_i32_333 : i32 to index
    %c0_343 = arith.constant 0 : index
    %c0_344 = arith.constant 0 : index
    %695 = vector.load %arg16[%694, %c0_343, %c0_344] : memref<8x2x32xf32, #tpu.memory_space<vmem>>, vector<1x2x32xf32>
    %696 = vector.shape_cast %695 : vector<1x2x32xf32> to vector<2x32xf32>
    %cst_345 = arith.constant dense<0.000000e+00> : vector<2x32xf32>
    %697 = tpu.matmul %674, %452, %cst_345 {dimension_numbers = #tpu.dot_dimension_numbers<[1], [0], [0], [1], [0, 0, 1, 1], [], []>} : vector<2x32xf32>, vector<32x32xf32>, vector<2x32xf32> -> vector<2x32xf32>
    %698 = arith.addf %696, %697 : vector<2x32xf32>
    %699 = arith.negf %683 : vector<2x32xf32>
    %700 = math.exp %699 : vector<2x32xf32>
    %cst_346 = arith.constant 1.000000e+00 : f32
    %701 = vector.broadcast %cst_346 : f32 to vector<2x32xf32>
    %702 = arith.addf %701, %700 : vector<2x32xf32>
    %703 = arith.divf %701, %702 : vector<2x32xf32>
    %704 = arith.negf %688 : vector<2x32xf32>
    %705 = math.exp %704 : vector<2x32xf32>
    %cst_347 = arith.constant 1.000000e+00 : f32
    %706 = vector.broadcast %cst_347 : f32 to vector<2x32xf32>
    %707 = arith.addf %706, %705 : vector<2x32xf32>
    %708 = arith.divf %706, %707 : vector<2x32xf32>
    %709 = math.tanh %693 : vector<2x32xf32>
    %710 = arith.negf %698 : vector<2x32xf32>
    %711 = math.exp %710 : vector<2x32xf32>
    %cst_348 = arith.constant 1.000000e+00 : f32
    %712 = vector.broadcast %cst_348 : f32 to vector<2x32xf32>
    %713 = arith.addf %712, %711 : vector<2x32xf32>
    %714 = arith.divf %712, %713 : vector<2x32xf32>
    %715 = arith.mulf %708, %672 : vector<2x32xf32>
    %716 = arith.mulf %703, %709 : vector<2x32xf32>
    %717 = arith.addf %715, %716 : vector<2x32xf32>
    %718 = math.tanh %717 : vector<2x32xf32>
    %719 = arith.mulf %714, %718 : vector<2x32xf32>
    %720 = arith.index_cast %c5_i32_333 : i32 to index
    %c0_349 = arith.constant 0 : index
    %c0_350 = arith.constant 0 : index
    %721 = vector.load %arg18[%720, %c0_349, %c0_350] : memref<8x2x32xf32, #tpu.memory_space<vmem>>, vector<1x2x32xf32>
    %722 = vector.shape_cast %721 : vector<1x2x32xf32> to vector<2x32xf32>
    %723 = vector.shape_cast %719 : vector<2x32xf32> to vector<1x2x32xf32>
    tpu.vector_store %arg18[%720, %c0_349, %c0_350], %723 {strides = array<i32>} : memref<8x2x32xf32, #tpu.memory_space<vmem>>, vector<1x2x32xf32>,
    %c6_i32_351 = arith.constant 6 : i32
    %724 = arith.index_cast %c6_i32_351 : i32 to index
    %c0_352 = arith.constant 0 : index
    %c0_353 = arith.constant 0 : index
    %725 = vector.load %arg13[%724, %c0_352, %c0_353] : memref<8x2x32xf32, #tpu.memory_space<vmem>>, vector<1x2x32xf32>
    %726 = vector.shape_cast %725 : vector<1x2x32xf32> to vector<2x32xf32>
    %cst_354 = arith.constant dense<0.000000e+00> : vector<2x32xf32>
    %727 = tpu.matmul %719, %446, %cst_354 {dimension_numbers = #tpu.dot_dimension_numbers<[1], [0], [0], [1], [0, 0, 1, 1], [], []>} : vector<2x32xf32>, vector<32x32xf32>, vector<2x32xf32> -> vector<2x32xf32>
    %728 = arith.addf %726, %727 : vector<2x32xf32>
    %729 = arith.index_cast %c6_i32_351 : i32 to index
    %c0_355 = arith.constant 0 : index
    %c0_356 = arith.constant 0 : index
    %730 = vector.load %arg14[%729, %c0_355, %c0_356] : memref<8x2x32xf32, #tpu.memory_space<vmem>>, vector<1x2x32xf32>
    %731 = vector.shape_cast %730 : vector<1x2x32xf32> to vector<2x32xf32>
    %cst_357 = arith.constant dense<0.000000e+00> : vector<2x32xf32>
    %732 = tpu.matmul %719, %448, %cst_357 {dimension_numbers = #tpu.dot_dimension_numbers<[1], [0], [0], [1], [0, 0, 1, 1], [], []>} : vector<2x32xf32>, vector<32x32xf32>, vector<2x32xf32> -> vector<2x32xf32>
    %733 = arith.addf %731, %732 : vector<2x32xf32>
    %734 = arith.index_cast %c6_i32_351 : i32 to index
    %c0_358 = arith.constant 0 : index
    %c0_359 = arith.constant 0 : index
    %735 = vector.load %arg15[%734, %c0_358, %c0_359] : memref<8x2x32xf32, #tpu.memory_space<vmem>>, vector<1x2x32xf32>
    %736 = vector.shape_cast %735 : vector<1x2x32xf32> to vector<2x32xf32>
    %cst_360 = arith.constant dense<0.000000e+00> : vector<2x32xf32>
    %737 = tpu.matmul %719, %450, %cst_360 {dimension_numbers = #tpu.dot_dimension_numbers<[1], [0], [0], [1], [0, 0, 1, 1], [], []>} : vector<2x32xf32>, vector<32x32xf32>, vector<2x32xf32> -> vector<2x32xf32>
    %738 = arith.addf %736, %737 : vector<2x32xf32>
    %739 = arith.index_cast %c6_i32_351 : i32 to index
    %c0_361 = arith.constant 0 : index
    %c0_362 = arith.constant 0 : index
    %740 = vector.load %arg16[%739, %c0_361, %c0_362] : memref<8x2x32xf32, #tpu.memory_space<vmem>>, vector<1x2x32xf32>
    %741 = vector.shape_cast %740 : vector<1x2x32xf32> to vector<2x32xf32>
    %cst_363 = arith.constant dense<0.000000e+00> : vector<2x32xf32>
    %742 = tpu.matmul %719, %452, %cst_363 {dimension_numbers = #tpu.dot_dimension_numbers<[1], [0], [0], [1], [0, 0, 1, 1], [], []>} : vector<2x32xf32>, vector<32x32xf32>, vector<2x32xf32> -> vector<2x32xf32>
    %743 = arith.addf %741, %742 : vector<2x32xf32>
    %744 = arith.negf %728 : vector<2x32xf32>
    %745 = math.exp %744 : vector<2x32xf32>
    %cst_364 = arith.constant 1.000000e+00 : f32
    %746 = vector.broadcast %cst_364 : f32 to vector<2x32xf32>
    %747 = arith.addf %746, %745 : vector<2x32xf32>
    %748 = arith.divf %746, %747 : vector<2x32xf32>
    %749 = arith.negf %733 : vector<2x32xf32>
    %750 = math.exp %749 : vector<2x32xf32>
    %cst_365 = arith.constant 1.000000e+00 : f32
    %751 = vector.broadcast %cst_365 : f32 to vector<2x32xf32>
    %752 = arith.addf %751, %750 : vector<2x32xf32>
    %753 = arith.divf %751, %752 : vector<2x32xf32>
    %754 = math.tanh %738 : vector<2x32xf32>
    %755 = arith.negf %743 : vector<2x32xf32>
    %756 = math.exp %755 : vector<2x32xf32>
    %cst_366 = arith.constant 1.000000e+00 : f32
    %757 = vector.broadcast %cst_366 : f32 to vector<2x32xf32>
    %758 = arith.addf %757, %756 : vector<2x32xf32>
    %759 = arith.divf %757, %758 : vector<2x32xf32>
    %760 = arith.mulf %753, %717 : vector<2x32xf32>
    %761 = arith.mulf %748, %754 : vector<2x32xf32>
    %762 = arith.addf %760, %761 : vector<2x32xf32>
    %763 = math.tanh %762 : vector<2x32xf32>
    %764 = arith.mulf %759, %763 : vector<2x32xf32>
    %765 = arith.index_cast %c6_i32_351 : i32 to index
    %c0_367 = arith.constant 0 : index
    %c0_368 = arith.constant 0 : index
    %766 = vector.load %arg18[%765, %c0_367, %c0_368] : memref<8x2x32xf32, #tpu.memory_space<vmem>>, vector<1x2x32xf32>
    %767 = vector.shape_cast %766 : vector<1x2x32xf32> to vector<2x32xf32>
    %768 = vector.shape_cast %764 : vector<2x32xf32> to vector<1x2x32xf32>
    tpu.vector_store %arg18[%765, %c0_367, %c0_368], %768 {strides = array<i32>} : memref<8x2x32xf32, #tpu.memory_space<vmem>>, vector<1x2x32xf32>,
    %c7_i32_369 = arith.constant 7 : i32
    %769 = arith.index_cast %c7_i32_369 : i32 to index
    %c0_370 = arith.constant 0 : index
    %c0_371 = arith.constant 0 : index
    %770 = vector.load %arg13[%769, %c0_370, %c0_371] : memref<8x2x32xf32, #tpu.memory_space<vmem>>, vector<1x2x32xf32>
    %771 = vector.shape_cast %770 : vector<1x2x32xf32> to vector<2x32xf32>
    %cst_372 = arith.constant dense<0.000000e+00> : vector<2x32xf32>
    %772 = tpu.matmul %764, %446, %cst_372 {dimension_numbers = #tpu.dot_dimension_numbers<[1], [0], [0], [1], [0, 0, 1, 1], [], []>} : vector<2x32xf32>, vector<32x32xf32>, vector<2x32xf32> -> vector<2x32xf32>
    %773 = arith.addf %771, %772 : vector<2x32xf32>
    %774 = arith.index_cast %c7_i32_369 : i32 to index
    %c0_373 = arith.constant 0 : index
    %c0_374 = arith.constant 0 : index
    %775 = vector.load %arg14[%774, %c0_373, %c0_374] : memref<8x2x32xf32, #tpu.memory_space<vmem>>, vector<1x2x32xf32>
    %776 = vector.shape_cast %775 : vector<1x2x32xf32> to vector<2x32xf32>
    %cst_375 = arith.constant dense<0.000000e+00> : vector<2x32xf32>
    %777 = tpu.matmul %764, %448, %cst_375 {dimension_numbers = #tpu.dot_dimension_numbers<[1], [0], [0], [1], [0, 0, 1, 1], [], []>} : vector<2x32xf32>, vector<32x32xf32>, vector<2x32xf32> -> vector<2x32xf32>
    %778 = arith.addf %776, %777 : vector<2x32xf32>
    %779 = arith.index_cast %c7_i32_369 : i32 to index
    %c0_376 = arith.constant 0 : index
    %c0_377 = arith.constant 0 : index
    %780 = vector.load %arg15[%779, %c0_376, %c0_377] : memref<8x2x32xf32, #tpu.memory_space<vmem>>, vector<1x2x32xf32>
    %781 = vector.shape_cast %780 : vector<1x2x32xf32> to vector<2x32xf32>
    %cst_378 = arith.constant dense<0.000000e+00> : vector<2x32xf32>
    %782 = tpu.matmul %764, %450, %cst_378 {dimension_numbers = #tpu.dot_dimension_numbers<[1], [0], [0], [1], [0, 0, 1, 1], [], []>} : vector<2x32xf32>, vector<32x32xf32>, vector<2x32xf32> -> vector<2x32xf32>
    %783 = arith.addf %781, %782 : vector<2x32xf32>
    %784 = arith.index_cast %c7_i32_369 : i32 to index
    %c0_379 = arith.constant 0 : index
    %c0_380 = arith.constant 0 : index
    %785 = vector.load %arg16[%784, %c0_379, %c0_380] : memref<8x2x32xf32, #tpu.memory_space<vmem>>, vector<1x2x32xf32>
    %786 = vector.shape_cast %785 : vector<1x2x32xf32> to vector<2x32xf32>
    %cst_381 = arith.constant dense<0.000000e+00> : vector<2x32xf32>
    %787 = tpu.matmul %764, %452, %cst_381 {dimension_numbers = #tpu.dot_dimension_numbers<[1], [0], [0], [1], [0, 0, 1, 1], [], []>} : vector<2x32xf32>, vector<32x32xf32>, vector<2x32xf32> -> vector<2x32xf32>
    %788 = arith.addf %786, %787 : vector<2x32xf32>
    %789 = arith.negf %773 : vector<2x32xf32>
    %790 = math.exp %789 : vector<2x32xf32>
    %cst_382 = arith.constant 1.000000e+00 : f32
    %791 = vector.broadcast %cst_382 : f32 to vector<2x32xf32>
    %792 = arith.addf %791, %790 : vector<2x32xf32>
    %793 = arith.divf %791, %792 : vector<2x32xf32>
    %794 = arith.negf %778 : vector<2x32xf32>
    %795 = math.exp %794 : vector<2x32xf32>
    %cst_383 = arith.constant 1.000000e+00 : f32
    %796 = vector.broadcast %cst_383 : f32 to vector<2x32xf32>
    %797 = arith.addf %796, %795 : vector<2x32xf32>
    %798 = arith.divf %796, %797 : vector<2x32xf32>
    %799 = math.tanh %783 : vector<2x32xf32>
    %800 = arith.negf %788 : vector<2x32xf32>
    %801 = math.exp %800 : vector<2x32xf32>
    %cst_384 = arith.constant 1.000000e+00 : f32
    %802 = vector.broadcast %cst_384 : f32 to vector<2x32xf32>
    %803 = arith.addf %802, %801 : vector<2x32xf32>
    %804 = arith.divf %802, %803 : vector<2x32xf32>
    %805 = arith.mulf %798, %762 : vector<2x32xf32>
    %806 = arith.mulf %793, %799 : vector<2x32xf32>
    %807 = arith.addf %805, %806 : vector<2x32xf32>
    %808 = math.tanh %807 : vector<2x32xf32>
    %809 = arith.mulf %804, %808 : vector<2x32xf32>
    %810 = arith.index_cast %c7_i32_369 : i32 to index
    %c0_385 = arith.constant 0 : index
    %c0_386 = arith.constant 0 : index
    %811 = vector.load %arg18[%810, %c0_385, %c0_386] : memref<8x2x32xf32, #tpu.memory_space<vmem>>, vector<1x2x32xf32>
    %812 = vector.shape_cast %811 : vector<1x2x32xf32> to vector<2x32xf32>
    %813 = vector.shape_cast %809 : vector<2x32xf32> to vector<1x2x32xf32>
    tpu.vector_store %arg18[%810, %c0_385, %c0_386], %813 {strides = array<i32>} : memref<8x2x32xf32, #tpu.memory_space<vmem>>, vector<1x2x32xf32>,
    %c8_i32_387 = arith.constant 8 : i32
    %c0_388 = arith.constant 0 : index
    %c0_389 = arith.constant 0 : index
    %c0_390 = arith.constant 0 : index
    %814 = vector.load %arg18[%c0_388, %c0_389, %c0_390] : memref<8x2x32xf32, #tpu.memory_space<vmem>>, vector<8x2x32xf32>
    %c0_391 = arith.constant 0 : index
    %c0_392 = arith.constant 0 : index
    %c0_393 = arith.constant 0 : index
    %815 = vector.load %arg1[%c0_391, %c0_392, %c0_393] : memref<8x2x32xf32, #tpu.memory_space<vmem>>, vector<8x2x32xf32>
    %c0_394 = arith.constant 0 : index
    %c0_395 = arith.constant 0 : index
    %816 = vector.load %arg8[%c0_394, %c0_395] : memref<32x32xf32, #tpu.memory_space<vmem>>, vector<32x32xf32>
    %c0_396 = arith.constant 0 : index
    %c0_397 = arith.constant 0 : index
    %817 = vector.load %arg9[%c0_396, %c0_397] : memref<32x32xf32, #tpu.memory_space<vmem>>, vector<32x32xf32>
    %c0_398 = arith.constant 0 : index
    %c0_399 = arith.constant 0 : index
    %818 = vector.load %arg10[%c0_398, %c0_399] : memref<32x32xf32, #tpu.memory_space<vmem>>, vector<32x32xf32>
    %819 = vector.extract_strided_slice %814 {offsets = [0, 0, 0], sizes = [8, 1, 32], strides = [1, 1, 1]} : vector<8x2x32xf32> to vector<8x1x32xf32>
    %820 = vector.shape_cast %819 : vector<8x1x32xf32> to vector<8x32xf32>
    %821 = vector.extract_strided_slice %815 {offsets = [0, 0, 0], sizes = [8, 1, 32], strides = [1, 1, 1]} : vector<8x2x32xf32> to vector<8x1x32xf32>
    %822 = vector.shape_cast %821 : vector<8x1x32xf32> to vector<8x32xf32>
    %cst_400 = arith.constant dense<0.000000e+00> : vector<8x32xf32>
    %823 = tpu.matmul %820, %816, %cst_400 {dimension_numbers = #tpu.dot_dimension_numbers<[1], [0], [0], [1], [0, 0, 1, 1], [], []>} : vector<8x32xf32>, vector<32x32xf32>, vector<8x32xf32> -> vector<8x32xf32>
    %cst_401 = arith.constant dense<0.000000e+00> : vector<8x8xf32>
    %824 = tpu.matmul %823, %822, %cst_401 {dimension_numbers = #tpu.dot_dimension_numbers<[1], [1], [0], [0], [0, 0, 1, 0], [], []>} : vector<8x32xf32>, vector<8x32xf32>, vector<8x8xf32> -> vector<8x8xf32>
    %cst_402 = arith.constant dense<0xFF800000> : vector<8xf32>
    %825 = vector.multi_reduction <maximumf>, %824, %cst_402 [1] : vector<8x8xf32> to vector<8xf32>
    %826 = vector.shape_cast %825 : vector<8xf32> to vector<8x1xf32>
    %827 = vector.broadcast %826 : vector<8x1xf32> to vector<8x8xf32>
    %828 = arith.subf %824, %827 : vector<8x8xf32>
    %829 = math.exp %828 : vector<8x8xf32>
    %cst_403 = arith.constant dense<0.000000e+00> : vector<8xf32>
    %830 = vector.multi_reduction <add>, %829, %cst_403 [1] : vector<8x8xf32> to vector<8xf32>
    %831 = vector.shape_cast %830 : vector<8xf32> to vector<8x1xf32>
    %832 = tpu.reciprocal %831 {approx = true} : vector<8x1xf32> -> vector<8x1xf32>
    %833 = arith.mulf %831, %832 : vector<8x1xf32>
    %cst_404 = arith.constant 2.000000e+00 : f32
    %834 = vector.broadcast %cst_404 : f32 to vector<8x1xf32>
    %835 = arith.subf %834, %833 : vector<8x1xf32>
    %836 = arith.mulf %832, %835 : vector<8x1xf32>
    %837 = vector.broadcast %836 : vector<8x1xf32> to vector<8x8xf32>
    %838 = arith.mulf %829, %837 : vector<8x8xf32>
    %cst_405 = arith.constant dense<0.000000e+00> : vector<8x32xf32>
    %839 = tpu.matmul %838, %822, %cst_405 {dimension_numbers = #tpu.dot_dimension_numbers<[1], [0], [0], [1], [0, 0, 1, 1], [], []>} : vector<8x8xf32>, vector<8x32xf32>, vector<8x32xf32> -> vector<8x32xf32>
    %cst_406 = arith.constant dense<0.000000e+00> : vector<8x32xf32>
    %840 = tpu.matmul %839, %817, %cst_406 {dimension_numbers = #tpu.dot_dimension_numbers<[1], [0], [0], [1], [0, 0, 1, 1], [], []>} : vector<8x32xf32>, vector<32x32xf32>, vector<8x32xf32> -> vector<8x32xf32>
    %cst_407 = arith.constant dense<0.000000e+00> : vector<8x32xf32>
    %841 = tpu.matmul %820, %818, %cst_407 {dimension_numbers = #tpu.dot_dimension_numbers<[1], [0], [0], [1], [0, 0, 1, 1], [], []>} : vector<8x32xf32>, vector<32x32xf32>, vector<8x32xf32> -> vector<8x32xf32>
    %842 = arith.addf %840, %841 : vector<8x32xf32>
    %843 = math.tanh %842 : vector<8x32xf32>
    %844 = vector.extract_strided_slice %814 {offsets = [0, 1, 0], sizes = [8, 1, 32], strides = [1, 1, 1]} : vector<8x2x32xf32> to vector<8x1x32xf32>
    %845 = vector.shape_cast %844 : vector<8x1x32xf32> to vector<8x32xf32>
    %846 = vector.extract_strided_slice %815 {offsets = [0, 1, 0], sizes = [8, 1, 32], strides = [1, 1, 1]} : vector<8x2x32xf32> to vector<8x1x32xf32>
    %847 = vector.shape_cast %846 : vector<8x1x32xf32> to vector<8x32xf32>
    %cst_408 = arith.constant dense<0.000000e+00> : vector<8x32xf32>
    %848 = tpu.matmul %845, %816, %cst_408 {dimension_numbers = #tpu.dot_dimension_numbers<[1], [0], [0], [1], [0, 0, 1, 1], [], []>} : vector<8x32xf32>, vector<32x32xf32>, vector<8x32xf32> -> vector<8x32xf32>
    %cst_409 = arith.constant dense<0.000000e+00> : vector<8x8xf32>
    %849 = tpu.matmul %848, %847, %cst_409 {dimension_numbers = #tpu.dot_dimension_numbers<[1], [1], [0], [0], [0, 0, 1, 0], [], []>} : vector<8x32xf32>, vector<8x32xf32>, vector<8x8xf32> -> vector<8x8xf32>
    %cst_410 = arith.constant dense<0xFF800000> : vector<8xf32>
    %850 = vector.multi_reduction <maximumf>, %849, %cst_410 [1] : vector<8x8xf32> to vector<8xf32>
    %851 = vector.shape_cast %850 : vector<8xf32> to vector<8x1xf32>
    %852 = vector.broadcast %851 : vector<8x1xf32> to vector<8x8xf32>
    %853 = arith.subf %849, %852 : vector<8x8xf32>
    %854 = math.exp %853 : vector<8x8xf32>
    %cst_411 = arith.constant dense<0.000000e+00> : vector<8xf32>
    %855 = vector.multi_reduction <add>, %854, %cst_411 [1] : vector<8x8xf32> to vector<8xf32>
    %856 = vector.shape_cast %855 : vector<8xf32> to vector<8x1xf32>
    %857 = tpu.reciprocal %856 {approx = true} : vector<8x1xf32> -> vector<8x1xf32>
    %858 = arith.mulf %856, %857 : vector<8x1xf32>
    %cst_412 = arith.constant 2.000000e+00 : f32
    %859 = vector.broadcast %cst_412 : f32 to vector<8x1xf32>
    %860 = arith.subf %859, %858 : vector<8x1xf32>
    %861 = arith.mulf %857, %860 : vector<8x1xf32>
    %862 = vector.broadcast %861 : vector<8x1xf32> to vector<8x8xf32>
    %863 = arith.mulf %854, %862 : vector<8x8xf32>
    %cst_413 = arith.constant dense<0.000000e+00> : vector<8x32xf32>
    %864 = tpu.matmul %863, %847, %cst_413 {dimension_numbers = #tpu.dot_dimension_numbers<[1], [0], [0], [1], [0, 0, 1, 1], [], []>} : vector<8x8xf32>, vector<8x32xf32>, vector<8x32xf32> -> vector<8x32xf32>
    %cst_414 = arith.constant dense<0.000000e+00> : vector<8x32xf32>
    %865 = tpu.matmul %864, %817, %cst_414 {dimension_numbers = #tpu.dot_dimension_numbers<[1], [0], [0], [1], [0, 0, 1, 1], [], []>} : vector<8x32xf32>, vector<32x32xf32>, vector<8x32xf32> -> vector<8x32xf32>
    %cst_415 = arith.constant dense<0.000000e+00> : vector<8x32xf32>
    %866 = tpu.matmul %845, %818, %cst_415 {dimension_numbers = #tpu.dot_dimension_numbers<[1], [0], [0], [1], [0, 0, 1, 1], [], []>} : vector<8x32xf32>, vector<32x32xf32>, vector<8x32xf32> -> vector<8x32xf32>
    %867 = arith.addf %865, %866 : vector<8x32xf32>
    %868 = math.tanh %867 : vector<8x32xf32>
    %869 = vector.shape_cast %843 : vector<8x32xf32> to vector<8x1x32xf32>
    %870 = vector.shape_cast %868 : vector<8x32xf32> to vector<8x1x32xf32>
    %871 = tpu.concatenate %869, %870 in 1 : vector<8x1x32xf32>, vector<8x1x32xf32> -> vector<8x2x32xf32>
    %c0_416 = arith.constant 0 : index
    %c0_417 = arith.constant 0 : index
    %c0_418 = arith.constant 0 : index
    %872 = vector.load %arg11[%c0_416, %c0_417, %c0_418] : memref<8x2x32xf32, #tpu.memory_space<vmem>>, vector<8x2x32xf32>
    tpu.vector_store %arg11[%c0_416, %c0_417, %c0_418], %871 {strides = array<i32>} : memref<8x2x32xf32, #tpu.memory_space<vmem>>, vector<8x2x32xf32>,
    %873 = vector.shape_cast %838 : vector<8x8xf32> to vector<8x1x8xf32>
    %874 = vector.shape_cast %863 : vector<8x8xf32> to vector<8x1x8xf32>
    %875 = tpu.concatenate %873, %874 in 1 : vector<8x1x8xf32>, vector<8x1x8xf32> -> vector<8x2x8xf32>
    %c0_419 = arith.constant 0 : index
    %c0_420 = arith.constant 0 : index
    %c0_421 = arith.constant 0 : index
    %876 = vector.load %arg12[%c0_419, %c0_420, %c0_421] : memref<8x2x8xf32, #tpu.memory_space<vmem>>, vector<8x2x8xf32>
    tpu.vector_store %arg12[%c0_419, %c0_420, %c0_421], %875 {strides = array<i32>} : memref<8x2x8xf32, #tpu.memory_space<vmem>>, vector<8x2x8xf32>,
    return
  }
}

</mosaic_0001>

<llo_original>
// kernel: rnn_decoder_forward.1
$region0: #{rnn_decoder_forward.1}
  #allocation0 [shape = 'u32[]', space=smem, size = 0x4, offset = 0x4, fixed_abs, tag = 'smem constant byte address 0x4 - core index']
  #allocation1 [shape = 'u32[72,128]{1,0:T(1,128)}', space=vmem, size = 0x9000, scoped, tag = 'internal scratch']
  #allocation2 [shape = 'f32[8,2,32]{2,1,0:T(2,128)}', space=vmem, size = 0x2000, scoped, tag = 'scratch operand']
  #allocation3 [shape = 'f32[8,2,32]{2,1,0:T(2,128)}', space=vmem, size = 0x2000, scoped, tag = 'scratch operand']
  #allocation4 [shape = 'f32[8,2,32]{2,1,0:T(2,128)}', space=vmem, size = 0x2000, scoped, tag = 'scratch operand']
  #allocation5 [shape = 'f32[8,2,32]{2,1,0:T(2,128)}', space=vmem, size = 0x2000, scoped, tag = 'scratch operand']
  #allocation6 [shape = 'f32[8,2,32]{2,1,0:T(2,128)}', space=vmem, size = 0x2000, scoped, tag = 'scratch operand']
  #allocation7 [shape = 'f32[8,2,32]{2,1,0:T(2,128)}', space=vmem, size = 0x2000, scoped, tag = 'scratch operand']
  %s0 = inlined_call_operand.vmem [shape: f32[8,2,32], index: 0, kind: input, shape index: {}]
  %s1 = inlined_call_operand.vmem [shape: f32[8,2,32], index: 1, kind: input, shape index: {}]
  %s2 = inlined_call_operand.vmem [shape: f32[4,32,32], index: 2, kind: input, shape index: {}]
  %s3 = inlined_call_operand.vmem [shape: f32[4,32,32], index: 3, kind: input, shape index: {}]
  %s4 = inlined_call_operand.vmem [shape: f32[4,1,32], index: 4, kind: input, shape index: {}]
  %s5 = inlined_call_operand.vmem [shape: f32[4,32,32], index: 5, kind: input, shape index: {}]
  %s6 = inlined_call_operand.vmem [shape: f32[4,32,32], index: 6, kind: input, shape index: {}]
  %s7 = inlined_call_operand.vmem [shape: f32[4,1,32], index: 7, kind: input, shape index: {}]
  %s8 = inlined_call_operand.vmem [shape: f32[32,32], index: 8, kind: input, shape index: {}]
  %s9 = inlined_call_operand.vmem [shape: f32[32,32], index: 9, kind: input, shape index: {}]
  %s10 = inlined_call_operand.vmem [shape: f32[32,32], index: 10, kind: input, shape index: {}]
  %s11 = inlined_call_operand.hbm [shape: f32[8,2,32], index: 11, kind: output, shape index: {0}]
  %s12 = inlined_call_operand.hbm [shape: f32[8,2,8], index: 12, kind: output, shape index: {1}]
  %13 = xla_tuple %s11, %s12
  %s14 = sld [smem:[#allocation0]]
  $region62: #{rnn_decoder_forward.1} parent=0
    _
  %s16 = ssub.s32 1, %s14
  %s17 = scalar_select 0, %s16, %s14
  $region1: #{rnn_decoder_forward.1} parent=0
    #allocation8 [shape = 'u8[8192]{0}', space=vmem, size = 0x2000, scoped, tag = 'output window, operand 0, single buffered']
    #allocation9 [shape = 's32[1]{0}', space=sflag, size = 0x4, scoped, tag = 'scoped memory for rnn_decoder_forward.1']
    #allocation10 [shape = 'u8[8192]{0}', space=vmem, size = 0x2000, scoped, tag = 'output window, operand 1, single buffered']
    #allocation11 [shape = 's32[1]{0}', space=sflag, size = 0x4, scoped, tag = 'scoped memory for rnn_decoder_forward.1']
    %18 = vsyncpa [#allocation9], 0
    %19 = vsyncpa [#allocation11], 0
    // Predicated region
    $region2: #{rnn_decoder_forward.1} parent=1 // pred_check
      _
    $region3: #{rnn_decoder_forward.1} parent=1 // pred_check_branch
      %21 = sbr.rel (0) target = $region5
    $region4: #{rnn_decoder_forward.1} parent=1 // pred_region
      _
    $region5: #{rnn_decoder_forward.1} parent=1 // pred_fallthru
      _
    // Predicated region
    $region6: #{rnn_decoder_forward.1} parent=1 // pred_check
      _
    $region7: #{rnn_decoder_forward.1} parent=1 // pred_check_branch
      %23 = sbr.rel (0) target = $region9
    $region8: #{rnn_decoder_forward.1} parent=1 // pred_region
      _
    $region9: #{rnn_decoder_forward.1} parent=1 // pred_fallthru
      _
    // Predicated region
    $region10: #{rnn_decoder_forward.1} parent=1 // pred_check
      _
    $region11: #{rnn_decoder_forward.1} parent=1 // pred_check_branch
      %25 = sbr.rel (0) target = $region13
    $region12: #{rnn_decoder_forward.1} parent=1 // pred_region
      _
    $region13: #{rnn_decoder_forward.1} parent=1 // pred_fallthru
      _
    // Predicated region
    $region14: #{rnn_decoder_forward.1} parent=1 // pred_check
      _
    $region15: #{rnn_decoder_forward.1} parent=1 // pred_check_branch
      %27 = sbr.rel (0) target = $region17
    $region16: #{rnn_decoder_forward.1} parent=1 // pred_region
      _
    $region17: #{rnn_decoder_forward.1} parent=1 // pred_fallthru
      _
    // Predicated region
    $region18: #{rnn_decoder_forward.1} parent=1 // pred_check
      _
    $region19: #{rnn_decoder_forward.1} parent=1 // pred_check_branch
      %29 = sbr.rel (0) target = $region21
    $region20: #{rnn_decoder_forward.1} parent=1 // pred_region
      _
    $region21: #{rnn_decoder_forward.1} parent=1 // pred_fallthru
      _
    // Predicated region
    $region22: #{rnn_decoder_forward.1} parent=1 // pred_check
      _
    $region23: #{rnn_decoder_forward.1} parent=1 // pred_check_branch
      %31 = sbr.rel (0) target = $region25
    $region24: #{rnn_decoder_forward.1} parent=1 // pred_region
      _
    $region25: #{rnn_decoder_forward.1} parent=1 // pred_fallthru
      _
    // Predicated region
    $region26: #{rnn_decoder_forward.1} parent=1 // pred_check
      _
    $region27: #{rnn_decoder_forward.1} parent=1 // pred_check_branch
      %33 = sbr.rel (0) target = $region29
    $region28: #{rnn_decoder_forward.1} parent=1 // pred_region
      _
    $region29: #{rnn_decoder_forward.1} parent=1 // pred_fallthru
      _
    // Predicated region
    $region30: #{rnn_decoder_forward.1} parent=1 // pred_check
      _
    $region31: #{rnn_decoder_forward.1} parent=1 // pred_check_branch
      %35 = sbr.rel (0) target = $region33
    $region32: #{rnn_decoder_forward.1} parent=1 // pred_region
      _
    $region33: #{rnn_decoder_forward.1} parent=1 // pred_fallthru
      _
    // Predicated region
    $region34: #{rnn_decoder_forward.1} parent=1 // pred_check
      _
    $region35: #{rnn_decoder_forward.1} parent=1 // pred_check_branch
      %37 = sbr.rel (0) target = $region37
    $region36: #{rnn_decoder_forward.1} parent=1 // pred_region
      _
    $region37: #{rnn_decoder_forward.1} parent=1 // pred_fallthru
      _
    // Predicated region
    $region38: #{rnn_decoder_forward.1} parent=1 // pred_check
      _
    $region39: #{rnn_decoder_forward.1} parent=1 // pred_check_branch
      %39 = sbr.rel (0) target = $region41
    $region40: #{rnn_decoder_forward.1} parent=1 // pred_region
      _
    $region41: #{rnn_decoder_forward.1} parent=1 // pred_fallthru
      _
    // Predicated region
    $region42: #{rnn_decoder_forward.1} parent=1 // pred_check
      _
    $region43: #{rnn_decoder_forward.1} parent=1 // pred_check_branch
      %41 = sbr.rel (0) target = $region45
    $region44: #{rnn_decoder_forward.1} parent=1 // pred_region
      _
    $region45: #{rnn_decoder_forward.1} parent=1 // pred_fallthru
      _
    %v42 = vld [vmem:[%s0] sm:$0x3]
    %v43 = vld [vmem:[%s0 + $0x2] sm:$0x3]
    %v44 = vld [vmem:[%s0 + $0x4] sm:$0x3]
    %v45 = vld [vmem:[%s0 + $0x6] sm:$0x3]
    %v46 = vld [vmem:[%s0 + $0x8] sm:$0x3]
    %v47 = vld [vmem:[%s0 + $0xa] sm:$0x3]
    %v48 = vld [vmem:[%s0 + $0xc] sm:$0x3]
    %v49 = vld [vmem:[%s0 + $0xe] sm:$0x3]
    %v50 = vld [vmem:[%s2] sm:$0xff]
    %v51 = vld [vmem:[%s2 + $0x8] sm:$0xff]
    %v52 = vld [vmem:[%s2 + $0x10] sm:$0xff]
    %v53 = vld [vmem:[%s2 + $0x18] sm:$0xff]
    %v54 = vld [vmem:[%s4] sm:$0x1]
    %v56 = vperm.slane %v54, 0
    %66 = vst [vmem:[#allocation1] ss:$4 sm:$0xff] %v42
    %s67 = scalar_lea.vmem [#allocation1], 1
    %68 = vst [vmem:[%s67] ss:$4 sm:$0xff] %v43
    %s69 = scalar_lea.vmem [#allocation1], 2
    %70 = vst [vmem:[%s69] ss:$4 sm:$0xff] %v44
    %s71 = scalar_lea.vmem [#allocation1], 3
    %72 = vst [vmem:[%s71] ss:$4 sm:$0xff] %v45
    %s73 = scalar_lea.vmem [#allocation1], 32
    %74 = vst [vmem:[%s73] ss:$4 sm:$0xff] %v46
    %s75 = scalar_lea.vmem [#allocation1], 33
    %76 = vst [vmem:[%s75] ss:$4 sm:$0xff] %v47
    %s77 = scalar_lea.vmem [#allocation1], 34
    %78 = vst [vmem:[%s77] ss:$4 sm:$0xff] %v48
    %s79 = scalar_lea.vmem [#allocation1], 35
    %80 = vst [vmem:[%s79] ss:$4 sm:$0xff] %v49
    %v81 = vld.sshfl [vmem:[#allocation1] sm:$0xff pattern:$0x73625140]
    %v82 = vld.sshfl [vmem:[#allocation1 + $0x20] sm:$0xff pattern:$0x73625140]
    %vm83 = vcmask 261120
    %v84 = vsel %vm83, %v81, 0
    %v86 = vsel %vm83, %v82, 0
    %88 = vmatpush.msra.mxu0 0.0
    %89 = vmatpush.msra.mxu0 0.0
    %90 = vmatpush.msra.mxu0 0.0
    %91 = vmatpush.msra.mxu0 0.0
    %92 = vmatpush.msra.mxu0 0.0
    %93 = vmatpush.msra.mxu0 0.0
    %94 = vmatpush.msra.mxu0 0.0
    %95 = vmatpush.msra.mxu0 0.0
    %96 = vmatpush.msra.mxu0 0.0
    %97 = vmatpush.msra.mxu0 0.0
    %98 = vmatpush.msra.mxu0 0.0
    %99 = vmatpush.msra.mxu0 0.0
    %100 = vmatpush.msra.mxu0 %v53
    %101 = vmatpush.msra.mxu0 %v52
    %102 = vmatpush.msra.mxu0 %v51
    %103 = vmatpush.msra.mxu0 %v50
    %104 = vmatmul.f32.gmra.mxu0 %v84
    %v105 = vpop.f32.mrf.mxu0
    %v106 = vadd.f32 %v56, %v105
    %107 = vmatmul.f32.gmra.mxu0 %v86
    %v108 = vpop.f32.mrf.mxu0
    %v109 = vadd.f32 %v56, %v108
    %110 = vdwg.mxu0
    %v113 = vrot.slane %v106, 2
    %v114 = vrot.slane %v106, 4
    %v115 = vrot.slane %v106, 6
    %v116 = vrot.slane %v109, 2
    %v117 = vrot.slane %v109, 4
    %v118 = vrot.slane %v109, 6
    %vm125 = vcmask 254976
    %126 = vst.msk [vmem:[#allocation2] sm:$0x3] %vm125, %v106
    %127 = vst.msk [vmem:[#allocation2 + $0x2] sm:$0x3] %vm125, %v113
    %128 = vst.msk [vmem:[#allocation2 + $0x4] sm:$0x3] %vm125, %v114
    %129 = vst.msk [vmem:[#allocation2 + $0x6] sm:$0x3] %vm125, %v115
    %130 = vst.msk [vmem:[#allocation2 + $0x8] sm:$0x3] %vm125, %v109
    %131 = vst.msk [vmem:[#allocation2 + $0xa] sm:$0x3] %vm125, %v116
    %132 = vst.msk [vmem:[#allocation2 + $0xc] sm:$0x3] %vm125, %v117
    %133 = vst.msk [vmem:[#allocation2 + $0xe] sm:$0x3] %vm125, %v118
    %s134 = scalar_lea.vmem %s2, 32
    %v135 = vld [vmem:[%s134] sm:$0xff]
    %v136 = vld [vmem:[%s134 + $0x8] sm:$0xff]
    %v137 = vld [vmem:[%s134 + $0x10] sm:$0xff]
    %v138 = vld [vmem:[%s134 + $0x18] sm:$0xff]
    %s139 = scalar_lea.vmem %s4, 1
    %v140 = vld [vmem:[%s139] sm:$0x1]
    %v142 = vperm.slane %v140, 0
    %144 = vst [vmem:[#allocation1] ss:$4 sm:$0xff] %v42
    %s145 = scalar_lea.vmem [#allocation1], 1
    %146 = vst [vmem:[%s145] ss:$4 sm:$0xff] %v43
    %s147 = scalar_lea.vmem [#allocation1], 2
    %148 = vst [vmem:[%s147] ss:$4 sm:$0xff] %v44
    %s149 = scalar_lea.vmem [#allocation1], 3
    %150 = vst [vmem:[%s149] ss:$4 sm:$0xff] %v45
    %s151 = scalar_lea.vmem [#allocation1], 32
    %152 = vst [vmem:[%s151] ss:$4 sm:$0xff] %v46
    %s153 = scalar_lea.vmem [#allocation1], 33
    %154 = vst [vmem:[%s153] ss:$4 sm:$0xff] %v47
    %s155 = scalar_lea.vmem [#allocation1], 34
    %156 = vst [vmem:[%s155] ss:$4 sm:$0xff] %v48
    %s157 = scalar_lea.vmem [#allocation1], 35
    %158 = vst [vmem:[%s157] ss:$4 sm:$0xff] %v49
    %v159 = vld.sshfl [vmem:[#allocation1] sm:$0xff pattern:$0x73625140]
    %v160 = vld.sshfl [vmem:[#allocation1 + $0x20] sm:$0xff pattern:$0x73625140]
    %v161 = vsel %vm83, %v159, 0
    %v163 = vsel %vm83, %v160, 0
    %165 = vmatpush.msra.mxu0 0.0
    %166 = vmatpush.msra.mxu0 0.0
    %167 = vmatpush.msra.mxu0 0.0
    %168 = vmatpush.msra.mxu0 0.0
    %169 = vmatpush.msra.mxu0 0.0
    %170 = vmatpush.msra.mxu0 0.0
    %171 = vmatpush.msra.mxu0 0.0
    %172 = vmatpush.msra.mxu0 0.0
    %173 = vmatpush.msra.mxu0 0.0
    %174 = vmatpush.msra.mxu0 0.0
    %175 = vmatpush.msra.mxu0 0.0
    %176 = vmatpush.msra.mxu0 0.0
    %177 = vmatpush.msra.mxu0 %v138
    %178 = vmatpush.msra.mxu0 %v137
    %179 = vmatpush.msra.mxu0 %v136
    %180 = vmatpush.msra.mxu0 %v135
    %181 = vmatmul.f32.gmra.mxu0 %v161
    %v182 = vpop.f32.mrf.mxu0
    %v183 = vadd.f32 %v142, %v182
    %184 = vmatmul.f32.gmra.mxu0 %v163
    %v185 = vpop.f32.mrf.mxu0
    %v186 = vadd.f32 %v142, %v185
    %187 = vdwg.mxu0
    %v190 = vrot.slane %v183, 2
    %v191 = vrot.slane %v183, 4
    %v192 = vrot.slane %v183, 6
    %v193 = vrot.slane %v186, 2
    %v194 = vrot.slane %v186, 4
    %v195 = vrot.slane %v186, 6
    %202 = vst.msk [vmem:[#allocation3] sm:$0x3] %vm125, %v183
    %203 = vst.msk [vmem:[#allocation3 + $0x2] sm:$0x3] %vm125, %v190
    %204 = vst.msk [vmem:[#allocation3 + $0x4] sm:$0x3] %vm125, %v191
    %205 = vst.msk [vmem:[#allocation3 + $0x6] sm:$0x3] %vm125, %v192
    %206 = vst.msk [vmem:[#allocation3 + $0x8] sm:$0x3] %vm125, %v186
    %207 = vst.msk [vmem:[#allocation3 + $0xa] sm:$0x3] %vm125, %v193
    %208 = vst.msk [vmem:[#allocation3 + $0xc] sm:$0x3] %vm125, %v194
    %209 = vst.msk [vmem:[#allocation3 + $0xe] sm:$0x3] %vm125, %v195
    %s210 = scalar_lea.vmem %s2, 64
    %v211 = vld [vmem:[%s210] sm:$0xff]
    %v212 = vld [vmem:[%s210 + $0x8] sm:$0xff]
    %v213 = vld [vmem:[%s210 + $0x10] sm:$0xff]
    %v214 = vld [vmem:[%s210 + $0x18] sm:$0xff]
    %s215 = scalar_lea.vmem %s4, 2
    %v216 = vld [vmem:[%s215] sm:$0x1]
    %v218 = vperm.slane %v216, 0
    %220 = vst [vmem:[#allocation1] ss:$4 sm:$0xff] %v42
    %s221 = scalar_lea.vmem [#allocation1], 1
    %222 = vst [vmem:[%s221] ss:$4 sm:$0xff] %v43
    %s223 = scalar_lea.vmem [#allocation1], 2
    %224 = vst [vmem:[%s223] ss:$4 sm:$0xff] %v44
    %s225 = scalar_lea.vmem [#allocation1], 3
    %226 = vst [vmem:[%s225] ss:$4 sm:$0xff] %v45
    %s227 = scalar_lea.vmem [#allocation1], 32
    %228 = vst [vmem:[%s227] ss:$4 sm:$0xff] %v46
    %s229 = scalar_lea.vmem [#allocation1], 33
    %230 = vst [vmem:[%s229] ss:$4 sm:$0xff] %v47
    %s231 = scalar_lea.vmem [#allocation1], 34
    %232 = vst [vmem:[%s231] ss:$4 sm:$0xff] %v48
    %s233 = scalar_lea.vmem [#allocation1], 35
    %234 = vst [vmem:[%s233] ss:$4 sm:$0xff] %v49
    %v235 = vld.sshfl [vmem:[#allocation1] sm:$0xff pattern:$0x73625140]
    %v236 = vld.sshfl [vmem:[#allocation1 + $0x20] sm:$0xff pattern:$0x73625140]
    %v237 = vsel %vm83, %v235, 0
    %v239 = vsel %vm83, %v236, 0
    %241 = vmatpush.msra.mxu0 0.0
    %242 = vmatpush.msra.mxu0 0.0
    %243 = vmatpush.msra.mxu0 0.0
    %244 = vmatpush.msra.mxu0 0.0
    %245 = vmatpush.msra.mxu0 0.0
    %246 = vmatpush.msra.mxu0 0.0
    %247 = vmatpush.msra.mxu0 0.0
    %248 = vmatpush.msra.mxu0 0.0
    %249 = vmatpush.msra.mxu0 0.0
    %250 = vmatpush.msra.mxu0 0.0
    %251 = vmatpush.msra.mxu0 0.0
    %252 = vmatpush.msra.mxu0 0.0
    %253 = vmatpush.msra.mxu0 %v214
    %254 = vmatpush.msra.mxu0 %v213
    %255 = vmatpush.msra.mxu0 %v212
    %256 = vmatpush.msra.mxu0 %v211
    %257 = vmatmul.f32.gmra.mxu0 %v237
    %v258 = vpop.f32.mrf.mxu0
    %v259 = vadd.f32 %v218, %v258
    %260 = vmatmul.f32.gmra.mxu0 %v239
    %v261 = vpop.f32.mrf.mxu0
    %v262 = vadd.f32 %v218, %v261
    %263 = vdwg.mxu0
    %v266 = vrot.slane %v259, 2
    %v267 = vrot.slane %v259, 4
    %v268 = vrot.slane %v259, 6
    %v269 = vrot.slane %v262, 2
    %v270 = vrot.slane %v262, 4
    %v271 = vrot.slane %v262, 6
    %278 = vst.msk [vmem:[#allocation4] sm:$0x3] %vm125, %v259
    %279 = vst.msk [vmem:[#allocation4 + $0x2] sm:$0x3] %vm125, %v266
    %280 = vst.msk [vmem:[#allocation4 + $0x4] sm:$0x3] %vm125, %v267
    %281 = vst.msk [vmem:[#allocation4 + $0x6] sm:$0x3] %vm125, %v268
    %282 = vst.msk [vmem:[#allocation4 + $0x8] sm:$0x3] %vm125, %v262
    %283 = vst.msk [vmem:[#allocation4 + $0xa] sm:$0x3] %vm125, %v269
    %284 = vst.msk [vmem:[#allocation4 + $0xc] sm:$0x3] %vm125, %v270
    %285 = vst.msk [vmem:[#allocation4 + $0xe] sm:$0x3] %vm125, %v271
    %s286 = scalar_lea.vmem %s2, 96
    %v287 = vld [vmem:[%s286] sm:$0xff]
    %v288 = vld [vmem:[%s286 + $0x8] sm:$0xff]
    %v289 = vld [vmem:[%s286 + $0x10] sm:$0xff]
    %v290 = vld [vmem:[%s286 + $0x18] sm:$0xff]
    %s291 = scalar_lea.vmem %s4, 3
    %v292 = vld [vmem:[%s291] sm:$0x1]
    %v294 = vperm.slane %v292, 0
    %296 = vst [vmem:[#allocation1] ss:$4 sm:$0xff] %v42
    %s297 = scalar_lea.vmem [#allocation1], 1
    %298 = vst [vmem:[%s297] ss:$4 sm:$0xff] %v43
    %s299 = scalar_lea.vmem [#allocation1], 2
    %300 = vst [vmem:[%s299] ss:$4 sm:$0xff] %v44
    %s301 = scalar_lea.vmem [#allocation1], 3
    %302 = vst [vmem:[%s301] ss:$4 sm:$0xff] %v45
    %s303 = scalar_lea.vmem [#allocation1], 32
    %304 = vst [vmem:[%s303] ss:$4 sm:$0xff] %v46
    %s305 = scalar_lea.vmem [#allocation1], 33
    %306 = vst [vmem:[%s305] ss:$4 sm:$0xff] %v47
    %s307 = scalar_lea.vmem [#allocation1], 34
    %308 = vst [vmem:[%s307] ss:$4 sm:$0xff] %v48
    %s309 = scalar_lea.vmem [#allocation1], 35
    %310 = vst [vmem:[%s309] ss:$4 sm:$0xff] %v49
    %v311 = vld.sshfl [vmem:[#allocation1] sm:$0xff pattern:$0x73625140]
    %v312 = vld.sshfl [vmem:[#allocation1 + $0x20] sm:$0xff pattern:$0x73625140]
    %v313 = vsel %vm83, %v311, 0
    %v315 = vsel %vm83, %v312, 0
    %317 = vmatpush.msra.mxu0 0.0
    %318 = vmatpush.msra.mxu0 0.0
    %319 = vmatpush.msra.mxu0 0.0
    %320 = vmatpush.msra.mxu0 0.0
    %321 = vmatpush.msra.mxu0 0.0
    %322 = vmatpush.msra.mxu0 0.0
    %323 = vmatpush.msra.mxu0 0.0
    %324 = vmatpush.msra.mxu0 0.0
    %325 = vmatpush.msra.mxu0 0.0
    %326 = vmatpush.msra.mxu0 0.0
    %327 = vmatpush.msra.mxu0 0.0
    %328 = vmatpush.msra.mxu0 0.0
    %329 = vmatpush.msra.mxu0 %v290
    %330 = vmatpush.msra.mxu0 %v289
    %331 = vmatpush.msra.mxu0 %v288
    %332 = vmatpush.msra.mxu0 %v287
    %333 = vmatmul.f32.gmra.mxu0 %v313
    %v334 = vpop.f32.mrf.mxu0
    %v335 = vadd.f32 %v294, %v334
    %336 = vmatmul.f32.gmra.mxu0 %v315
    %v337 = vpop.f32.mrf.mxu0
    %v338 = vadd.f32 %v294, %v337
    %339 = vdwg.mxu0
    %v342 = vrot.slane %v335, 2
    %v343 = vrot.slane %v335, 4
    %v344 = vrot.slane %v335, 6
    %v345 = vrot.slane %v338, 2
    %v346 = vrot.slane %v338, 4
    %v347 = vrot.slane %v338, 6
    %354 = vst.msk [vmem:[#allocation5] sm:$0x3] %vm125, %v335
    %355 = vst.msk [vmem:[#allocation5 + $0x2] sm:$0x3] %vm125, %v342
    %356 = vst.msk [vmem:[#allocation5 + $0x4] sm:$0x3] %vm125, %v343
    %357 = vst.msk [vmem:[#allocation5 + $0x6] sm:$0x3] %vm125, %v344
    %358 = vst.msk [vmem:[#allocation5 + $0x8] sm:$0x3] %vm125, %v338
    %359 = vst.msk [vmem:[#allocation5 + $0xa] sm:$0x3] %vm125, %v345
    %360 = vst.msk [vmem:[#allocation5 + $0xc] sm:$0x3] %vm125, %v346
    %361 = vst.msk [vmem:[#allocation5 + $0xe] sm:$0x3] %vm125, %v347
    %v362 = vld [vmem:[%s3] sm:$0xff]
    %v363 = vld [vmem:[%s3 + $0x8] sm:$0xff]
    %v364 = vld [vmem:[%s3 + $0x10] sm:$0xff]
    %v365 = vld [vmem:[%s3 + $0x18] sm:$0xff]
    %s366 = scalar_lea.vmem %s3, 32
    %v367 = vld [vmem:[%s366] sm:$0xff]
    %v368 = vld [vmem:[%s366 + $0x8] sm:$0xff]
    %v369 = vld [vmem:[%s366 + $0x10] sm:$0xff]
    %v370 = vld [vmem:[%s366 + $0x18] sm:$0xff]
    %s371 = scalar_lea.vmem %s3, 64
    %v372 = vld [vmem:[%s371] sm:$0xff]
    %v373 = vld [vmem:[%s371 + $0x8] sm:$0xff]
    %v374 = vld [vmem:[%s371 + $0x10] sm:$0xff]
    %v375 = vld [vmem:[%s371 + $0x18] sm:$0xff]
    %s376 = scalar_lea.vmem %s3, 96
    %v377 = vld [vmem:[%s376] sm:$0xff]
    %v378 = vld [vmem:[%s376 + $0x8] sm:$0xff]
    %v379 = vld [vmem:[%s376 + $0x10] sm:$0xff]
    %v380 = vld [vmem:[%s376 + $0x18] sm:$0xff]
    %v381 = vld [vmem:[#allocation2] sm:$0x3]
    %v383 = vsel %vm83, 0.0, 0
    %385 = vmatpush.msra.mxu0 0.0
    %386 = vmatpush.msra.mxu0 0.0
    %387 = vmatpush.msra.mxu0 0.0
    %388 = vmatpush.msra.mxu0 0.0
    %389 = vmatpush.msra.mxu0 0.0
    %390 = vmatpush.msra.mxu0 0.0
    %391 = vmatpush.msra.mxu0 0.0
    %392 = vmatpush.msra.mxu0 0.0
    %393 = vmatpush.msra.mxu0 0.0
    %394 = vmatpush.msra.mxu0 0.0
    %395 = vmatpush.msra.mxu0 0.0
    %396 = vmatpush.msra.mxu0 0.0
    %397 = vmatpush.msra.mxu0 %v365
    %398 = vmatpush.msra.mxu0 %v364
    %399 = vmatpush.msra.mxu0 %v363
    %400 = vmatpush.msra.mxu0 %v362
    %401 = vmatmul.f32.gmra.mxu0 %v383
    %v402 = vpop.f32.mrf.mxu0
    %v403 = vadd.f32 0.0, %v402
    %404 = vdwg.mxu0
    %v405 = vadd.f32 %v381, %v403
    %v406 = vld [vmem:[#allocation3] sm:$0x3]
    %407 = vmatpush.msra.mxu0 0.0
    %408 = vmatpush.msra.mxu0 0.0
    %409 = vmatpush.msra.mxu0 0.0
    %410 = vmatpush.msra.mxu0 0.0
    %411 = vmatpush.msra.mxu0 0.0
    %412 = vmatpush.msra.mxu0 0.0
    %413 = vmatpush.msra.mxu0 0.0
    %414 = vmatpush.msra.mxu0 0.0
    %415 = vmatpush.msra.mxu0 0.0
    %416 = vmatpush.msra.mxu0 0.0
    %417 = vmatpush.msra.mxu0 0.0
    %418 = vmatpush.msra.mxu0 0.0
    %419 = vmatpush.msra.mxu0 %v370
    %420 = vmatpush.msra.mxu0 %v369
    %421 = vmatpush.msra.mxu0 %v368
    %422 = vmatpush.msra.mxu0 %v367
    %423 = vmatmul.f32.gmra.mxu0 %v383
    %v424 = vpop.f32.mrf.mxu0
    %v425 = vadd.f32 0.0, %v424
    %426 = vdwg.mxu0
    %v427 = vadd.f32 %v406, %v425
    %v428 = vld [vmem:[#allocation4] sm:$0x3]
    %429 = vmatpush.msra.mxu0 0.0
    %430 = vmatpush.msra.mxu0 0.0
    %431 = vmatpush.msra.mxu0 0.0
    %432 = vmatpush.msra.mxu0 0.0
    %433 = vmatpush.msra.mxu0 0.0
    %434 = vmatpush.msra.mxu0 0.0
    %435 = vmatpush.msra.mxu0 0.0
    %436 = vmatpush.msra.mxu0 0.0
    %437 = vmatpush.msra.mxu0 0.0
    %438 = vmatpush.msra.mxu0 0.0
    %439 = vmatpush.msra.mxu0 0.0
    %440 = vmatpush.msra.mxu0 0.0
    %441 = vmatpush.msra.mxu0 %v375
    %442 = vmatpush.msra.mxu0 %v374
    %443 = vmatpush.msra.mxu0 %v373
    %444 = vmatpush.msra.mxu0 %v372
    %445 = vmatmul.f32.gmra.mxu0 %v383
    %v446 = vpop.f32.mrf.mxu0
    %v447 = vadd.f32 0.0, %v446
    %448 = vdwg.mxu0
    %v449 = vadd.f32 %v428, %v447
    %v450 = vld [vmem:[#allocation5] sm:$0x3]
    %451 = vmatpush.msra.mxu0 0.0
    %452 = vmatpush.msra.mxu0 0.0
    %453 = vmatpush.msra.mxu0 0.0
    %454 = vmatpush.msra.mxu0 0.0
    %455 = vmatpush.msra.mxu0 0.0
    %456 = vmatpush.msra.mxu0 0.0
    %457 = vmatpush.msra.mxu0 0.0
    %458 = vmatpush.msra.mxu0 0.0
    %459 = vmatpush.msra.mxu0 0.0
    %460 = vmatpush.msra.mxu0 0.0
    %461 = vmatpush.msra.mxu0 0.0
    %462 = vmatpush.msra.mxu0 0.0
    %463 = vmatpush.msra.mxu0 %v380
    %464 = vmatpush.msra.mxu0 %v379
    %465 = vmatpush.msra.mxu0 %v378
    %466 = vmatpush.msra.mxu0 %v377
    %467 = vmatmul.f32.gmra.mxu0 %v383
    %v468 = vpop.f32.mrf.mxu0
    %v469 = vadd.f32 0.0, %v468
    %470 = vdwg.mxu0
    %v471 = vadd.f32 %v450, %v469
    %v472 = vxor.u32 %v405, 2147483648
    %v473 = vmul.f32 %v472, 1.442695
    %v474 = vpow.pop %v473
    %v475 = vadd.f32 %v474, 1.0
    %v476 = vrcp.pop %v475
    %v477 = vmul.f32 %v475, %v476
    %v478 = vsub.f32 1.0, %v477
    %v479 = vmul.f32 %v476, %v478
    %v480 = vadd.f32 %v476, %v479
    %vm481 = vweird.f32 %v475
    %vm482 = vweird.f32 %v476
    %vm483 = vmor %vm481, %vm482
    %v484 = vsel %vm483, %v476, %v480
    %v485 = vand.u32 2147483647, %v475
    %vm486 = vcmp.eq.f32.partialorder %v485, 8.507059e+37
    %v487 = vand.u32 %v475, 2147483648
    %v488 = vor.u32 1.1754944e-38, %v487
    %v489 = vsel %vm486, %v488, %v484
    %v490 = vmul.f32 1.0, %v489
    %v491 = vxor.u32 %v427, 2147483648
    %v492 = vmul.f32 %v491, 1.442695
    %v493 = vpow.pop %v492
    %v494 = vadd.f32 %v493, 1.0
    %v495 = vrcp.pop %v494
    %v496 = vmul.f32 %v494, %v495
    %v497 = vsub.f32 1.0, %v496
    %v498 = vmul.f32 %v495, %v497
    %v499 = vadd.f32 %v495, %v498
    %vm500 = vweird.f32 %v494
    %vm501 = vweird.f32 %v495
    %vm502 = vmor %vm500, %vm501
    %v503 = vsel %vm502, %v495, %v499
    %v504 = vand.u32 2147483647, %v494
    %vm505 = vcmp.eq.f32.partialorder %v504, 8.507059e+37
    %v506 = vand.u32 %v494, 2147483648
    %v507 = vor.u32 1.1754944e-38, %v506
    %v508 = vsel %vm505, %v507, %v503
    %v509 = vmul.f32 1.0, %v508
    %v510 = vtanh.pop %v449
    %v511 = vxor.u32 %v471, 2147483648
    %v512 = vmul.f32 %v511, 1.442695
    %v513 = vpow.pop %v512
    %v514 = vadd.f32 %v513, 1.0
    %v515 = vrcp.pop %v514
    %v516 = vmul.f32 %v514, %v515
    %v517 = vsub.f32 1.0, %v516
    %v518 = vmul.f32 %v515, %v517
    %v519 = vadd.f32 %v515, %v518
    %vm520 = vweird.f32 %v514
    %vm521 = vweird.f32 %v515
    %vm522 = vmor %vm520, %vm521
    %v523 = vsel %vm522, %v515, %v519
    %v524 = vand.u32 2147483647, %v514
    %vm525 = vcmp.eq.f32.partialorder %v524, 8.507059e+37
    %v526 = vand.u32 %v514, 2147483648
    %v527 = vor.u32 1.1754944e-38, %v526
    %v528 = vsel %vm525, %v527, %v523
    %v529 = vmul.f32 1.0, %v528
    %v530 = vmul.f32 %v509, 0.0
    %v531 = vmul.f32 %v490, %v510
    %v532 = vadd.f32 %v530, %v531
    %v533 = vtanh.pop %v532
    %v534 = vmul.f32 %v529, %v533
    %535 = vst.msk [vmem:[#allocation6] sm:$0x3] %vm125, %v534
    %s536 = scalar_lea.vmem [#allocation2], 2
    %v537 = vld [vmem:[%s536] sm:$0x3]
    %v539 = vsel %vm83, %v534, 0
    %541 = vmatpush.msra.mxu0 0.0
    %542 = vmatpush.msra.mxu0 0.0
    %543 = vmatpush.msra.mxu0 0.0
    %544 = vmatpush.msra.mxu0 0.0
    %545 = vmatpush.msra.mxu0 0.0
    %546 = vmatpush.msra.mxu0 0.0
    %547 = vmatpush.msra.mxu0 0.0
    %548 = vmatpush.msra.mxu0 0.0
    %549 = vmatpush.msra.mxu0 0.0
    %550 = vmatpush.msra.mxu0 0.0
    %551 = vmatpush.msra.mxu0 0.0
    %552 = vmatpush.msra.mxu0 0.0
    %553 = vmatpush.msra.mxu0 %v365
    %554 = vmatpush.msra.mxu0 %v364
    %555 = vmatpush.msra.mxu0 %v363
    %556 = vmatpush.msra.mxu0 %v362
    %557 = vmatmul.f32.gmra.mxu0 %v539
    %v558 = vpop.f32.mrf.mxu0
    %v559 = vadd.f32 0.0, %v558
    %560 = vdwg.mxu0
    %v561 = vadd.f32 %v537, %v559
    %s562 = scalar_lea.vmem [#allocation3], 2
    %v563 = vld [vmem:[%s562] sm:$0x3]
    %564 = vmatpush.msra.mxu0 0.0
    %565 = vmatpush.msra.mxu0 0.0
    %566 = vmatpush.msra.mxu0 0.0
    %567 = vmatpush.msra.mxu0 0.0
    %568 = vmatpush.msra.mxu0 0.0
    %569 = vmatpush.msra.mxu0 0.0
    %570 = vmatpush.msra.mxu0 0.0
    %571 = vmatpush.msra.mxu0 0.0
    %572 = vmatpush.msra.mxu0 0.0
    %573 = vmatpush.msra.mxu0 0.0
    %574 = vmatpush.msra.mxu0 0.0
    %575 = vmatpush.msra.mxu0 0.0
    %576 = vmatpush.msra.mxu0 %v370
    %577 = vmatpush.msra.mxu0 %v369
    %578 = vmatpush.msra.mxu0 %v368
    %579 = vmatpush.msra.mxu0 %v367
    %580 = vmatmul.f32.gmra.mxu0 %v539
    %v581 = vpop.f32.mrf.mxu0
    %v582 = vadd.f32 0.0, %v581
    %583 = vdwg.mxu0
    %v584 = vadd.f32 %v563, %v582
    %s585 = scalar_lea.vmem [#allocation4], 2
    %v586 = vld [vmem:[%s585] sm:$0x3]
    %587 = vmatpush.msra.mxu0 0.0
    %588 = vmatpush.msra.mxu0 0.0
    %589 = vmatpush.msra.mxu0 0.0
    %590 = vmatpush.msra.mxu0 0.0
    %591 = vmatpush.msra.mxu0 0.0
    %592 = vmatpush.msra.mxu0 0.0
    %593 = vmatpush.msra.mxu0 0.0
    %594 = vmatpush.msra.mxu0 0.0
    %595 = vmatpush.msra.mxu0 0.0
    %596 = vmatpush.msra.mxu0 0.0
    %597 = vmatpush.msra.mxu0 0.0
    %598 = vmatpush.msra.mxu0 0.0
    %599 = vmatpush.msra.mxu0 %v375
    %600 = vmatpush.msra.mxu0 %v374
    %601 = vmatpush.msra.mxu0 %v373
    %602 = vmatpush.msra.mxu0 %v372
    %603 = vmatmul.f32.gmra.mxu0 %v539
    %v604 = vpop.f32.mrf.mxu0
    %v605 = vadd.f32 0.0, %v604
    %606 = vdwg.mxu0
    %v607 = vadd.f32 %v586, %v605
    %s608 = scalar_lea.vmem [#allocation5], 2
    %v609 = vld [vmem:[%s608] sm:$0x3]
    %610 = vmatpush.msra.mxu0 0.0
    %611 = vmatpush.msra.mxu0 0.0
    %612 = vmatpush.msra.mxu0 0.0
    %613 = vmatpush.msra.mxu0 0.0
    %614 = vmatpush.msra.mxu0 0.0
    %615 = vmatpush.msra.mxu0 0.0
    %616 = vmatpush.msra.mxu0 0.0
    %617 = vmatpush.msra.mxu0 0.0
    %618 = vmatpush.msra.mxu0 0.0
    %619 = vmatpush.msra.mxu0 0.0
    %620 = vmatpush.msra.mxu0 0.0
    %621 = vmatpush.msra.mxu0 0.0
    %622 = vmatpush.msra.mxu0 %v380
    %623 = vmatpush.msra.mxu0 %v379
    %624 = vmatpush.msra.mxu0 %v378
    %625 = vmatpush.msra.mxu0 %v377
    %626 = vmatmul.f32.gmra.mxu0 %v539
    %v627 = vpop.f32.mrf.mxu0
    %v628 = vadd.f32 0.0, %v627
    %629 = vdwg.mxu0
    %v630 = vadd.f32 %v609, %v628
    %v631 = vxor.u32 %v561, 2147483648
    %v632 = vmul.f32 %v631, 1.442695
    %v633 = vpow.pop %v632
    %v634 = vadd.f32 %v633, 1.0
    %v635 = vrcp.pop %v634
    %v636 = vmul.f32 %v634, %v635
    %v637 = vsub.f32 1.0, %v636
    %v638 = vmul.f32 %v635, %v637
    %v639 = vadd.f32 %v635, %v638
    %vm640 = vweird.f32 %v634
    %vm641 = vweird.f32 %v635
    %vm642 = vmor %vm640, %vm641
    %v643 = vsel %vm642, %v635, %v639
    %v644 = vand.u32 2147483647, %v634
    %vm645 = vcmp.eq.f32.partialorder %v644, 8.507059e+37
    %v646 = vand.u32 %v634, 2147483648
    %v647 = vor.u32 1.1754944e-38, %v646
    %v648 = vsel %vm645, %v647, %v643
    %v649 = vmul.f32 1.0, %v648
    %v650 = vxor.u32 %v584, 2147483648
    %v651 = vmul.f32 %v650, 1.442695
    %v652 = vpow.pop %v651
    %v653 = vadd.f32 %v652, 1.0
    %v654 = vrcp.pop %v653
    %v655 = vmul.f32 %v653, %v654
    %v656 = vsub.f32 1.0, %v655
    %v657 = vmul.f32 %v654, %v656
    %v658 = vadd.f32 %v654, %v657
    %vm659 = vweird.f32 %v653
    %vm660 = vweird.f32 %v654
    %vm661 = vmor %vm659, %vm660
    %v662 = vsel %vm661, %v654, %v658
    %v663 = vand.u32 2147483647, %v653
    %vm664 = vcmp.eq.f32.partialorder %v663, 8.507059e+37
    %v665 = vand.u32 %v653, 2147483648
    %v666 = vor.u32 1.1754944e-38, %v665
    %v667 = vsel %vm664, %v666, %v662
    %v668 = vmul.f32 1.0, %v667
    %v669 = vtanh.pop %v607
    %v670 = vxor.u32 %v630, 2147483648
    %v671 = vmul.f32 %v670, 1.442695
    %v672 = vpow.pop %v671
    %v673 = vadd.f32 %v672, 1.0
    %v674 = vrcp.pop %v673
    %v675 = vmul.f32 %v673, %v674
    %v676 = vsub.f32 1.0, %v675
    %v677 = vmul.f32 %v674, %v676
    %v678 = vadd.f32 %v674, %v677
    %vm679 = vweird.f32 %v673
    %vm680 = vweird.f32 %v674
    %vm681 = vmor %vm679, %vm680
    %v682 = vsel %vm681, %v674, %v678
    %v683 = vand.u32 2147483647, %v673
    %vm684 = vcmp.eq.f32.partialorder %v683, 8.507059e+37
    %v685 = vand.u32 %v673, 2147483648
    %v686 = vor.u32 1.1754944e-38, %v685
    %v687 = vsel %vm684, %v686, %v682
    %v688 = vmul.f32 1.0, %v687
    %v689 = vmul.f32 %v668, %v532
    %v690 = vmul.f32 %v649, %v669
    %v691 = vadd.f32 %v689, %v690
    %v692 = vtanh.pop %v691
    %v693 = vmul.f32 %v688, %v692
    %s694 = scalar_lea.vmem [#allocation6], 2
    %695 = vst.msk [vmem:[%s694] sm:$0x3] %vm125, %v693
    %s696 = scalar_lea.vmem [#allocation2], 4
    %v697 = vld [vmem:[%s696] sm:$0x3]
    %v699 = vsel %vm83, %v693, 0
    %701 = vmatpush.msra.mxu0 0.0
    %702 = vmatpush.msra.mxu0 0.0
    %703 = vmatpush.msra.mxu0 0.0
    %704 = vmatpush.msra.mxu0 0.0
    %705 = vmatpush.msra.mxu0 0.0
    %706 = vmatpush.msra.mxu0 0.0
    %707 = vmatpush.msra.mxu0 0.0
    %708 = vmatpush.msra.mxu0 0.0
    %709 = vmatpush.msra.mxu0 0.0
    %710 = vmatpush.msra.mxu0 0.0
    %711 = vmatpush.msra.mxu0 0.0
    %712 = vmatpush.msra.mxu0 0.0
    %713 = vmatpush.msra.mxu0 %v365
    %714 = vmatpush.msra.mxu0 %v364
    %715 = vmatpush.msra.mxu0 %v363
    %716 = vmatpush.msra.mxu0 %v362
    %717 = vmatmul.f32.gmra.mxu0 %v699
    %v718 = vpop.f32.mrf.mxu0
    %v719 = vadd.f32 0.0, %v718
    %720 = vdwg.mxu0
    %v721 = vadd.f32 %v697, %v719
    %s722 = scalar_lea.vmem [#allocation3], 4
    %v723 = vld [vmem:[%s722] sm:$0x3]
    %724 = vmatpush.msra.mxu0 0.0
    %725 = vmatpush.msra.mxu0 0.0
    %726 = vmatpush.msra.mxu0 0.0
    %727 = vmatpush.msra.mxu0 0.0
    %728 = vmatpush.msra.mxu0 0.0
    %729 = vmatpush.msra.mxu0 0.0
    %730 = vmatpush.msra.mxu0 0.0
    %731 = vmatpush.msra.mxu0 0.0
    %732 = vmatpush.msra.mxu0 0.0
    %733 = vmatpush.msra.mxu0 0.0
    %734 = vmatpush.msra.mxu0 0.0
    %735 = vmatpush.msra.mxu0 0.0
    %736 = vmatpush.msra.mxu0 %v370
    %737 = vmatpush.msra.mxu0 %v369
    %738 = vmatpush.msra.mxu0 %v368
    %739 = vmatpush.msra.mxu0 %v367
    %740 = vmatmul.f32.gmra.mxu0 %v699
    %v741 = vpop.f32.mrf.mxu0
    %v742 = vadd.f32 0.0, %v741
    %743 = vdwg.mxu0
    %v744 = vadd.f32 %v723, %v742
    %s745 = scalar_lea.vmem [#allocation4], 4
    %v746 = vld [vmem:[%s745] sm:$0x3]
    %747 = vmatpush.msra.mxu0 0.0
    %748 = vmatpush.msra.mxu0 0.0
    %749 = vmatpush.msra.mxu0 0.0
    %750 = vmatpush.msra.mxu0 0.0
    %751 = vmatpush.msra.mxu0 0.0
    %752 = vmatpush.msra.mxu0 0.0
    %753 = vmatpush.msra.mxu0 0.0
    %754 = vmatpush.msra.mxu0 0.0
    %755 = vmatpush.msra.mxu0 0.0
    %756 = vmatpush.msra.mxu0 0.0
    %757 = vmatpush.msra.mxu0 0.0
    %758 = vmatpush.msra.mxu0 0.0
    %759 = vmatpush.msra.mxu0 %v375
    %760 = vmatpush.msra.mxu0 %v374
    %761 = vmatpush.msra.mxu0 %v373
    %762 = vmatpush.msra.mxu0 %v372
    %763 = vmatmul.f32.gmra.mxu0 %v699
    %v764 = vpop.f32.mrf.mxu0
    %v765 = vadd.f32 0.0, %v764
    %766 = vdwg.mxu0
    %v767 = vadd.f32 %v746, %v765
    %s768 = scalar_lea.vmem [#allocation5], 4
    %v769 = vld [vmem:[%s768] sm:$0x3]
    %770 = vmatpush.msra.mxu0 0.0
    %771 = vmatpush.msra.mxu0 0.0
    %772 = vmatpush.msra.mxu0 0.0
    %773 = vmatpush.msra.mxu0 0.0
    %774 = vmatpush.msra.mxu0 0.0
    %775 = vmatpush.msra.mxu0 0.0
    %776 = vmatpush.msra.mxu0 0.0
    %777 = vmatpush.msra.mxu0 0.0
    %778 = vmatpush.msra.mxu0 0.0
    %779 = vmatpush.msra.mxu0 0.0
    %780 = vmatpush.msra.mxu0 0.0
    %781 = vmatpush.msra.mxu0 0.0
    %782 = vmatpush.msra.mxu0 %v380
    %783 = vmatpush.msra.mxu0 %v379
    %784 = vmatpush.msra.mxu0 %v378
    %785 = vmatpush.msra.mxu0 %v377
    %786 = vmatmul.f32.gmra.mxu0 %v699
    %v787 = vpop.f32.mrf.mxu0
    %v788 = vadd.f32 0.0, %v787
    %789 = vdwg.mxu0
    %v790 = vadd.f32 %v769, %v788
    %v791 = vxor.u32 %v721, 2147483648
    %v792 = vmul.f32 %v791, 1.442695
    %v793 = vpow.pop %v792
    %v794 = vadd.f32 %v793, 1.0
    %v795 = vrcp.pop %v794
    %v796 = vmul.f32 %v794, %v795
    %v797 = vsub.f32 1.0, %v796
    %v798 = vmul.f32 %v795, %v797
    %v799 = vadd.f32 %v795, %v798
    %vm800 = vweird.f32 %v794
    %vm801 = vweird.f32 %v795
    %vm802 = vmor %vm800, %vm801
    %v803 = vsel %vm802, %v795, %v799
    %v804 = vand.u32 2147483647, %v794
    %vm805 = vcmp.eq.f32.partialorder %v804, 8.507059e+37
    %v806 = vand.u32 %v794, 2147483648
    %v807 = vor.u32 1.1754944e-38, %v806
    %v808 = vsel %vm805, %v807, %v803
    %v809 = vmul.f32 1.0, %v808
    %v810 = vxor.u32 %v744, 2147483648
    %v811 = vmul.f32 %v810, 1.442695
    %v812 = vpow.pop %v811
    %v813 = vadd.f32 %v812, 1.0
    %v814 = vrcp.pop %v813
    %v815 = vmul.f32 %v813, %v814
    %v816 = vsub.f32 1.0, %v815
    %v817 = vmul.f32 %v814, %v816
    %v818 = vadd.f32 %v814, %v817
    %vm819 = vweird.f32 %v813
    %vm820 = vweird.f32 %v814
    %vm821 = vmor %vm819, %vm820
    %v822 = vsel %vm821, %v814, %v818
    %v823 = vand.u32 2147483647, %v813
    %vm824 = vcmp.eq.f32.partialorder %v823, 8.507059e+37
    %v825 = vand.u32 %v813, 2147483648
    %v826 = vor.u32 1.1754944e-38, %v825
    %v827 = vsel %vm824, %v826, %v822
    %v828 = vmul.f32 1.0, %v827
    %v829 = vtanh.pop %v767
    %v830 = vxor.u32 %v790, 2147483648
    %v831 = vmul.f32 %v830, 1.442695
    %v832 = vpow.pop %v831
    %v833 = vadd.f32 %v832, 1.0
    %v834 = vrcp.pop %v833
    %v835 = vmul.f32 %v833, %v834
    %v836 = vsub.f32 1.0, %v835
    %v837 = vmul.f32 %v834, %v836
    %v838 = vadd.f32 %v834, %v837
    %vm839 = vweird.f32 %v833
    %vm840 = vweird.f32 %v834
    %vm841 = vmor %vm839, %vm840
    %v842 = vsel %vm841, %v834, %v838
    %v843 = vand.u32 2147483647, %v833
    %vm844 = vcmp.eq.f32.partialorder %v843, 8.507059e+37
    %v845 = vand.u32 %v833, 2147483648
    %v846 = vor.u32 1.1754944e-38, %v845
    %v847 = vsel %vm844, %v846, %v842
    %v848 = vmul.f32 1.0, %v847
    %v849 = vmul.f32 %v828, %v691
    %v850 = vmul.f32 %v809, %v829
    %v851 = vadd.f32 %v849, %v850
    %v852 = vtanh.pop %v851
    %v853 = vmul.f32 %v848, %v852
    %s854 = scalar_lea.vmem [#allocation6], 4
    %855 = vst.msk [vmem:[%s854] sm:$0x3] %vm125, %v853
    %s856 = scalar_lea.vmem [#allocation2], 6
    %v857 = vld [vmem:[%s856] sm:$0x3]
    %v859 = vsel %vm83, %v853, 0
    %861 = vmatpush.msra.mxu0 0.0
    %862 = vmatpush.msra.mxu0 0.0
    %863 = vmatpush.msra.mxu0 0.0
    %864 = vmatpush.msra.mxu0 0.0
    %865 = vmatpush.msra.mxu0 0.0
    %866 = vmatpush.msra.mxu0 0.0
    %867 = vmatpush.msra.mxu0 0.0
    %868 = vmatpush.msra.mxu0 0.0
    %869 = vmatpush.msra.mxu0 0.0
    %870 = vmatpush.msra.mxu0 0.0
    %871 = vmatpush.msra.mxu0 0.0
    %872 = vmatpush.msra.mxu0 0.0
    %873 = vmatpush.msra.mxu0 %v365
    %874 = vmatpush.msra.mxu0 %v364
    %875 = vmatpush.msra.mxu0 %v363
    %876 = vmatpush.msra.mxu0 %v362
    %877 = vmatmul.f32.gmra.mxu0 %v859
    %v878 = vpop.f32.mrf.mxu0
    %v879 = vadd.f32 0.0, %v878
    %880 = vdwg.mxu0
    %v881 = vadd.f32 %v857, %v879
    %s882 = scalar_lea.vmem [#allocation3], 6
    %v883 = vld [vmem:[%s882] sm:$0x3]
    %884 = vmatpush.msra.mxu0 0.0
    %885 = vmatpush.msra.mxu0 0.0
    %886 = vmatpush.msra.mxu0 0.0
    %887 = vmatpush.msra.mxu0 0.0
    %888 = vmatpush.msra.mxu0 0.0
    %889 = vmatpush.msra.mxu0 0.0
    %890 = vmatpush.msra.mxu0 0.0
    %891 = vmatpush.msra.mxu0 0.0
    %892 = vmatpush.msra.mxu0 0.0
    %893 = vmatpush.msra.mxu0 0.0
    %894 = vmatpush.msra.mxu0 0.0
    %895 = vmatpush.msra.mxu0 0.0
    %896 = vmatpush.msra.mxu0 %v370
    %897 = vmatpush.msra.mxu0 %v369
    %898 = vmatpush.msra.mxu0 %v368
    %899 = vmatpush.msra.mxu0 %v367
    %900 = vmatmul.f32.gmra.mxu0 %v859
    %v901 = vpop.f32.mrf.mxu0
    %v902 = vadd.f32 0.0, %v901
    %903 = vdwg.mxu0
    %v904 = vadd.f32 %v883, %v902
    %s905 = scalar_lea.vmem [#allocation4], 6
    %v906 = vld [vmem:[%s905] sm:$0x3]
    %907 = vmatpush.msra.mxu0 0.0
    %908 = vmatpush.msra.mxu0 0.0
    %909 = vmatpush.msra.mxu0 0.0
    %910 = vmatpush.msra.mxu0 0.0
    %911 = vmatpush.msra.mxu0 0.0
    %912 = vmatpush.msra.mxu0 0.0
    %913 = vmatpush.msra.mxu0 0.0
    %914 = vmatpush.msra.mxu0 0.0
    %915 = vmatpush.msra.mxu0 0.0
    %916 = vmatpush.msra.mxu0 0.0
    %917 = vmatpush.msra.mxu0 0.0
    %918 = vmatpush.msra.mxu0 0.0
    %919 = vmatpush.msra.mxu0 %v375
    %920 = vmatpush.msra.mxu0 %v374
    %921 = vmatpush.msra.mxu0 %v373
    %922 = vmatpush.msra.mxu0 %v372
    %923 = vmatmul.f32.gmra.mxu0 %v859
    %v924 = vpop.f32.mrf.mxu0
    %v925 = vadd.f32 0.0, %v924
    %926 = vdwg.mxu0
    %v927 = vadd.f32 %v906, %v925
    %s928 = scalar_lea.vmem [#allocation5], 6
    %v929 = vld [vmem:[%s928] sm:$0x3]
    %930 = vmatpush.msra.mxu0 0.0
    %931 = vmatpush.msra.mxu0 0.0
    %932 = vmatpush.msra.mxu0 0.0
    %933 = vmatpush.msra.mxu0 0.0
    %934 = vmatpush.msra.mxu0 0.0
    %935 = vmatpush.msra.mxu0 0.0
    %936 = vmatpush.msra.mxu0 0.0
    %937 = vmatpush.msra.mxu0 0.0
    %938 = vmatpush.msra.mxu0 0.0
    %939 = vmatpush.msra.mxu0 0.0
    %940 = vmatpush.msra.mxu0 0.0
    %941 = vmatpush.msra.mxu0 0.0
    %942 = vmatpush.msra.mxu0 %v380
    %943 = vmatpush.msra.mxu0 %v379
    %944 = vmatpush.msra.mxu0 %v378
    %945 = vmatpush.msra.mxu0 %v377
    %946 = vmatmul.f32.gmra.mxu0 %v859
    %v947 = vpop.f32.mrf.mxu0
    %v948 = vadd.f32 0.0, %v947
    %949 = vdwg.mxu0
    %v950 = vadd.f32 %v929, %v948
    %v951 = vxor.u32 %v881, 2147483648
    %v952 = vmul.f32 %v951, 1.442695
    %v953 = vpow.pop %v952
    %v954 = vadd.f32 %v953, 1.0
    %v955 = vrcp.pop %v954
    %v956 = vmul.f32 %v954, %v955
    %v957 = vsub.f32 1.0, %v956
    %v958 = vmul.f32 %v955, %v957
    %v959 = vadd.f32 %v955, %v958
    %vm960 = vweird.f32 %v954
    %vm961 = vweird.f32 %v955
    %vm962 = vmor %vm960, %vm961
    %v963 = vsel %vm962, %v955, %v959
    %v964 = vand.u32 2147483647, %v954
    %vm965 = vcmp.eq.f32.partialorder %v964, 8.507059e+37
    %v966 = vand.u32 %v954, 2147483648
    %v967 = vor.u32 1.1754944e-38, %v966
    %v968 = vsel %vm965, %v967, %v963
    %v969 = vmul.f32 1.0, %v968
    %v970 = vxor.u32 %v904, 2147483648
    %v971 = vmul.f32 %v970, 1.442695
    %v972 = vpow.pop %v971
    %v973 = vadd.f32 %v972, 1.0
    %v974 = vrcp.pop %v973
    %v975 = vmul.f32 %v973, %v974
    %v976 = vsub.f32 1.0, %v975
    %v977 = vmul.f32 %v974, %v976
    %v978 = vadd.f32 %v974, %v977
    %vm979 = vweird.f32 %v973
    %vm980 = vweird.f32 %v974
    %vm981 = vmor %vm979, %vm980
    %v982 = vsel %vm981, %v974, %v978
    %v983 = vand.u32 2147483647, %v973
    %vm984 = vcmp.eq.f32.partialorder %v983, 8.507059e+37
    %v985 = vand.u32 %v973, 2147483648
    %v986 = vor.u32 1.1754944e-38, %v985
    %v987 = vsel %vm984, %v986, %v982
    %v988 = vmul.f32 1.0, %v987
    %v989 = vtanh.pop %v927
    %v990 = vxor.u32 %v950, 2147483648
    %v991 = vmul.f32 %v990, 1.442695
    %v992 = vpow.pop %v991
    %v993 = vadd.f32 %v992, 1.0
    %v994 = vrcp.pop %v993
    %v995 = vmul.f32 %v993, %v994
    %v996 = vsub.f32 1.0, %v995
    %v997 = vmul.f32 %v994, %v996
    %v998 = vadd.f32 %v994, %v997
    %vm999 = vweird.f32 %v993
    %vm1000 = vweird.f32 %v994
    %vm1001 = vmor %vm999, %vm1000
    %v1002 = vsel %vm1001, %v994, %v998
    %v1003 = vand.u32 2147483647, %v993
    %vm1004 = vcmp.eq.f32.partialorder %v1003, 8.507059e+37
    %v1005 = vand.u32 %v993, 2147483648
    %v1006 = vor.u32 1.1754944e-38, %v1005
    %v1007 = vsel %vm1004, %v1006, %v1002
    %v1008 = vmul.f32 1.0, %v1007
    %v1009 = vmul.f32 %v988, %v851
    %v1010 = vmul.f32 %v969, %v989
    %v1011 = vadd.f32 %v1009, %v1010
    %v1012 = vtanh.pop %v1011
    %v1013 = vmul.f32 %v1008, %v1012
    %s1014 = scalar_lea.vmem [#allocation6], 6
    %1015 = vst.msk [vmem:[%s1014] sm:$0x3] %vm125, %v1013
    %s1016 = scalar_lea.vmem [#allocation2], 8
    %v1017 = vld [vmem:[%s1016] sm:$0x3]
    %v1019 = vsel %vm83, %v1013, 0
    %1021 = vmatpush.msra.mxu0 0.0
    %1022 = vmatpush.msra.mxu0 0.0
    %1023 = vmatpush.msra.mxu0 0.0
    %1024 = vmatpush.msra.mxu0 0.0
    %1025 = vmatpush.msra.mxu0 0.0
    %1026 = vmatpush.msra.mxu0 0.0
    %1027 = vmatpush.msra.mxu0 0.0
    %1028 = vmatpush.msra.mxu0 0.0
    %1029 = vmatpush.msra.mxu0 0.0
    %1030 = vmatpush.msra.mxu0 0.0
    %1031 = vmatpush.msra.mxu0 0.0
    %1032 = vmatpush.msra.mxu0 0.0
    %1033 = vmatpush.msra.mxu0 %v365
    %1034 = vmatpush.msra.mxu0 %v364
    %1035 = vmatpush.msra.mxu0 %v363
    %1036 = vmatpush.msra.mxu0 %v362
    %1037 = vmatmul.f32.gmra.mxu0 %v1019
    %v1038 = vpop.f32.mrf.mxu0
    %v1039 = vadd.f32 0.0, %v1038
    %1040 = vdwg.mxu0
    %v1041 = vadd.f32 %v1017, %v1039
    %s1042 = scalar_lea.vmem [#allocation3], 8
    %v1043 = vld [vmem:[%s1042] sm:$0x3]
    %1044 = vmatpush.msra.mxu0 0.0
    %1045 = vmatpush.msra.mxu0 0.0
    %1046 = vmatpush.msra.mxu0 0.0
    %1047 = vmatpush.msra.mxu0 0.0
    %1048 = vmatpush.msra.mxu0 0.0
    %1049 = vmatpush.msra.mxu0 0.0
    %1050 = vmatpush.msra.mxu0 0.0
    %1051 = vmatpush.msra.mxu0 0.0
    %1052 = vmatpush.msra.mxu0 0.0
    %1053 = vmatpush.msra.mxu0 0.0
    %1054 = vmatpush.msra.mxu0 0.0
    %1055 = vmatpush.msra.mxu0 0.0
    %1056 = vmatpush.msra.mxu0 %v370
    %1057 = vmatpush.msra.mxu0 %v369
    %1058 = vmatpush.msra.mxu0 %v368
    %1059 = vmatpush.msra.mxu0 %v367
    %1060 = vmatmul.f32.gmra.mxu0 %v1019
    %v1061 = vpop.f32.mrf.mxu0
    %v1062 = vadd.f32 0.0, %v1061
    %1063 = vdwg.mxu0
    %v1064 = vadd.f32 %v1043, %v1062
    %s1065 = scalar_lea.vmem [#allocation4], 8
    %v1066 = vld [vmem:[%s1065] sm:$0x3]
    %1067 = vmatpush.msra.mxu0 0.0
    %1068 = vmatpush.msra.mxu0 0.0
    %1069 = vmatpush.msra.mxu0 0.0
    %1070 = vmatpush.msra.mxu0 0.0
    %1071 = vmatpush.msra.mxu0 0.0
    %1072 = vmatpush.msra.mxu0 0.0
    %1073 = vmatpush.msra.mxu0 0.0
    %1074 = vmatpush.msra.mxu0 0.0
    %1075 = vmatpush.msra.mxu0 0.0
    %1076 = vmatpush.msra.mxu0 0.0
    %1077 = vmatpush.msra.mxu0 0.0
    %1078 = vmatpush.msra.mxu0 0.0
    %1079 = vmatpush.msra.mxu0 %v375
    %1080 = vmatpush.msra.mxu0 %v374
    %1081 = vmatpush.msra.mxu0 %v373
    %1082 = vmatpush.msra.mxu0 %v372
    %1083 = vmatmul.f32.gmra.mxu0 %v1019
    %v1084 = vpop.f32.mrf.mxu0
    %v1085 = vadd.f32 0.0, %v1084
    %1086 = vdwg.mxu0
    %v1087 = vadd.f32 %v1066, %v1085
    %s1088 = scalar_lea.vmem [#allocation5], 8
    %v1089 = vld [vmem:[%s1088] sm:$0x3]
    %1090 = vmatpush.msra.mxu0 0.0
    %1091 = vmatpush.msra.mxu0 0.0
    %1092 = vmatpush.msra.mxu0 0.0
    %1093 = vmatpush.msra.mxu0 0.0
    %1094 = vmatpush.msra.mxu0 0.0
    %1095 = vmatpush.msra.mxu0 0.0
    %1096 = vmatpush.msra.mxu0 0.0
    %1097 = vmatpush.msra.mxu0 0.0
    %1098 = vmatpush.msra.mxu0 0.0
    %1099 = vmatpush.msra.mxu0 0.0
    %1100 = vmatpush.msra.mxu0 0.0
    %1101 = vmatpush.msra.mxu0 0.0
    %1102 = vmatpush.msra.mxu0 %v380
    %1103 = vmatpush.msra.mxu0 %v379
    %1104 = vmatpush.msra.mxu0 %v378
    %1105 = vmatpush.msra.mxu0 %v377
    %1106 = vmatmul.f32.gmra.mxu0 %v1019
    %v1107 = vpop.f32.mrf.mxu0
    %v1108 = vadd.f32 0.0, %v1107
    %1109 = vdwg.mxu0
    %v1110 = vadd.f32 %v1089, %v1108
    %v1111 = vxor.u32 %v1041, 2147483648
    %v1112 = vmul.f32 %v1111, 1.442695
    %v1113 = vpow.pop %v1112
    %v1114 = vadd.f32 %v1113, 1.0
    %v1115 = vrcp.pop %v1114
    %v1116 = vmul.f32 %v1114, %v1115
    %v1117 = vsub.f32 1.0, %v1116
    %v1118 = vmul.f32 %v1115, %v1117
    %v1119 = vadd.f32 %v1115, %v1118
    %vm1120 = vweird.f32 %v1114
    %vm1121 = vweird.f32 %v1115
    %vm1122 = vmor %vm1120, %vm1121
    %v1123 = vsel %vm1122, %v1115, %v1119
    %v1124 = vand.u32 2147483647, %v1114
    %vm1125 = vcmp.eq.f32.partialorder %v1124, 8.507059e+37
    %v1126 = vand.u32 %v1114, 2147483648
    %v1127 = vor.u32 1.1754944e-38, %v1126
    %v1128 = vsel %vm1125, %v1127, %v1123
    %v1129 = vmul.f32 1.0, %v1128
    %v1130 = vxor.u32 %v1064, 2147483648
    %v1131 = vmul.f32 %v1130, 1.442695
    %v1132 = vpow.pop %v1131
    %v1133 = vadd.f32 %v1132, 1.0
    %v1134 = vrcp.pop %v1133
    %v1135 = vmul.f32 %v1133, %v1134
    %v1136 = vsub.f32 1.0, %v1135
    %v1137 = vmul.f32 %v1134, %v1136
    %v1138 = vadd.f32 %v1134, %v1137
    %vm1139 = vweird.f32 %v1133
    %vm1140 = vweird.f32 %v1134
    %vm1141 = vmor %vm1139, %vm1140
    %v1142 = vsel %vm1141, %v1134, %v1138
    %v1143 = vand.u32 2147483647, %v1133
    %vm1144 = vcmp.eq.f32.partialorder %v1143, 8.507059e+37
    %v1145 = vand.u32 %v1133, 2147483648
    %v1146 = vor.u32 1.1754944e-38, %v1145
    %v1147 = vsel %vm1144, %v1146, %v1142
    %v1148 = vmul.f32 1.0, %v1147
    %v1149 = vtanh.pop %v1087
    %v1150 = vxor.u32 %v1110, 2147483648
    %v1151 = vmul.f32 %v1150, 1.442695
    %v1152 = vpow.pop %v1151
    %v1153 = vadd.f32 %v1152, 1.0
    %v1154 = vrcp.pop %v1153
    %v1155 = vmul.f32 %v1153, %v1154
    %v1156 = vsub.f32 1.0, %v1155
    %v1157 = vmul.f32 %v1154, %v1156
    %v1158 = vadd.f32 %v1154, %v1157
    %vm1159 = vweird.f32 %v1153
    %vm1160 = vweird.f32 %v1154
    %vm1161 = vmor %vm1159, %vm1160
    %v1162 = vsel %vm1161, %v1154, %v1158
    %v1163 = vand.u32 2147483647, %v1153
    %vm1164 = vcmp.eq.f32.partialorder %v1163, 8.507059e+37
    %v1165 = vand.u32 %v1153, 2147483648
    %v1166 = vor.u32 1.1754944e-38, %v1165
    %v1167 = vsel %vm1164, %v1166, %v1162
    %v1168 = vmul.f32 1.0, %v1167
    %v1169 = vmul.f32 %v1148, %v1011
    %v1170 = vmul.f32 %v1129, %v1149
    %v1171 = vadd.f32 %v1169, %v1170
    %v1172 = vtanh.pop %v1171
    %v1173 = vmul.f32 %v1168, %v1172
    %s1174 = scalar_lea.vmem [#allocation6], 8
    %1175 = vst.msk [vmem:[%s1174] sm:$0x3] %vm125, %v1173
    %s1176 = scalar_lea.vmem [#allocation2], 10
    %v1177 = vld [vmem:[%s1176] sm:$0x3]
    %v1179 = vsel %vm83, %v1173, 0
    %1181 = vmatpush.msra.mxu0 0.0
    %1182 = vmatpush.msra.mxu0 0.0
    %1183 = vmatpush.msra.mxu0 0.0
    %1184 = vmatpush.msra.mxu0 0.0
    %1185 = vmatpush.msra.mxu0 0.0
    %1186 = vmatpush.msra.mxu0 0.0
    %1187 = vmatpush.msra.mxu0 0.0
    %1188 = vmatpush.msra.mxu0 0.0
    %1189 = vmatpush.msra.mxu0 0.0
    %1190 = vmatpush.msra.mxu0 0.0
    %1191 = vmatpush.msra.mxu0 0.0
    %1192 = vmatpush.msra.mxu0 0.0
    %1193 = vmatpush.msra.mxu0 %v365
    %1194 = vmatpush.msra.mxu0 %v364
    %1195 = vmatpush.msra.mxu0 %v363
    %1196 = vmatpush.msra.mxu0 %v362
    %1197 = vmatmul.f32.gmra.mxu0 %v1179
    %v1198 = vpop.f32.mrf.mxu0
    %v1199 = vadd.f32 0.0, %v1198
    %1200 = vdwg.mxu0
    %v1201 = vadd.f32 %v1177, %v1199
    %s1202 = scalar_lea.vmem [#allocation3], 10
    %v1203 = vld [vmem:[%s1202] sm:$0x3]
    %1204 = vmatpush.msra.mxu0 0.0
    %1205 = vmatpush.msra.mxu0 0.0
    %1206 = vmatpush.msra.mxu0 0.0
    %1207 = vmatpush.msra.mxu0 0.0
    %1208 = vmatpush.msra.mxu0 0.0
    %1209 = vmatpush.msra.mxu0 0.0
    %1210 = vmatpush.msra.mxu0 0.0
    %1211 = vmatpush.msra.mxu0 0.0
    %1212 = vmatpush.msra.mxu0 0.0
    %1213 = vmatpush.msra.mxu0 0.0
    %1214 = vmatpush.msra.mxu0 0.0
    %1215 = vmatpush.msra.mxu0 0.0
    %1216 = vmatpush.msra.mxu0 %v370
    %1217 = vmatpush.msra.mxu0 %v369
    %1218 = vmatpush.msra.mxu0 %v368
    %1219 = vmatpush.msra.mxu0 %v367
    %1220 = vmatmul.f32.gmra.mxu0 %v1179
    %v1221 = vpop.f32.mrf.mxu0
    %v1222 = vadd.f32 0.0, %v1221
    %1223 = vdwg.mxu0
    %v1224 = vadd.f32 %v1203, %v1222
    %s1225 = scalar_lea.vmem [#allocation4], 10
    %v1226 = vld [vmem:[%s1225] sm:$0x3]
    %1227 = vmatpush.msra.mxu0 0.0
    %1228 = vmatpush.msra.mxu0 0.0
    %1229 = vmatpush.msra.mxu0 0.0
    %1230 = vmatpush.msra.mxu0 0.0
    %1231 = vmatpush.msra.mxu0 0.0
    %1232 = vmatpush.msra.mxu0 0.0
    %1233 = vmatpush.msra.mxu0 0.0
    %1234 = vmatpush.msra.mxu0 0.0
    %1235 = vmatpush.msra.mxu0 0.0
    %1236 = vmatpush.msra.mxu0 0.0
    %1237 = vmatpush.msra.mxu0 0.0
    %1238 = vmatpush.msra.mxu0 0.0
    %1239 = vmatpush.msra.mxu0 %v375
    %1240 = vmatpush.msra.mxu0 %v374
    %1241 = vmatpush.msra.mxu0 %v373
    %1242 = vmatpush.msra.mxu0 %v372
    %1243 = vmatmul.f32.gmra.mxu0 %v1179
    %v1244 = vpop.f32.mrf.mxu0
    %v1245 = vadd.f32 0.0, %v1244
    %1246 = vdwg.mxu0
    %v1247 = vadd.f32 %v1226, %v1245
    %s1248 = scalar_lea.vmem [#allocation5], 10
    %v1249 = vld [vmem:[%s1248] sm:$0x3]
    %1250 = vmatpush.msra.mxu0 0.0
    %1251 = vmatpush.msra.mxu0 0.0
    %1252 = vmatpush.msra.mxu0 0.0
    %1253 = vmatpush.msra.mxu0 0.0
    %1254 = vmatpush.msra.mxu0 0.0
    %1255 = vmatpush.msra.mxu0 0.0
    %1256 = vmatpush.msra.mxu0 0.0
    %1257 = vmatpush.msra.mxu0 0.0
    %1258 = vmatpush.msra.mxu0 0.0
    %1259 = vmatpush.msra.mxu0 0.0
    %1260 = vmatpush.msra.mxu0 0.0
    %1261 = vmatpush.msra.mxu0 0.0
    %1262 = vmatpush.msra.mxu0 %v380
    %1263 = vmatpush.msra.mxu0 %v379
    %1264 = vmatpush.msra.mxu0 %v378
    %1265 = vmatpush.msra.mxu0 %v377
    %1266 = vmatmul.f32.gmra.mxu0 %v1179
    %v1267 = vpop.f32.mrf.mxu0
    %v1268 = vadd.f32 0.0, %v1267
    %1269 = vdwg.mxu0
    %v1270 = vadd.f32 %v1249, %v1268
    %v1271 = vxor.u32 %v1201, 2147483648
    %v1272 = vmul.f32 %v1271, 1.442695
    %v1273 = vpow.pop %v1272
    %v1274 = vadd.f32 %v1273, 1.0
    %v1275 = vrcp.pop %v1274
    %v1276 = vmul.f32 %v1274, %v1275
    %v1277 = vsub.f32 1.0, %v1276
    %v1278 = vmul.f32 %v1275, %v1277
    %v1279 = vadd.f32 %v1275, %v1278
    %vm1280 = vweird.f32 %v1274
    %vm1281 = vweird.f32 %v1275
    %vm1282 = vmor %vm1280, %vm1281
    %v1283 = vsel %vm1282, %v1275, %v1279
    %v1284 = vand.u32 2147483647, %v1274
    %vm1285 = vcmp.eq.f32.partialorder %v1284, 8.507059e+37
    %v1286 = vand.u32 %v1274, 2147483648
    %v1287 = vor.u32 1.1754944e-38, %v1286
    %v1288 = vsel %vm1285, %v1287, %v1283
    %v1289 = vmul.f32 1.0, %v1288
    %v1290 = vxor.u32 %v1224, 2147483648
    %v1291 = vmul.f32 %v1290, 1.442695
    %v1292 = vpow.pop %v1291
    %v1293 = vadd.f32 %v1292, 1.0
    %v1294 = vrcp.pop %v1293
    %v1295 = vmul.f32 %v1293, %v1294
    %v1296 = vsub.f32 1.0, %v1295
    %v1297 = vmul.f32 %v1294, %v1296
    %v1298 = vadd.f32 %v1294, %v1297
    %vm1299 = vweird.f32 %v1293
    %vm1300 = vweird.f32 %v1294
    %vm1301 = vmor %vm1299, %vm1300
    %v1302 = vsel %vm1301, %v1294, %v1298
    %v1303 = vand.u32 2147483647, %v1293
    %vm1304 = vcmp.eq.f32.partialorder %v1303, 8.507059e+37
    %v1305 = vand.u32 %v1293, 2147483648
    %v1306 = vor.u32 1.1754944e-38, %v1305
    %v1307 = vsel %vm1304, %v1306, %v1302
    %v1308 = vmul.f32 1.0, %v1307
    %v1309 = vtanh.pop %v1247
    %v1310 = vxor.u32 %v1270, 2147483648
    %v1311 = vmul.f32 %v1310, 1.442695
    %v1312 = vpow.pop %v1311
    %v1313 = vadd.f32 %v1312, 1.0
    %v1314 = vrcp.pop %v1313
    %v1315 = vmul.f32 %v1313, %v1314
    %v1316 = vsub.f32 1.0, %v1315
    %v1317 = vmul.f32 %v1314, %v1316
    %v1318 = vadd.f32 %v1314, %v1317
    %vm1319 = vweird.f32 %v1313
    %vm1320 = vweird.f32 %v1314
    %vm1321 = vmor %vm1319, %vm1320
    %v1322 = vsel %vm1321, %v1314, %v1318
    %v1323 = vand.u32 2147483647, %v1313
    %vm1324 = vcmp.eq.f32.partialorder %v1323, 8.507059e+37
    %v1325 = vand.u32 %v1313, 2147483648
    %v1326 = vor.u32 1.1754944e-38, %v1325
    %v1327 = vsel %vm1324, %v1326, %v1322
    %v1328 = vmul.f32 1.0, %v1327
    %v1329 = vmul.f32 %v1308, %v1171
    %v1330 = vmul.f32 %v1289, %v1309
    %v1331 = vadd.f32 %v1329, %v1330
    %v1332 = vtanh.pop %v1331
    %v1333 = vmul.f32 %v1328, %v1332
    %s1334 = scalar_lea.vmem [#allocation6], 10
    %1335 = vst.msk [vmem:[%s1334] sm:$0x3] %vm125, %v1333
    %s1336 = scalar_lea.vmem [#allocation2], 12
    %v1337 = vld [vmem:[%s1336] sm:$0x3]
    %v1339 = vsel %vm83, %v1333, 0
    %1341 = vmatpush.msra.mxu0 0.0
    %1342 = vmatpush.msra.mxu0 0.0
    %1343 = vmatpush.msra.mxu0 0.0
    %1344 = vmatpush.msra.mxu0 0.0
    %1345 = vmatpush.msra.mxu0 0.0
    %1346 = vmatpush.msra.mxu0 0.0
    %1347 = vmatpush.msra.mxu0 0.0
    %1348 = vmatpush.msra.mxu0 0.0
    %1349 = vmatpush.msra.mxu0 0.0
    %1350 = vmatpush.msra.mxu0 0.0
    %1351 = vmatpush.msra.mxu0 0.0
    %1352 = vmatpush.msra.mxu0 0.0
    %1353 = vmatpush.msra.mxu0 %v365
    %1354 = vmatpush.msra.mxu0 %v364
    %1355 = vmatpush.msra.mxu0 %v363
    %1356 = vmatpush.msra.mxu0 %v362
    %1357 = vmatmul.f32.gmra.mxu0 %v1339
    %v1358 = vpop.f32.mrf.mxu0
    %v1359 = vadd.f32 0.0, %v1358
    %1360 = vdwg.mxu0
    %v1361 = vadd.f32 %v1337, %v1359
    %s1362 = scalar_lea.vmem [#allocation3], 12
    %v1363 = vld [vmem:[%s1362] sm:$0x3]
    %1364 = vmatpush.msra.mxu0 0.0
    %1365 = vmatpush.msra.mxu0 0.0
    %1366 = vmatpush.msra.mxu0 0.0
    %1367 = vmatpush.msra.mxu0 0.0
    %1368 = vmatpush.msra.mxu0 0.0
    %1369 = vmatpush.msra.mxu0 0.0
    %1370 = vmatpush.msra.mxu0 0.0
    %1371 = vmatpush.msra.mxu0 0.0
    %1372 = vmatpush.msra.mxu0 0.0
    %1373 = vmatpush.msra.mxu0 0.0
    %1374 = vmatpush.msra.mxu0 0.0
    %1375 = vmatpush.msra.mxu0 0.0
    %1376 = vmatpush.msra.mxu0 %v370
    %1377 = vmatpush.msra.mxu0 %v369
    %1378 = vmatpush.msra.mxu0 %v368
    %1379 = vmatpush.msra.mxu0 %v367
    %1380 = vmatmul.f32.gmra.mxu0 %v1339
    %v1381 = vpop.f32.mrf.mxu0
    %v1382 = vadd.f32 0.0, %v1381
    %1383 = vdwg.mxu0
    %v1384 = vadd.f32 %v1363, %v1382
    %s1385 = scalar_lea.vmem [#allocation4], 12
    %v1386 = vld [vmem:[%s1385] sm:$0x3]
    %1387 = vmatpush.msra.mxu0 0.0
    %1388 = vmatpush.msra.mxu0 0.0
    %1389 = vmatpush.msra.mxu0 0.0
    %1390 = vmatpush.msra.mxu0 0.0
    %1391 = vmatpush.msra.mxu0 0.0
    %1392 = vmatpush.msra.mxu0 0.0
    %1393 = vmatpush.msra.mxu0 0.0
    %1394 = vmatpush.msra.mxu0 0.0
    %1395 = vmatpush.msra.mxu0 0.0
    %1396 = vmatpush.msra.mxu0 0.0
    %1397 = vmatpush.msra.mxu0 0.0
    %1398 = vmatpush.msra.mxu0 0.0
    %1399 = vmatpush.msra.mxu0 %v375
    %1400 = vmatpush.msra.mxu0 %v374
    %1401 = vmatpush.msra.mxu0 %v373
    %1402 = vmatpush.msra.mxu0 %v372
    %1403 = vmatmul.f32.gmra.mxu0 %v1339
    %v1404 = vpop.f32.mrf.mxu0
    %v1405 = vadd.f32 0.0, %v1404
    %1406 = vdwg.mxu0
    %v1407 = vadd.f32 %v1386, %v1405
    %s1408 = scalar_lea.vmem [#allocation5], 12
    %v1409 = vld [vmem:[%s1408] sm:$0x3]
    %1410 = vmatpush.msra.mxu0 0.0
    %1411 = vmatpush.msra.mxu0 0.0
    %1412 = vmatpush.msra.mxu0 0.0
    %1413 = vmatpush.msra.mxu0 0.0
    %1414 = vmatpush.msra.mxu0 0.0
    %1415 = vmatpush.msra.mxu0 0.0
    %1416 = vmatpush.msra.mxu0 0.0
    %1417 = vmatpush.msra.mxu0 0.0
    %1418 = vmatpush.msra.mxu0 0.0
    %1419 = vmatpush.msra.mxu0 0.0
    %1420 = vmatpush.msra.mxu0 0.0
    %1421 = vmatpush.msra.mxu0 0.0
    %1422 = vmatpush.msra.mxu0 %v380
    %1423 = vmatpush.msra.mxu0 %v379
    %1424 = vmatpush.msra.mxu0 %v378
    %1425 = vmatpush.msra.mxu0 %v377
    %1426 = vmatmul.f32.gmra.mxu0 %v1339
    %v1427 = vpop.f32.mrf.mxu0
    %v1428 = vadd.f32 0.0, %v1427
    %1429 = vdwg.mxu0
    %v1430 = vadd.f32 %v1409, %v1428
    %v1431 = vxor.u32 %v1361, 2147483648
    %v1432 = vmul.f32 %v1431, 1.442695
    %v1433 = vpow.pop %v1432
    %v1434 = vadd.f32 %v1433, 1.0
    %v1435 = vrcp.pop %v1434
    %v1436 = vmul.f32 %v1434, %v1435
    %v1437 = vsub.f32 1.0, %v1436
    %v1438 = vmul.f32 %v1435, %v1437
    %v1439 = vadd.f32 %v1435, %v1438
    %vm1440 = vweird.f32 %v1434
    %vm1441 = vweird.f32 %v1435
    %vm1442 = vmor %vm1440, %vm1441
    %v1443 = vsel %vm1442, %v1435, %v1439
    %v1444 = vand.u32 2147483647, %v1434
    %vm1445 = vcmp.eq.f32.partialorder %v1444, 8.507059e+37
    %v1446 = vand.u32 %v1434, 2147483648
    %v1447 = vor.u32 1.1754944e-38, %v1446
    %v1448 = vsel %vm1445, %v1447, %v1443
    %v1449 = vmul.f32 1.0, %v1448
    %v1450 = vxor.u32 %v1384, 2147483648
    %v1451 = vmul.f32 %v1450, 1.442695
    %v1452 = vpow.pop %v1451
    %v1453 = vadd.f32 %v1452, 1.0
    %v1454 = vrcp.pop %v1453
    %v1455 = vmul.f32 %v1453, %v1454
    %v1456 = vsub.f32 1.0, %v1455
    %v1457 = vmul.f32 %v1454, %v1456
    %v1458 = vadd.f32 %v1454, %v1457
    %vm1459 = vweird.f32 %v1453
    %vm1460 = vweird.f32 %v1454
    %vm1461 = vmor %vm1459, %vm1460
    %v1462 = vsel %vm1461, %v1454, %v1458
    %v1463 = vand.u32 2147483647, %v1453
    %vm1464 = vcmp.eq.f32.partialorder %v1463, 8.507059e+37
    %v1465 = vand.u32 %v1453, 2147483648
    %v1466 = vor.u32 1.1754944e-38, %v1465
    %v1467 = vsel %vm1464, %v1466, %v1462
    %v1468 = vmul.f32 1.0, %v1467
    %v1469 = vtanh.pop %v1407
    %v1470 = vxor.u32 %v1430, 2147483648
    %v1471 = vmul.f32 %v1470, 1.442695
    %v1472 = vpow.pop %v1471
    %v1473 = vadd.f32 %v1472, 1.0
    %v1474 = vrcp.pop %v1473
    %v1475 = vmul.f32 %v1473, %v1474
    %v1476 = vsub.f32 1.0, %v1475
    %v1477 = vmul.f32 %v1474, %v1476
    %v1478 = vadd.f32 %v1474, %v1477
    %vm1479 = vweird.f32 %v1473
    %vm1480 = vweird.f32 %v1474
    %vm1481 = vmor %vm1479, %vm1480
    %v1482 = vsel %vm1481, %v1474, %v1478
    %v1483 = vand.u32 2147483647, %v1473
    %vm1484 = vcmp.eq.f32.partialorder %v1483, 8.507059e+37
    %v1485 = vand.u32 %v1473, 2147483648
    %v1486 = vor.u32 1.1754944e-38, %v1485
    %v1487 = vsel %vm1484, %v1486, %v1482
    %v1488 = vmul.f32 1.0, %v1487
    %v1489 = vmul.f32 %v1468, %v1331
    %v1490 = vmul.f32 %v1449, %v1469
    %v1491 = vadd.f32 %v1489, %v1490
    %v1492 = vtanh.pop %v1491
    %v1493 = vmul.f32 %v1488, %v1492
    %s1494 = scalar_lea.vmem [#allocation6], 12
    %1495 = vst.msk [vmem:[%s1494] sm:$0x3] %vm125, %v1493
    %s1496 = scalar_lea.vmem [#allocation2], 14
    %v1497 = vld [vmem:[%s1496] sm:$0x3]
    %v1499 = vsel %vm83, %v1493, 0
    %1501 = vmatpush.msra.mxu0 0.0
    %1502 = vmatpush.msra.mxu0 0.0
    %1503 = vmatpush.msra.mxu0 0.0
    %1504 = vmatpush.msra.mxu0 0.0
    %1505 = vmatpush.msra.mxu0 0.0
    %1506 = vmatpush.msra.mxu0 0.0
    %1507 = vmatpush.msra.mxu0 0.0
    %1508 = vmatpush.msra.mxu0 0.0
    %1509 = vmatpush.msra.mxu0 0.0
    %1510 = vmatpush.msra.mxu0 0.0
    %1511 = vmatpush.msra.mxu0 0.0
    %1512 = vmatpush.msra.mxu0 0.0
    %1513 = vmatpush.msra.mxu0 %v365
    %1514 = vmatpush.msra.mxu0 %v364
    %1515 = vmatpush.msra.mxu0 %v363
    %1516 = vmatpush.msra.mxu0 %v362
    %1517 = vmatmul.f32.gmra.mxu0 %v1499
    %v1518 = vpop.f32.mrf.mxu0
    %v1519 = vadd.f32 0.0, %v1518
    %1520 = vdwg.mxu0
    %v1521 = vadd.f32 %v1497, %v1519
    %s1522 = scalar_lea.vmem [#allocation3], 14
    %v1523 = vld [vmem:[%s1522] sm:$0x3]
    %1524 = vmatpush.msra.mxu0 0.0
    %1525 = vmatpush.msra.mxu0 0.0
    %1526 = vmatpush.msra.mxu0 0.0
    %1527 = vmatpush.msra.mxu0 0.0
    %1528 = vmatpush.msra.mxu0 0.0
    %1529 = vmatpush.msra.mxu0 0.0
    %1530 = vmatpush.msra.mxu0 0.0
    %1531 = vmatpush.msra.mxu0 0.0
    %1532 = vmatpush.msra.mxu0 0.0
    %1533 = vmatpush.msra.mxu0 0.0
    %1534 = vmatpush.msra.mxu0 0.0
    %1535 = vmatpush.msra.mxu0 0.0
    %1536 = vmatpush.msra.mxu0 %v370
    %1537 = vmatpush.msra.mxu0 %v369
    %1538 = vmatpush.msra.mxu0 %v368
    %1539 = vmatpush.msra.mxu0 %v367
    %1540 = vmatmul.f32.gmra.mxu0 %v1499
    %v1541 = vpop.f32.mrf.mxu0
    %v1542 = vadd.f32 0.0, %v1541
    %1543 = vdwg.mxu0
    %v1544 = vadd.f32 %v1523, %v1542
    %s1545 = scalar_lea.vmem [#allocation4], 14
    %v1546 = vld [vmem:[%s1545] sm:$0x3]
    %1547 = vmatpush.msra.mxu0 0.0
    %1548 = vmatpush.msra.mxu0 0.0
    %1549 = vmatpush.msra.mxu0 0.0
    %1550 = vmatpush.msra.mxu0 0.0
    %1551 = vmatpush.msra.mxu0 0.0
    %1552 = vmatpush.msra.mxu0 0.0
    %1553 = vmatpush.msra.mxu0 0.0
    %1554 = vmatpush.msra.mxu0 0.0
    %1555 = vmatpush.msra.mxu0 0.0
    %1556 = vmatpush.msra.mxu0 0.0
    %1557 = vmatpush.msra.mxu0 0.0
    %1558 = vmatpush.msra.mxu0 0.0
    %1559 = vmatpush.msra.mxu0 %v375
    %1560 = vmatpush.msra.mxu0 %v374
    %1561 = vmatpush.msra.mxu0 %v373
    %1562 = vmatpush.msra.mxu0 %v372
    %1563 = vmatmul.f32.gmra.mxu0 %v1499
    %v1564 = vpop.f32.mrf.mxu0
    %v1565 = vadd.f32 0.0, %v1564
    %1566 = vdwg.mxu0
    %v1567 = vadd.f32 %v1546, %v1565
    %s1568 = scalar_lea.vmem [#allocation5], 14
    %v1569 = vld [vmem:[%s1568] sm:$0x3]
    %1570 = vmatpush.msra.mxu0 0.0
    %1571 = vmatpush.msra.mxu0 0.0
    %1572 = vmatpush.msra.mxu0 0.0
    %1573 = vmatpush.msra.mxu0 0.0
    %1574 = vmatpush.msra.mxu0 0.0
    %1575 = vmatpush.msra.mxu0 0.0
    %1576 = vmatpush.msra.mxu0 0.0
    %1577 = vmatpush.msra.mxu0 0.0
    %1578 = vmatpush.msra.mxu0 0.0
    %1579 = vmatpush.msra.mxu0 0.0
    %1580 = vmatpush.msra.mxu0 0.0
    %1581 = vmatpush.msra.mxu0 0.0
    %1582 = vmatpush.msra.mxu0 %v380
    %1583 = vmatpush.msra.mxu0 %v379
    %1584 = vmatpush.msra.mxu0 %v378
    %1585 = vmatpush.msra.mxu0 %v377
    %1586 = vmatmul.f32.gmra.mxu0 %v1499
    %v1587 = vpop.f32.mrf.mxu0
    %v1588 = vadd.f32 0.0, %v1587
    %1589 = vdwg.mxu0
    %v1590 = vadd.f32 %v1569, %v1588
    %v1591 = vxor.u32 %v1521, 2147483648
    %v1592 = vmul.f32 %v1591, 1.442695
    %v1593 = vpow.pop %v1592
    %v1594 = vadd.f32 %v1593, 1.0
    %v1595 = vrcp.pop %v1594
    %v1596 = vmul.f32 %v1594, %v1595
    %v1597 = vsub.f32 1.0, %v1596
    %v1598 = vmul.f32 %v1595, %v1597
    %v1599 = vadd.f32 %v1595, %v1598
    %vm1600 = vweird.f32 %v1594
    %vm1601 = vweird.f32 %v1595
    %vm1602 = vmor %vm1600, %vm1601
    %v1603 = vsel %vm1602, %v1595, %v1599
    %v1604 = vand.u32 2147483647, %v1594
    %vm1605 = vcmp.eq.f32.partialorder %v1604, 8.507059e+37
    %v1606 = vand.u32 %v1594, 2147483648
    %v1607 = vor.u32 1.1754944e-38, %v1606
    %v1608 = vsel %vm1605, %v1607, %v1603
    %v1609 = vmul.f32 1.0, %v1608
    %v1610 = vxor.u32 %v1544, 2147483648
    %v1611 = vmul.f32 %v1610, 1.442695
    %v1612 = vpow.pop %v1611
    %v1613 = vadd.f32 %v1612, 1.0
    %v1614 = vrcp.pop %v1613
    %v1615 = vmul.f32 %v1613, %v1614
    %v1616 = vsub.f32 1.0, %v1615
    %v1617 = vmul.f32 %v1614, %v1616
    %v1618 = vadd.f32 %v1614, %v1617
    %vm1619 = vweird.f32 %v1613
    %vm1620 = vweird.f32 %v1614
    %vm1621 = vmor %vm1619, %vm1620
    %v1622 = vsel %vm1621, %v1614, %v1618
    %v1623 = vand.u32 2147483647, %v1613
    %vm1624 = vcmp.eq.f32.partialorder %v1623, 8.507059e+37
    %v1625 = vand.u32 %v1613, 2147483648
    %v1626 = vor.u32 1.1754944e-38, %v1625
    %v1627 = vsel %vm1624, %v1626, %v1622
    %v1628 = vmul.f32 1.0, %v1627
    %v1629 = vtanh.pop %v1567
    %v1630 = vxor.u32 %v1590, 2147483648
    %v1631 = vmul.f32 %v1630, 1.442695
    %v1632 = vpow.pop %v1631
    %v1633 = vadd.f32 %v1632, 1.0
    %v1634 = vrcp.pop %v1633
    %v1635 = vmul.f32 %v1633, %v1634
    %v1636 = vsub.f32 1.0, %v1635
    %v1637 = vmul.f32 %v1634, %v1636
    %v1638 = vadd.f32 %v1634, %v1637
    %vm1639 = vweird.f32 %v1633
    %vm1640 = vweird.f32 %v1634
    %vm1641 = vmor %vm1639, %vm1640
    %v1642 = vsel %vm1641, %v1634, %v1638
    %v1643 = vand.u32 2147483647, %v1633
    %vm1644 = vcmp.eq.f32.partialorder %v1643, 8.507059e+37
    %v1645 = vand.u32 %v1633, 2147483648
    %v1646 = vor.u32 1.1754944e-38, %v1645
    %v1647 = vsel %vm1644, %v1646, %v1642
    %v1648 = vmul.f32 1.0, %v1647
    %v1649 = vmul.f32 %v1628, %v1491
    %v1650 = vmul.f32 %v1609, %v1629
    %v1651 = vadd.f32 %v1649, %v1650
    %v1652 = vtanh.pop %v1651
    %v1653 = vmul.f32 %v1648, %v1652
    %s1654 = scalar_lea.vmem [#allocation6], 14
    %1655 = vst.msk [vmem:[%s1654] sm:$0x3] %vm125, %v1653
    %v1656 = vld [vmem:[#allocation6] sm:$0x3]
    %v1657 = vld [vmem:[#allocation6 + $0x2] sm:$0x3]
    %v1658 = vld [vmem:[#allocation6 + $0x4] sm:$0x3]
    %v1659 = vld [vmem:[#allocation6 + $0x6] sm:$0x3]
    %v1660 = vld [vmem:[#allocation6 + $0x8] sm:$0x3]
    %v1661 = vld [vmem:[#allocation6 + $0xa] sm:$0x3]
    %v1662 = vld [vmem:[#allocation6 + $0xc] sm:$0x3]
    %v1663 = vld [vmem:[#allocation6 + $0xe] sm:$0x3]
    %v1664 = vld [vmem:[%s5] sm:$0xff]
    %v1665 = vld [vmem:[%s5 + $0x8] sm:$0xff]
    %v1666 = vld [vmem:[%s5 + $0x10] sm:$0xff]
    %v1667 = vld [vmem:[%s5 + $0x18] sm:$0xff]
    %v1668 = vld [vmem:[%s7] sm:$0x1]
    %v1670 = vperm.slane %v1668, 0
    %1680 = vst [vmem:[#allocation1] ss:$4 sm:$0xff] %v1656
    %s1681 = scalar_lea.vmem [#allocation1], 1
    %1682 = vst [vmem:[%s1681] ss:$4 sm:$0xff] %v1657
    %s1683 = scalar_lea.vmem [#allocation1], 2
    %1684 = vst [vmem:[%s1683] ss:$4 sm:$0xff] %v1658
    %s1685 = scalar_lea.vmem [#allocation1], 3
    %1686 = vst [vmem:[%s1685] ss:$4 sm:$0xff] %v1659
    %s1687 = scalar_lea.vmem [#allocation1], 32
    %1688 = vst [vmem:[%s1687] ss:$4 sm:$0xff] %v1660
    %s1689 = scalar_lea.vmem [#allocation1], 33
    %1690 = vst [vmem:[%s1689] ss:$4 sm:$0xff] %v1661
    %s1691 = scalar_lea.vmem [#allocation1], 34
    %1692 = vst [vmem:[%s1691] ss:$4 sm:$0xff] %v1662
    %s1693 = scalar_lea.vmem [#allocation1], 35
    %1694 = vst [vmem:[%s1693] ss:$4 sm:$0xff] %v1663
    %v1695 = vld.sshfl [vmem:[#allocation1] sm:$0xff pattern:$0x73625140]
    %v1696 = vld.sshfl [vmem:[#allocation1 + $0x20] sm:$0xff pattern:$0x73625140]
    %v1697 = vsel %vm83, %v1695, 0
    %v1699 = vsel %vm83, %v1696, 0
    %1701 = vmatpush.msra.mxu0 0.0
    %1702 = vmatpush.msra.mxu0 0.0
    %1703 = vmatpush.msra.mxu0 0.0
    %1704 = vmatpush.msra.mxu0 0.0
    %1705 = vmatpush.msra.mxu0 0.0
    %1706 = vmatpush.msra.mxu0 0.0
    %1707 = vmatpush.msra.mxu0 0.0
    %1708 = vmatpush.msra.mxu0 0.0
    %1709 = vmatpush.msra.mxu0 0.0
    %1710 = vmatpush.msra.mxu0 0.0
    %1711 = vmatpush.msra.mxu0 0.0
    %1712 = vmatpush.msra.mxu0 0.0
    %1713 = vmatpush.msra.mxu0 %v1667
    %1714 = vmatpush.msra.mxu0 %v1666
    %1715 = vmatpush.msra.mxu0 %v1665
    %1716 = vmatpush.msra.mxu0 %v1664
    %1717 = vmatmul.f32.gmra.mxu0 %v1697
    %v1718 = vpop.f32.mrf.mxu0
    %v1719 = vadd.f32 %v1670, %v1718
    %1720 = vmatmul.f32.gmra.mxu0 %v1699
    %v1721 = vpop.f32.mrf.mxu0
    %v1722 = vadd.f32 %v1670, %v1721
    %1723 = vdwg.mxu0
    %v1726 = vrot.slane %v1719, 2
    %v1727 = vrot.slane %v1719, 4
    %v1728 = vrot.slane %v1719, 6
    %v1729 = vrot.slane %v1722, 2
    %v1730 = vrot.slane %v1722, 4
    %v1731 = vrot.slane %v1722, 6
    %1738 = vst.msk [vmem:[#allocation2] sm:$0x3] %vm125, %v1719
    %1739 = vst.msk [vmem:[#allocation2 + $0x2] sm:$0x3] %vm125, %v1726
    %1740 = vst.msk [vmem:[#allocation2 + $0x4] sm:$0x3] %vm125, %v1727
    %1741 = vst.msk [vmem:[#allocation2 + $0x6] sm:$0x3] %vm125, %v1728
    %1742 = vst.msk [vmem:[#allocation2 + $0x8] sm:$0x3] %vm125, %v1722
    %1743 = vst.msk [vmem:[#allocation2 + $0xa] sm:$0x3] %vm125, %v1729
    %1744 = vst.msk [vmem:[#allocation2 + $0xc] sm:$0x3] %vm125, %v1730
    %1745 = vst.msk [vmem:[#allocation2 + $0xe] sm:$0x3] %vm125, %v1731
    %s1746 = scalar_lea.vmem %s5, 32
    %v1747 = vld [vmem:[%s1746] sm:$0xff]
    %v1748 = vld [vmem:[%s1746 + $0x8] sm:$0xff]
    %v1749 = vld [vmem:[%s1746 + $0x10] sm:$0xff]
    %v1750 = vld [vmem:[%s1746 + $0x18] sm:$0xff]
    %s1751 = scalar_lea.vmem %s7, 1
    %v1752 = vld [vmem:[%s1751] sm:$0x1]
    %v1754 = vperm.slane %v1752, 0
    %1756 = vst [vmem:[#allocation1] ss:$4 sm:$0xff] %v1656
    %s1757 = scalar_lea.vmem [#allocation1], 1
    %1758 = vst [vmem:[%s1757] ss:$4 sm:$0xff] %v1657
    %s1759 = scalar_lea.vmem [#allocation1], 2
    %1760 = vst [vmem:[%s1759] ss:$4 sm:$0xff] %v1658
    %s1761 = scalar_lea.vmem [#allocation1], 3
    %1762 = vst [vmem:[%s1761] ss:$4 sm:$0xff] %v1659
    %s1763 = scalar_lea.vmem [#allocation1], 32
    %1764 = vst [vmem:[%s1763] ss:$4 sm:$0xff] %v1660
    %s1765 = scalar_lea.vmem [#allocation1], 33
    %1766 = vst [vmem:[%s1765] ss:$4 sm:$0xff] %v1661
    %s1767 = scalar_lea.vmem [#allocation1], 34
    %1768 = vst [vmem:[%s1767] ss:$4 sm:$0xff] %v1662
    %s1769 = scalar_lea.vmem [#allocation1], 35
    %1770 = vst [vmem:[%s1769] ss:$4 sm:$0xff] %v1663
    %v1771 = vld.sshfl [vmem:[#allocation1] sm:$0xff pattern:$0x73625140]
    %v1772 = vld.sshfl [vmem:[#allocation1 + $0x20] sm:$0xff pattern:$0x73625140]
    %v1773 = vsel %vm83, %v1771, 0
    %v1775 = vsel %vm83, %v1772, 0
    %1777 = vmatpush.msra.mxu0 0.0
    %1778 = vmatpush.msra.mxu0 0.0
    %1779 = vmatpush.msra.mxu0 0.0
    %1780 = vmatpush.msra.mxu0 0.0
    %1781 = vmatpush.msra.mxu0 0.0
    %1782 = vmatpush.msra.mxu0 0.0
    %1783 = vmatpush.msra.mxu0 0.0
    %1784 = vmatpush.msra.mxu0 0.0
    %1785 = vmatpush.msra.mxu0 0.0
    %1786 = vmatpush.msra.mxu0 0.0
    %1787 = vmatpush.msra.mxu0 0.0
    %1788 = vmatpush.msra.mxu0 0.0
    %1789 = vmatpush.msra.mxu0 %v1750
    %1790 = vmatpush.msra.mxu0 %v1749
    %1791 = vmatpush.msra.mxu0 %v1748
    %1792 = vmatpush.msra.mxu0 %v1747
    %1793 = vmatmul.f32.gmra.mxu0 %v1773
    %v1794 = vpop.f32.mrf.mxu0
    %v1795 = vadd.f32 %v1754, %v1794
    %1796 = vmatmul.f32.gmra.mxu0 %v1775
    %v1797 = vpop.f32.mrf.mxu0
    %v1798 = vadd.f32 %v1754, %v1797
    %1799 = vdwg.mxu0
    %v1802 = vrot.slane %v1795, 2
    %v1803 = vrot.slane %v1795, 4
    %v1804 = vrot.slane %v1795, 6
    %v1805 = vrot.slane %v1798, 2
    %v1806 = vrot.slane %v1798, 4
    %v1807 = vrot.slane %v1798, 6
    %1814 = vst.msk [vmem:[#allocation3] sm:$0x3] %vm125, %v1795
    %1815 = vst.msk [vmem:[#allocation3 + $0x2] sm:$0x3] %vm125, %v1802
    %1816 = vst.msk [vmem:[#allocation3 + $0x4] sm:$0x3] %vm125, %v1803
    %1817 = vst.msk [vmem:[#allocation3 + $0x6] sm:$0x3] %vm125, %v1804
    %1818 = vst.msk [vmem:[#allocation3 + $0x8] sm:$0x3] %vm125, %v1798
    %1819 = vst.msk [vmem:[#allocation3 + $0xa] sm:$0x3] %vm125, %v1805
    %1820 = vst.msk [vmem:[#allocation3 + $0xc] sm:$0x3] %vm125, %v1806
    %1821 = vst.msk [vmem:[#allocation3 + $0xe] sm:$0x3] %vm125, %v1807
    %s1822 = scalar_lea.vmem %s5, 64
    %v1823 = vld [vmem:[%s1822] sm:$0xff]
    %v1824 = vld [vmem:[%s1822 + $0x8] sm:$0xff]
    %v1825 = vld [vmem:[%s1822 + $0x10] sm:$0xff]
    %v1826 = vld [vmem:[%s1822 + $0x18] sm:$0xff]
    %s1827 = scalar_lea.vmem %s7, 2
    %v1828 = vld [vmem:[%s1827] sm:$0x1]
    %v1830 = vperm.slane %v1828, 0
    %1832 = vst [vmem:[#allocation1] ss:$4 sm:$0xff] %v1656
    %s1833 = scalar_lea.vmem [#allocation1], 1
    %1834 = vst [vmem:[%s1833] ss:$4 sm:$0xff] %v1657
    %s1835 = scalar_lea.vmem [#allocation1], 2
    %1836 = vst [vmem:[%s1835] ss:$4 sm:$0xff] %v1658
    %s1837 = scalar_lea.vmem [#allocation1], 3
    %1838 = vst [vmem:[%s1837] ss:$4 sm:$0xff] %v1659
    %s1839 = scalar_lea.vmem [#allocation1], 32
    %1840 = vst [vmem:[%s1839] ss:$4 sm:$0xff] %v1660
    %s1841 = scalar_lea.vmem [#allocation1], 33
    %1842 = vst [vmem:[%s1841] ss:$4 sm:$0xff] %v1661
    %s1843 = scalar_lea.vmem [#allocation1], 34
    %1844 = vst [vmem:[%s1843] ss:$4 sm:$0xff] %v1662
    %s1845 = scalar_lea.vmem [#allocation1], 35
    %1846 = vst [vmem:[%s1845] ss:$4 sm:$0xff] %v1663
    %v1847 = vld.sshfl [vmem:[#allocation1] sm:$0xff pattern:$0x73625140]
    %v1848 = vld.sshfl [vmem:[#allocation1 + $0x20] sm:$0xff pattern:$0x73625140]
    %v1849 = vsel %vm83, %v1847, 0
    %v1851 = vsel %vm83, %v1848, 0
    %1853 = vmatpush.msra.mxu0 0.0
    %1854 = vmatpush.msra.mxu0 0.0
    %1855 = vmatpush.msra.mxu0 0.0
    %1856 = vmatpush.msra.mxu0 0.0
    %1857 = vmatpush.msra.mxu0 0.0
    %1858 = vmatpush.msra.mxu0 0.0
    %1859 = vmatpush.msra.mxu0 0.0
    %1860 = vmatpush.msra.mxu0 0.0
    %1861 = vmatpush.msra.mxu0 0.0
    %1862 = vmatpush.msra.mxu0 0.0
    %1863 = vmatpush.msra.mxu0 0.0
    %1864 = vmatpush.msra.mxu0 0.0
    %1865 = vmatpush.msra.mxu0 %v1826
    %1866 = vmatpush.msra.mxu0 %v1825
    %1867 = vmatpush.msra.mxu0 %v1824
    %1868 = vmatpush.msra.mxu0 %v1823
    %1869 = vmatmul.f32.gmra.mxu0 %v1849
    %v1870 = vpop.f32.mrf.mxu0
    %v1871 = vadd.f32 %v1830, %v1870
    %1872 = vmatmul.f32.gmra.mxu0 %v1851
    %v1873 = vpop.f32.mrf.mxu0
    %v1874 = vadd.f32 %v1830, %v1873
    %1875 = vdwg.mxu0
    %v1878 = vrot.slane %v1871, 2
    %v1879 = vrot.slane %v1871, 4
    %v1880 = vrot.slane %v1871, 6
    %v1881 = vrot.slane %v1874, 2
    %v1882 = vrot.slane %v1874, 4
    %v1883 = vrot.slane %v1874, 6
    %1890 = vst.msk [vmem:[#allocation4] sm:$0x3] %vm125, %v1871
    %1891 = vst.msk [vmem:[#allocation4 + $0x2] sm:$0x3] %vm125, %v1878
    %1892 = vst.msk [vmem:[#allocation4 + $0x4] sm:$0x3] %vm125, %v1879
    %1893 = vst.msk [vmem:[#allocation4 + $0x6] sm:$0x3] %vm125, %v1880
    %1894 = vst.msk [vmem:[#allocation4 + $0x8] sm:$0x3] %vm125, %v1874
    %1895 = vst.msk [vmem:[#allocation4 + $0xa] sm:$0x3] %vm125, %v1881
    %1896 = vst.msk [vmem:[#allocation4 + $0xc] sm:$0x3] %vm125, %v1882
    %1897 = vst.msk [vmem:[#allocation4 + $0xe] sm:$0x3] %vm125, %v1883
    %s1898 = scalar_lea.vmem %s5, 96
    %v1899 = vld [vmem:[%s1898] sm:$0xff]
    %v1900 = vld [vmem:[%s1898 + $0x8] sm:$0xff]
    %v1901 = vld [vmem:[%s1898 + $0x10] sm:$0xff]
    %v1902 = vld [vmem:[%s1898 + $0x18] sm:$0xff]
    %s1903 = scalar_lea.vmem %s7, 3
    %v1904 = vld [vmem:[%s1903] sm:$0x1]
    %v1906 = vperm.slane %v1904, 0
    %1908 = vst [vmem:[#allocation1] ss:$4 sm:$0xff] %v1656
    %s1909 = scalar_lea.vmem [#allocation1], 1
    %1910 = vst [vmem:[%s1909] ss:$4 sm:$0xff] %v1657
    %s1911 = scalar_lea.vmem [#allocation1], 2
    %1912 = vst [vmem:[%s1911] ss:$4 sm:$0xff] %v1658
    %s1913 = scalar_lea.vmem [#allocation1], 3
    %1914 = vst [vmem:[%s1913] ss:$4 sm:$0xff] %v1659
    %s1915 = scalar_lea.vmem [#allocation1], 32
    %1916 = vst [vmem:[%s1915] ss:$4 sm:$0xff] %v1660
    %s1917 = scalar_lea.vmem [#allocation1], 33
    %1918 = vst [vmem:[%s1917] ss:$4 sm:$0xff] %v1661
    %s1919 = scalar_lea.vmem [#allocation1], 34
    %1920 = vst [vmem:[%s1919] ss:$4 sm:$0xff] %v1662
    %s1921 = scalar_lea.vmem [#allocation1], 35
    %1922 = vst [vmem:[%s1921] ss:$4 sm:$0xff] %v1663
    %v1923 = vld.sshfl [vmem:[#allocation1] sm:$0xff pattern:$0x73625140]
    %v1924 = vld.sshfl [vmem:[#allocation1 + $0x20] sm:$0xff pattern:$0x73625140]
    %v1925 = vsel %vm83, %v1923, 0
    %v1927 = vsel %vm83, %v1924, 0
    %1929 = vmatpush.msra.mxu0 0.0
    %1930 = vmatpush.msra.mxu0 0.0
    %1931 = vmatpush.msra.mxu0 0.0
    %1932 = vmatpush.msra.mxu0 0.0
    %1933 = vmatpush.msra.mxu0 0.0
    %1934 = vmatpush.msra.mxu0 0.0
    %1935 = vmatpush.msra.mxu0 0.0
    %1936 = vmatpush.msra.mxu0 0.0
    %1937 = vmatpush.msra.mxu0 0.0
    %1938 = vmatpush.msra.mxu0 0.0
    %1939 = vmatpush.msra.mxu0 0.0
    %1940 = vmatpush.msra.mxu0 0.0
    %1941 = vmatpush.msra.mxu0 %v1902
    %1942 = vmatpush.msra.mxu0 %v1901
    %1943 = vmatpush.msra.mxu0 %v1900
    %1944 = vmatpush.msra.mxu0 %v1899
    %1945 = vmatmul.f32.gmra.mxu0 %v1925
    %v1946 = vpop.f32.mrf.mxu0
    %v1947 = vadd.f32 %v1906, %v1946
    %1948 = vmatmul.f32.gmra.mxu0 %v1927
    %v1949 = vpop.f32.mrf.mxu0
    %v1950 = vadd.f32 %v1906, %v1949
    %1951 = vdwg.mxu0
    %v1954 = vrot.slane %v1947, 2
    %v1955 = vrot.slane %v1947, 4
    %v1956 = vrot.slane %v1947, 6
    %v1957 = vrot.slane %v1950, 2
    %v1958 = vrot.slane %v1950, 4
    %v1959 = vrot.slane %v1950, 6
    %1966 = vst.msk [vmem:[#allocation5] sm:$0x3] %vm125, %v1947
    %1967 = vst.msk [vmem:[#allocation5 + $0x2] sm:$0x3] %vm125, %v1954
    %1968 = vst.msk [vmem:[#allocation5 + $0x4] sm:$0x3] %vm125, %v1955
    %1969 = vst.msk [vmem:[#allocation5 + $0x6] sm:$0x3] %vm125, %v1956
    %1970 = vst.msk [vmem:[#allocation5 + $0x8] sm:$0x3] %vm125, %v1950
    %1971 = vst.msk [vmem:[#allocation5 + $0xa] sm:$0x3] %vm125, %v1957
    %1972 = vst.msk [vmem:[#allocation5 + $0xc] sm:$0x3] %vm125, %v1958
    %1973 = vst.msk [vmem:[#allocation5 + $0xe] sm:$0x3] %vm125, %v1959
    %v1974 = vld [vmem:[%s6] sm:$0xff]
    %v1975 = vld [vmem:[%s6 + $0x8] sm:$0xff]
    %v1976 = vld [vmem:[%s6 + $0x10] sm:$0xff]
    %v1977 = vld [vmem:[%s6 + $0x18] sm:$0xff]
    %s1978 = scalar_lea.vmem %s6, 32
    %v1979 = vld [vmem:[%s1978] sm:$0xff]
    %v1980 = vld [vmem:[%s1978 + $0x8] sm:$0xff]
    %v1981 = vld [vmem:[%s1978 + $0x10] sm:$0xff]
    %v1982 = vld [vmem:[%s1978 + $0x18] sm:$0xff]
    %s1983 = scalar_lea.vmem %s6, 64
    %v1984 = vld [vmem:[%s1983] sm:$0xff]
    %v1985 = vld [vmem:[%s1983 + $0x8] sm:$0xff]
    %v1986 = vld [vmem:[%s1983 + $0x10] sm:$0xff]
    %v1987 = vld [vmem:[%s1983 + $0x18] sm:$0xff]
    %s1988 = scalar_lea.vmem %s6, 96
    %v1989 = vld [vmem:[%s1988] sm:$0xff]
    %v1990 = vld [vmem:[%s1988 + $0x8] sm:$0xff]
    %v1991 = vld [vmem:[%s1988 + $0x10] sm:$0xff]
    %v1992 = vld [vmem:[%s1988 + $0x18] sm:$0xff]
    %v1993 = vld [vmem:[#allocation2] sm:$0x3]
    %1994 = vmatpush.msra.mxu0 0.0
    %1995 = vmatpush.msra.mxu0 0.0
    %1996 = vmatpush.msra.mxu0 0.0
    %1997 = vmatpush.msra.mxu0 0.0
    %1998 = vmatpush.msra.mxu0 0.0
    %1999 = vmatpush.msra.mxu0 0.0
    %2000 = vmatpush.msra.mxu0 0.0
    %2001 = vmatpush.msra.mxu0 0.0
    %2002 = vmatpush.msra.mxu0 0.0
    %2003 = vmatpush.msra.mxu0 0.0
    %2004 = vmatpush.msra.mxu0 0.0
    %2005 = vmatpush.msra.mxu0 0.0
    %2006 = vmatpush.msra.mxu0 %v1977
    %2007 = vmatpush.msra.mxu0 %v1976
    %2008 = vmatpush.msra.mxu0 %v1975
    %2009 = vmatpush.msra.mxu0 %v1974
    %2010 = vmatmul.f32.gmra.mxu0 %v383
    %v2011 = vpop.f32.mrf.mxu0
    %v2012 = vadd.f32 0.0, %v2011
    %2013 = vdwg.mxu0
    %v2014 = vadd.f32 %v1993, %v2012
    %v2015 = vld [vmem:[#allocation3] sm:$0x3]
    %2016 = vmatpush.msra.mxu0 0.0
    %2017 = vmatpush.msra.mxu0 0.0
    %2018 = vmatpush.msra.mxu0 0.0
    %2019 = vmatpush.msra.mxu0 0.0
    %2020 = vmatpush.msra.mxu0 0.0
    %2021 = vmatpush.msra.mxu0 0.0
    %2022 = vmatpush.msra.mxu0 0.0
    %2023 = vmatpush.msra.mxu0 0.0
    %2024 = vmatpush.msra.mxu0 0.0
    %2025 = vmatpush.msra.mxu0 0.0
    %2026 = vmatpush.msra.mxu0 0.0
    %2027 = vmatpush.msra.mxu0 0.0
    %2028 = vmatpush.msra.mxu0 %v1982
    %2029 = vmatpush.msra.mxu0 %v1981
    %2030 = vmatpush.msra.mxu0 %v1980
    %2031 = vmatpush.msra.mxu0 %v1979
    %2032 = vmatmul.f32.gmra.mxu0 %v383
    %v2033 = vpop.f32.mrf.mxu0
    %v2034 = vadd.f32 0.0, %v2033
    %2035 = vdwg.mxu0
    %v2036 = vadd.f32 %v2015, %v2034
    %v2037 = vld [vmem:[#allocation4] sm:$0x3]
    %2038 = vmatpush.msra.mxu0 0.0
    %2039 = vmatpush.msra.mxu0 0.0
    %2040 = vmatpush.msra.mxu0 0.0
    %2041 = vmatpush.msra.mxu0 0.0
    %2042 = vmatpush.msra.mxu0 0.0
    %2043 = vmatpush.msra.mxu0 0.0
    %2044 = vmatpush.msra.mxu0 0.0
    %2045 = vmatpush.msra.mxu0 0.0
    %2046 = vmatpush.msra.mxu0 0.0
    %2047 = vmatpush.msra.mxu0 0.0
    %2048 = vmatpush.msra.mxu0 0.0
    %2049 = vmatpush.msra.mxu0 0.0
    %2050 = vmatpush.msra.mxu0 %v1987
    %2051 = vmatpush.msra.mxu0 %v1986
    %2052 = vmatpush.msra.mxu0 %v1985
    %2053 = vmatpush.msra.mxu0 %v1984
    %2054 = vmatmul.f32.gmra.mxu0 %v383
    %v2055 = vpop.f32.mrf.mxu0
    %v2056 = vadd.f32 0.0, %v2055
    %2057 = vdwg.mxu0
    %v2058 = vadd.f32 %v2037, %v2056
    %v2059 = vld [vmem:[#allocation5] sm:$0x3]
    %2060 = vmatpush.msra.mxu0 0.0
    %2061 = vmatpush.msra.mxu0 0.0
    %2062 = vmatpush.msra.mxu0 0.0
    %2063 = vmatpush.msra.mxu0 0.0
    %2064 = vmatpush.msra.mxu0 0.0
    %2065 = vmatpush.msra.mxu0 0.0
    %2066 = vmatpush.msra.mxu0 0.0
    %2067 = vmatpush.msra.mxu0 0.0
    %2068 = vmatpush.msra.mxu0 0.0
    %2069 = vmatpush.msra.mxu0 0.0
    %2070 = vmatpush.msra.mxu0 0.0
    %2071 = vmatpush.msra.mxu0 0.0
    %2072 = vmatpush.msra.mxu0 %v1992
    %2073 = vmatpush.msra.mxu0 %v1991
    %2074 = vmatpush.msra.mxu0 %v1990
    %2075 = vmatpush.msra.mxu0 %v1989
    %2076 = vmatmul.f32.gmra.mxu0 %v383
    %v2077 = vpop.f32.mrf.mxu0
    %v2078 = vadd.f32 0.0, %v2077
    %2079 = vdwg.mxu0
    %v2080 = vadd.f32 %v2059, %v2078
    %v2081 = vxor.u32 %v2014, 2147483648
    %v2082 = vmul.f32 %v2081, 1.442695
    %v2083 = vpow.pop %v2082
    %v2084 = vadd.f32 %v2083, 1.0
    %v2085 = vrcp.pop %v2084
    %v2086 = vmul.f32 %v2084, %v2085
    %v2087 = vsub.f32 1.0, %v2086
    %v2088 = vmul.f32 %v2085, %v2087
    %v2089 = vadd.f32 %v2085, %v2088
    %vm2090 = vweird.f32 %v2084
    %vm2091 = vweird.f32 %v2085
    %vm2092 = vmor %vm2090, %vm2091
    %v2093 = vsel %vm2092, %v2085, %v2089
    %v2094 = vand.u32 2147483647, %v2084
    %vm2095 = vcmp.eq.f32.partialorder %v2094, 8.507059e+37
    %v2096 = vand.u32 %v2084, 2147483648
    %v2097 = vor.u32 1.1754944e-38, %v2096
    %v2098 = vsel %vm2095, %v2097, %v2093
    %v2099 = vmul.f32 1.0, %v2098
    %v2100 = vxor.u32 %v2036, 2147483648
    %v2101 = vmul.f32 %v2100, 1.442695
    %v2102 = vpow.pop %v2101
    %v2103 = vadd.f32 %v2102, 1.0
    %v2104 = vrcp.pop %v2103
    %v2105 = vmul.f32 %v2103, %v2104
    %v2106 = vsub.f32 1.0, %v2105
    %v2107 = vmul.f32 %v2104, %v2106
    %v2108 = vadd.f32 %v2104, %v2107
    %vm2109 = vweird.f32 %v2103
    %vm2110 = vweird.f32 %v2104
    %vm2111 = vmor %vm2109, %vm2110
    %v2112 = vsel %vm2111, %v2104, %v2108
    %v2113 = vand.u32 2147483647, %v2103
    %vm2114 = vcmp.eq.f32.partialorder %v2113, 8.507059e+37
    %v2115 = vand.u32 %v2103, 2147483648
    %v2116 = vor.u32 1.1754944e-38, %v2115
    %v2117 = vsel %vm2114, %v2116, %v2112
    %v2118 = vmul.f32 1.0, %v2117
    %v2119 = vtanh.pop %v2058
    %v2120 = vxor.u32 %v2080, 2147483648
    %v2121 = vmul.f32 %v2120, 1.442695
    %v2122 = vpow.pop %v2121
    %v2123 = vadd.f32 %v2122, 1.0
    %v2124 = vrcp.pop %v2123
    %v2125 = vmul.f32 %v2123, %v2124
    %v2126 = vsub.f32 1.0, %v2125
    %v2127 = vmul.f32 %v2124, %v2126
    %v2128 = vadd.f32 %v2124, %v2127
    %vm2129 = vweird.f32 %v2123
    %vm2130 = vweird.f32 %v2124
    %vm2131 = vmor %vm2129, %vm2130
    %v2132 = vsel %vm2131, %v2124, %v2128
    %v2133 = vand.u32 2147483647, %v2123
    %vm2134 = vcmp.eq.f32.partialorder %v2133, 8.507059e+37
    %v2135 = vand.u32 %v2123, 2147483648
    %v2136 = vor.u32 1.1754944e-38, %v2135
    %v2137 = vsel %vm2134, %v2136, %v2132
    %v2138 = vmul.f32 1.0, %v2137
    %v2139 = vmul.f32 %v2118, 0.0
    %v2140 = vmul.f32 %v2099, %v2119
    %v2141 = vadd.f32 %v2139, %v2140
    %v2142 = vtanh.pop %v2141
    %v2143 = vmul.f32 %v2138, %v2142
    %2144 = vst.msk [vmem:[#allocation7] sm:$0x3] %vm125, %v2143
    %v2145 = vld [vmem:[%s536] sm:$0x3]
    %v2147 = vsel %vm83, %v2143, 0
    %2149 = vmatpush.msra.mxu0 0.0
    %2150 = vmatpush.msra.mxu0 0.0
    %2151 = vmatpush.msra.mxu0 0.0
    %2152 = vmatpush.msra.mxu0 0.0
    %2153 = vmatpush.msra.mxu0 0.0
    %2154 = vmatpush.msra.mxu0 0.0
    %2155 = vmatpush.msra.mxu0 0.0
    %2156 = vmatpush.msra.mxu0 0.0
    %2157 = vmatpush.msra.mxu0 0.0
    %2158 = vmatpush.msra.mxu0 0.0
    %2159 = vmatpush.msra.mxu0 0.0
    %2160 = vmatpush.msra.mxu0 0.0
    %2161 = vmatpush.msra.mxu0 %v1977
    %2162 = vmatpush.msra.mxu0 %v1976
    %2163 = vmatpush.msra.mxu0 %v1975
    %2164 = vmatpush.msra.mxu0 %v1974
    %2165 = vmatmul.f32.gmra.mxu0 %v2147
    %v2166 = vpop.f32.mrf.mxu0
    %v2167 = vadd.f32 0.0, %v2166
    %2168 = vdwg.mxu0
    %v2169 = vadd.f32 %v2145, %v2167
    %v2170 = vld [vmem:[%s562] sm:$0x3]
    %2171 = vmatpush.msra.mxu0 0.0
    %2172 = vmatpush.msra.mxu0 0.0
    %2173 = vmatpush.msra.mxu0 0.0
    %2174 = vmatpush.msra.mxu0 0.0
    %2175 = vmatpush.msra.mxu0 0.0
    %2176 = vmatpush.msra.mxu0 0.0
    %2177 = vmatpush.msra.mxu0 0.0
    %2178 = vmatpush.msra.mxu0 0.0
    %2179 = vmatpush.msra.mxu0 0.0
    %2180 = vmatpush.msra.mxu0 0.0
    %2181 = vmatpush.msra.mxu0 0.0
    %2182 = vmatpush.msra.mxu0 0.0
    %2183 = vmatpush.msra.mxu0 %v1982
    %2184 = vmatpush.msra.mxu0 %v1981
    %2185 = vmatpush.msra.mxu0 %v1980
    %2186 = vmatpush.msra.mxu0 %v1979
    %2187 = vmatmul.f32.gmra.mxu0 %v2147
    %v2188 = vpop.f32.mrf.mxu0
    %v2189 = vadd.f32 0.0, %v2188
    %2190 = vdwg.mxu0
    %v2191 = vadd.f32 %v2170, %v2189
    %v2192 = vld [vmem:[%s585] sm:$0x3]
    %2193 = vmatpush.msra.mxu0 0.0
    %2194 = vmatpush.msra.mxu0 0.0
    %2195 = vmatpush.msra.mxu0 0.0
    %2196 = vmatpush.msra.mxu0 0.0
    %2197 = vmatpush.msra.mxu0 0.0
    %2198 = vmatpush.msra.mxu0 0.0
    %2199 = vmatpush.msra.mxu0 0.0
    %2200 = vmatpush.msra.mxu0 0.0
    %2201 = vmatpush.msra.mxu0 0.0
    %2202 = vmatpush.msra.mxu0 0.0
    %2203 = vmatpush.msra.mxu0 0.0
    %2204 = vmatpush.msra.mxu0 0.0
    %2205 = vmatpush.msra.mxu0 %v1987
    %2206 = vmatpush.msra.mxu0 %v1986
    %2207 = vmatpush.msra.mxu0 %v1985
    %2208 = vmatpush.msra.mxu0 %v1984
    %2209 = vmatmul.f32.gmra.mxu0 %v2147
    %v2210 = vpop.f32.mrf.mxu0
    %v2211 = vadd.f32 0.0, %v2210
    %2212 = vdwg.mxu0
    %v2213 = vadd.f32 %v2192, %v2211
    %v2214 = vld [vmem:[%s608] sm:$0x3]
    %2215 = vmatpush.msra.mxu0 0.0
    %2216 = vmatpush.msra.mxu0 0.0
    %2217 = vmatpush.msra.mxu0 0.0
    %2218 = vmatpush.msra.mxu0 0.0
    %2219 = vmatpush.msra.mxu0 0.0
    %2220 = vmatpush.msra.mxu0 0.0
    %2221 = vmatpush.msra.mxu0 0.0
    %2222 = vmatpush.msra.mxu0 0.0
    %2223 = vmatpush.msra.mxu0 0.0
    %2224 = vmatpush.msra.mxu0 0.0
    %2225 = vmatpush.msra.mxu0 0.0
    %2226 = vmatpush.msra.mxu0 0.0
    %2227 = vmatpush.msra.mxu0 %v1992
    %2228 = vmatpush.msra.mxu0 %v1991
    %2229 = vmatpush.msra.mxu0 %v1990
    %2230 = vmatpush.msra.mxu0 %v1989
    %2231 = vmatmul.f32.gmra.mxu0 %v2147
    %v2232 = vpop.f32.mrf.mxu0
    %v2233 = vadd.f32 0.0, %v2232
    %2234 = vdwg.mxu0
    %v2235 = vadd.f32 %v2214, %v2233
    %v2236 = vxor.u32 %v2169, 2147483648
    %v2237 = vmul.f32 %v2236, 1.442695
    %v2238 = vpow.pop %v2237
    %v2239 = vadd.f32 %v2238, 1.0
    %v2240 = vrcp.pop %v2239
    %v2241 = vmul.f32 %v2239, %v2240
    %v2242 = vsub.f32 1.0, %v2241
    %v2243 = vmul.f32 %v2240, %v2242
    %v2244 = vadd.f32 %v2240, %v2243
    %vm2245 = vweird.f32 %v2239
    %vm2246 = vweird.f32 %v2240
    %vm2247 = vmor %vm2245, %vm2246
    %v2248 = vsel %vm2247, %v2240, %v2244
    %v2249 = vand.u32 2147483647, %v2239
    %vm2250 = vcmp.eq.f32.partialorder %v2249, 8.507059e+37
    %v2251 = vand.u32 %v2239, 2147483648
    %v2252 = vor.u32 1.1754944e-38, %v2251
    %v2253 = vsel %vm2250, %v2252, %v2248
    %v2254 = vmul.f32 1.0, %v2253
    %v2255 = vxor.u32 %v2191, 2147483648
    %v2256 = vmul.f32 %v2255, 1.442695
    %v2257 = vpow.pop %v2256
    %v2258 = vadd.f32 %v2257, 1.0
    %v2259 = vrcp.pop %v2258
    %v2260 = vmul.f32 %v2258, %v2259
    %v2261 = vsub.f32 1.0, %v2260
    %v2262 = vmul.f32 %v2259, %v2261
    %v2263 = vadd.f32 %v2259, %v2262
    %vm2264 = vweird.f32 %v2258
    %vm2265 = vweird.f32 %v2259
    %vm2266 = vmor %vm2264, %vm2265
    %v2267 = vsel %vm2266, %v2259, %v2263
    %v2268 = vand.u32 2147483647, %v2258
    %vm2269 = vcmp.eq.f32.partialorder %v2268, 8.507059e+37
    %v2270 = vand.u32 %v2258, 2147483648
    %v2271 = vor.u32 1.1754944e-38, %v2270
    %v2272 = vsel %vm2269, %v2271, %v2267
    %v2273 = vmul.f32 1.0, %v2272
    %v2274 = vtanh.pop %v2213
    %v2275 = vxor.u32 %v2235, 2147483648
    %v2276 = vmul.f32 %v2275, 1.442695
    %v2277 = vpow.pop %v2276
    %v2278 = vadd.f32 %v2277, 1.0
    %v2279 = vrcp.pop %v2278
    %v2280 = vmul.f32 %v2278, %v2279
    %v2281 = vsub.f32 1.0, %v2280
    %v2282 = vmul.f32 %v2279, %v2281
    %v2283 = vadd.f32 %v2279, %v2282
    %vm2284 = vweird.f32 %v2278
    %vm2285 = vweird.f32 %v2279
    %vm2286 = vmor %vm2284, %vm2285
    %v2287 = vsel %vm2286, %v2279, %v2283
    %v2288 = vand.u32 2147483647, %v2278
    %vm2289 = vcmp.eq.f32.partialorder %v2288, 8.507059e+37
    %v2290 = vand.u32 %v2278, 2147483648
    %v2291 = vor.u32 1.1754944e-38, %v2290
    %v2292 = vsel %vm2289, %v2291, %v2287
    %v2293 = vmul.f32 1.0, %v2292
    %v2294 = vmul.f32 %v2273, %v2141
    %v2295 = vmul.f32 %v2254, %v2274
    %v2296 = vadd.f32 %v2294, %v2295
    %v2297 = vtanh.pop %v2296
    %v2298 = vmul.f32 %v2293, %v2297
    %s2299 = scalar_lea.vmem [#allocation7], 2
    %2300 = vst.msk [vmem:[%s2299] sm:$0x3] %vm125, %v2298
    %v2301 = vld [vmem:[%s696] sm:$0x3]
    %v2303 = vsel %vm83, %v2298, 0
    %2305 = vmatpush.msra.mxu0 0.0
    %2306 = vmatpush.msra.mxu0 0.0
    %2307 = vmatpush.msra.mxu0 0.0
    %2308 = vmatpush.msra.mxu0 0.0
    %2309 = vmatpush.msra.mxu0 0.0
    %2310 = vmatpush.msra.mxu0 0.0
    %2311 = vmatpush.msra.mxu0 0.0
    %2312 = vmatpush.msra.mxu0 0.0
    %2313 = vmatpush.msra.mxu0 0.0
    %2314 = vmatpush.msra.mxu0 0.0
    %2315 = vmatpush.msra.mxu0 0.0
    %2316 = vmatpush.msra.mxu0 0.0
    %2317 = vmatpush.msra.mxu0 %v1977
    %2318 = vmatpush.msra.mxu0 %v1976
    %2319 = vmatpush.msra.mxu0 %v1975
    %2320 = vmatpush.msra.mxu0 %v1974
    %2321 = vmatmul.f32.gmra.mxu0 %v2303
    %v2322 = vpop.f32.mrf.mxu0
    %v2323 = vadd.f32 0.0, %v2322
    %2324 = vdwg.mxu0
    %v2325 = vadd.f32 %v2301, %v2323
    %v2326 = vld [vmem:[%s722] sm:$0x3]
    %2327 = vmatpush.msra.mxu0 0.0
    %2328 = vmatpush.msra.mxu0 0.0
    %2329 = vmatpush.msra.mxu0 0.0
    %2330 = vmatpush.msra.mxu0 0.0
    %2331 = vmatpush.msra.mxu0 0.0
    %2332 = vmatpush.msra.mxu0 0.0
    %2333 = vmatpush.msra.mxu0 0.0
    %2334 = vmatpush.msra.mxu0 0.0
    %2335 = vmatpush.msra.mxu0 0.0
    %2336 = vmatpush.msra.mxu0 0.0
    %2337 = vmatpush.msra.mxu0 0.0
    %2338 = vmatpush.msra.mxu0 0.0
    %2339 = vmatpush.msra.mxu0 %v1982
    %2340 = vmatpush.msra.mxu0 %v1981
    %2341 = vmatpush.msra.mxu0 %v1980
    %2342 = vmatpush.msra.mxu0 %v1979
    %2343 = vmatmul.f32.gmra.mxu0 %v2303
    %v2344 = vpop.f32.mrf.mxu0
    %v2345 = vadd.f32 0.0, %v2344
    %2346 = vdwg.mxu0
    %v2347 = vadd.f32 %v2326, %v2345
    %v2348 = vld [vmem:[%s745] sm:$0x3]
    %2349 = vmatpush.msra.mxu0 0.0
    %2350 = vmatpush.msra.mxu0 0.0
    %2351 = vmatpush.msra.mxu0 0.0
    %2352 = vmatpush.msra.mxu0 0.0
    %2353 = vmatpush.msra.mxu0 0.0
    %2354 = vmatpush.msra.mxu0 0.0
    %2355 = vmatpush.msra.mxu0 0.0
    %2356 = vmatpush.msra.mxu0 0.0
    %2357 = vmatpush.msra.mxu0 0.0
    %2358 = vmatpush.msra.mxu0 0.0
    %2359 = vmatpush.msra.mxu0 0.0
    %2360 = vmatpush.msra.mxu0 0.0
    %2361 = vmatpush.msra.mxu0 %v1987
    %2362 = vmatpush.msra.mxu0 %v1986
    %2363 = vmatpush.msra.mxu0 %v1985
    %2364 = vmatpush.msra.mxu0 %v1984
    %2365 = vmatmul.f32.gmra.mxu0 %v2303
    %v2366 = vpop.f32.mrf.mxu0
    %v2367 = vadd.f32 0.0, %v2366
    %2368 = vdwg.mxu0
    %v2369 = vadd.f32 %v2348, %v2367
    %v2370 = vld [vmem:[%s768] sm:$0x3]
    %2371 = vmatpush.msra.mxu0 0.0
    %2372 = vmatpush.msra.mxu0 0.0
    %2373 = vmatpush.msra.mxu0 0.0
    %2374 = vmatpush.msra.mxu0 0.0
    %2375 = vmatpush.msra.mxu0 0.0
    %2376 = vmatpush.msra.mxu0 0.0
    %2377 = vmatpush.msra.mxu0 0.0
    %2378 = vmatpush.msra.mxu0 0.0
    %2379 = vmatpush.msra.mxu0 0.0
    %2380 = vmatpush.msra.mxu0 0.0
    %2381 = vmatpush.msra.mxu0 0.0
    %2382 = vmatpush.msra.mxu0 0.0
    %2383 = vmatpush.msra.mxu0 %v1992
    %2384 = vmatpush.msra.mxu0 %v1991
    %2385 = vmatpush.msra.mxu0 %v1990
    %2386 = vmatpush.msra.mxu0 %v1989
    %2387 = vmatmul.f32.gmra.mxu0 %v2303
    %v2388 = vpop.f32.mrf.mxu0
    %v2389 = vadd.f32 0.0, %v2388
    %2390 = vdwg.mxu0
    %v2391 = vadd.f32 %v2370, %v2389
    %v2392 = vxor.u32 %v2325, 2147483648
    %v2393 = vmul.f32 %v2392, 1.442695
    %v2394 = vpow.pop %v2393
    %v2395 = vadd.f32 %v2394, 1.0
    %v2396 = vrcp.pop %v2395
    %v2397 = vmul.f32 %v2395, %v2396
    %v2398 = vsub.f32 1.0, %v2397
    %v2399 = vmul.f32 %v2396, %v2398
    %v2400 = vadd.f32 %v2396, %v2399
    %vm2401 = vweird.f32 %v2395
    %vm2402 = vweird.f32 %v2396
    %vm2403 = vmor %vm2401, %vm2402
    %v2404 = vsel %vm2403, %v2396, %v2400
    %v2405 = vand.u32 2147483647, %v2395
    %vm2406 = vcmp.eq.f32.partialorder %v2405, 8.507059e+37
    %v2407 = vand.u32 %v2395, 2147483648
    %v2408 = vor.u32 1.1754944e-38, %v2407
    %v2409 = vsel %vm2406, %v2408, %v2404
    %v2410 = vmul.f32 1.0, %v2409
    %v2411 = vxor.u32 %v2347, 2147483648
    %v2412 = vmul.f32 %v2411, 1.442695
    %v2413 = vpow.pop %v2412
    %v2414 = vadd.f32 %v2413, 1.0
    %v2415 = vrcp.pop %v2414
    %v2416 = vmul.f32 %v2414, %v2415
    %v2417 = vsub.f32 1.0, %v2416
    %v2418 = vmul.f32 %v2415, %v2417
    %v2419 = vadd.f32 %v2415, %v2418
    %vm2420 = vweird.f32 %v2414
    %vm2421 = vweird.f32 %v2415
    %vm2422 = vmor %vm2420, %vm2421
    %v2423 = vsel %vm2422, %v2415, %v2419
    %v2424 = vand.u32 2147483647, %v2414
    %vm2425 = vcmp.eq.f32.partialorder %v2424, 8.507059e+37
    %v2426 = vand.u32 %v2414, 2147483648
    %v2427 = vor.u32 1.1754944e-38, %v2426
    %v2428 = vsel %vm2425, %v2427, %v2423
    %v2429 = vmul.f32 1.0, %v2428
    %v2430 = vtanh.pop %v2369
    %v2431 = vxor.u32 %v2391, 2147483648
    %v2432 = vmul.f32 %v2431, 1.442695
    %v2433 = vpow.pop %v2432
    %v2434 = vadd.f32 %v2433, 1.0
    %v2435 = vrcp.pop %v2434
    %v2436 = vmul.f32 %v2434, %v2435
    %v2437 = vsub.f32 1.0, %v2436
    %v2438 = vmul.f32 %v2435, %v2437
    %v2439 = vadd.f32 %v2435, %v2438
    %vm2440 = vweird.f32 %v2434
    %vm2441 = vweird.f32 %v2435
    %vm2442 = vmor %vm2440, %vm2441
    %v2443 = vsel %vm2442, %v2435, %v2439
    %v2444 = vand.u32 2147483647, %v2434
    %vm2445 = vcmp.eq.f32.partialorder %v2444, 8.507059e+37
    %v2446 = vand.u32 %v2434, 2147483648
    %v2447 = vor.u32 1.1754944e-38, %v2446
    %v2448 = vsel %vm2445, %v2447, %v2443
    %v2449 = vmul.f32 1.0, %v2448
    %v2450 = vmul.f32 %v2429, %v2296
    %v2451 = vmul.f32 %v2410, %v2430
    %v2452 = vadd.f32 %v2450, %v2451
    %v2453 = vtanh.pop %v2452
    %v2454 = vmul.f32 %v2449, %v2453
    %s2455 = scalar_lea.vmem [#allocation7], 4
    %2456 = vst.msk [vmem:[%s2455] sm:$0x3] %vm125, %v2454
    %v2457 = vld [vmem:[%s856] sm:$0x3]
    %v2459 = vsel %vm83, %v2454, 0
    %2461 = vmatpush.msra.mxu0 0.0
    %2462 = vmatpush.msra.mxu0 0.0
    %2463 = vmatpush.msra.mxu0 0.0
    %2464 = vmatpush.msra.mxu0 0.0
    %2465 = vmatpush.msra.mxu0 0.0
    %2466 = vmatpush.msra.mxu0 0.0
    %2467 = vmatpush.msra.mxu0 0.0
    %2468 = vmatpush.msra.mxu0 0.0
    %2469 = vmatpush.msra.mxu0 0.0
    %2470 = vmatpush.msra.mxu0 0.0
    %2471 = vmatpush.msra.mxu0 0.0
    %2472 = vmatpush.msra.mxu0 0.0
    %2473 = vmatpush.msra.mxu0 %v1977
    %2474 = vmatpush.msra.mxu0 %v1976
    %2475 = vmatpush.msra.mxu0 %v1975
    %2476 = vmatpush.msra.mxu0 %v1974
    %2477 = vmatmul.f32.gmra.mxu0 %v2459
    %v2478 = vpop.f32.mrf.mxu0
    %v2479 = vadd.f32 0.0, %v2478
    %2480 = vdwg.mxu0
    %v2481 = vadd.f32 %v2457, %v2479
    %v2482 = vld [vmem:[%s882] sm:$0x3]
    %2483 = vmatpush.msra.mxu0 0.0
    %2484 = vmatpush.msra.mxu0 0.0
    %2485 = vmatpush.msra.mxu0 0.0
    %2486 = vmatpush.msra.mxu0 0.0
    %2487 = vmatpush.msra.mxu0 0.0
    %2488 = vmatpush.msra.mxu0 0.0
    %2489 = vmatpush.msra.mxu0 0.0
    %2490 = vmatpush.msra.mxu0 0.0
    %2491 = vmatpush.msra.mxu0 0.0
    %2492 = vmatpush.msra.mxu0 0.0
    %2493 = vmatpush.msra.mxu0 0.0
    %2494 = vmatpush.msra.mxu0 0.0
    %2495 = vmatpush.msra.mxu0 %v1982
    %2496 = vmatpush.msra.mxu0 %v1981
    %2497 = vmatpush.msra.mxu0 %v1980
    %2498 = vmatpush.msra.mxu0 %v1979
    %2499 = vmatmul.f32.gmra.mxu0 %v2459
    %v2500 = vpop.f32.mrf.mxu0
    %v2501 = vadd.f32 0.0, %v2500
    %2502 = vdwg.mxu0
    %v2503 = vadd.f32 %v2482, %v2501
    %v2504 = vld [vmem:[%s905] sm:$0x3]
    %2505 = vmatpush.msra.mxu0 0.0
    %2506 = vmatpush.msra.mxu0 0.0
    %2507 = vmatpush.msra.mxu0 0.0
    %2508 = vmatpush.msra.mxu0 0.0
    %2509 = vmatpush.msra.mxu0 0.0
    %2510 = vmatpush.msra.mxu0 0.0
    %2511 = vmatpush.msra.mxu0 0.0
    %2512 = vmatpush.msra.mxu0 0.0
    %2513 = vmatpush.msra.mxu0 0.0
    %2514 = vmatpush.msra.mxu0 0.0
    %2515 = vmatpush.msra.mxu0 0.0
    %2516 = vmatpush.msra.mxu0 0.0
    %2517 = vmatpush.msra.mxu0 %v1987
    %2518 = vmatpush.msra.mxu0 %v1986
    %2519 = vmatpush.msra.mxu0 %v1985
    %2520 = vmatpush.msra.mxu0 %v1984
    %2521 = vmatmul.f32.gmra.mxu0 %v2459
    %v2522 = vpop.f32.mrf.mxu0
    %v2523 = vadd.f32 0.0, %v2522
    %2524 = vdwg.mxu0
    %v2525 = vadd.f32 %v2504, %v2523
    %v2526 = vld [vmem:[%s928] sm:$0x3]
    %2527 = vmatpush.msra.mxu0 0.0
    %2528 = vmatpush.msra.mxu0 0.0
    %2529 = vmatpush.msra.mxu0 0.0
    %2530 = vmatpush.msra.mxu0 0.0
    %2531 = vmatpush.msra.mxu0 0.0
    %2532 = vmatpush.msra.mxu0 0.0
    %2533 = vmatpush.msra.mxu0 0.0
    %2534 = vmatpush.msra.mxu0 0.0
    %2535 = vmatpush.msra.mxu0 0.0
    %2536 = vmatpush.msra.mxu0 0.0
    %2537 = vmatpush.msra.mxu0 0.0
    %2538 = vmatpush.msra.mxu0 0.0
    %2539 = vmatpush.msra.mxu0 %v1992
    %2540 = vmatpush.msra.mxu0 %v1991
    %2541 = vmatpush.msra.mxu0 %v1990
    %2542 = vmatpush.msra.mxu0 %v1989
    %2543 = vmatmul.f32.gmra.mxu0 %v2459
    %v2544 = vpop.f32.mrf.mxu0
    %v2545 = vadd.f32 0.0, %v2544
    %2546 = vdwg.mxu0
    %v2547 = vadd.f32 %v2526, %v2545
    %v2548 = vxor.u32 %v2481, 2147483648
    %v2549 = vmul.f32 %v2548, 1.442695
    %v2550 = vpow.pop %v2549
    %v2551 = vadd.f32 %v2550, 1.0
    %v2552 = vrcp.pop %v2551
    %v2553 = vmul.f32 %v2551, %v2552
    %v2554 = vsub.f32 1.0, %v2553
    %v2555 = vmul.f32 %v2552, %v2554
    %v2556 = vadd.f32 %v2552, %v2555
    %vm2557 = vweird.f32 %v2551
    %vm2558 = vweird.f32 %v2552
    %vm2559 = vmor %vm2557, %vm2558
    %v2560 = vsel %vm2559, %v2552, %v2556
    %v2561 = vand.u32 2147483647, %v2551
    %vm2562 = vcmp.eq.f32.partialorder %v2561, 8.507059e+37
    %v2563 = vand.u32 %v2551, 2147483648
    %v2564 = vor.u32 1.1754944e-38, %v2563
    %v2565 = vsel %vm2562, %v2564, %v2560
    %v2566 = vmul.f32 1.0, %v2565
    %v2567 = vxor.u32 %v2503, 2147483648
    %v2568 = vmul.f32 %v2567, 1.442695
    %v2569 = vpow.pop %v2568
    %v2570 = vadd.f32 %v2569, 1.0
    %v2571 = vrcp.pop %v2570
    %v2572 = vmul.f32 %v2570, %v2571
    %v2573 = vsub.f32 1.0, %v2572
    %v2574 = vmul.f32 %v2571, %v2573
    %v2575 = vadd.f32 %v2571, %v2574
    %vm2576 = vweird.f32 %v2570
    %vm2577 = vweird.f32 %v2571
    %vm2578 = vmor %vm2576, %vm2577
    %v2579 = vsel %vm2578, %v2571, %v2575
    %v2580 = vand.u32 2147483647, %v2570
    %vm2581 = vcmp.eq.f32.partialorder %v2580, 8.507059e+37
    %v2582 = vand.u32 %v2570, 2147483648
    %v2583 = vor.u32 1.1754944e-38, %v2582
    %v2584 = vsel %vm2581, %v2583, %v2579
    %v2585 = vmul.f32 1.0, %v2584
    %v2586 = vtanh.pop %v2525
    %v2587 = vxor.u32 %v2547, 2147483648
    %v2588 = vmul.f32 %v2587, 1.442695
    %v2589 = vpow.pop %v2588
    %v2590 = vadd.f32 %v2589, 1.0
    %v2591 = vrcp.pop %v2590
    %v2592 = vmul.f32 %v2590, %v2591
    %v2593 = vsub.f32 1.0, %v2592
    %v2594 = vmul.f32 %v2591, %v2593
    %v2595 = vadd.f32 %v2591, %v2594
    %vm2596 = vweird.f32 %v2590
    %vm2597 = vweird.f32 %v2591
    %vm2598 = vmor %vm2596, %vm2597
    %v2599 = vsel %vm2598, %v2591, %v2595
    %v2600 = vand.u32 2147483647, %v2590
    %vm2601 = vcmp.eq.f32.partialorder %v2600, 8.507059e+37
    %v2602 = vand.u32 %v2590, 2147483648
    %v2603 = vor.u32 1.1754944e-38, %v2602
    %v2604 = vsel %vm2601, %v2603, %v2599
    %v2605 = vmul.f32 1.0, %v2604
    %v2606 = vmul.f32 %v2585, %v2452
    %v2607 = vmul.f32 %v2566, %v2586
    %v2608 = vadd.f32 %v2606, %v2607
    %v2609 = vtanh.pop %v2608
    %v2610 = vmul.f32 %v2605, %v2609
    %s2611 = scalar_lea.vmem [#allocation7], 6
    %2612 = vst.msk [vmem:[%s2611] sm:$0x3] %vm125, %v2610
    %v2613 = vld [vmem:[%s1016] sm:$0x3]
    %v2615 = vsel %vm83, %v2610, 0
    %2617 = vmatpush.msra.mxu0 0.0
    %2618 = vmatpush.msra.mxu0 0.0
    %2619 = vmatpush.msra.mxu0 0.0
    %2620 = vmatpush.msra.mxu0 0.0
    %2621 = vmatpush.msra.mxu0 0.0
    %2622 = vmatpush.msra.mxu0 0.0
    %2623 = vmatpush.msra.mxu0 0.0
    %2624 = vmatpush.msra.mxu0 0.0
    %2625 = vmatpush.msra.mxu0 0.0
    %2626 = vmatpush.msra.mxu0 0.0
    %2627 = vmatpush.msra.mxu0 0.0
    %2628 = vmatpush.msra.mxu0 0.0
    %2629 = vmatpush.msra.mxu0 %v1977
    %2630 = vmatpush.msra.mxu0 %v1976
    %2631 = vmatpush.msra.mxu0 %v1975
    %2632 = vmatpush.msra.mxu0 %v1974
    %2633 = vmatmul.f32.gmra.mxu0 %v2615
    %v2634 = vpop.f32.mrf.mxu0
    %v2635 = vadd.f32 0.0, %v2634
    %2636 = vdwg.mxu0
    %v2637 = vadd.f32 %v2613, %v2635
    %v2638 = vld [vmem:[%s1042] sm:$0x3]
    %2639 = vmatpush.msra.mxu0 0.0
    %2640 = vmatpush.msra.mxu0 0.0
    %2641 = vmatpush.msra.mxu0 0.0
    %2642 = vmatpush.msra.mxu0 0.0
    %2643 = vmatpush.msra.mxu0 0.0
    %2644 = vmatpush.msra.mxu0 0.0
    %2645 = vmatpush.msra.mxu0 0.0
    %2646 = vmatpush.msra.mxu0 0.0
    %2647 = vmatpush.msra.mxu0 0.0
    %2648 = vmatpush.msra.mxu0 0.0
    %2649 = vmatpush.msra.mxu0 0.0
    %2650 = vmatpush.msra.mxu0 0.0
    %2651 = vmatpush.msra.mxu0 %v1982
    %2652 = vmatpush.msra.mxu0 %v1981
    %2653 = vmatpush.msra.mxu0 %v1980
    %2654 = vmatpush.msra.mxu0 %v1979
    %2655 = vmatmul.f32.gmra.mxu0 %v2615
    %v2656 = vpop.f32.mrf.mxu0
    %v2657 = vadd.f32 0.0, %v2656
    %2658 = vdwg.mxu0
    %v2659 = vadd.f32 %v2638, %v2657
    %v2660 = vld [vmem:[%s1065] sm:$0x3]
    %2661 = vmatpush.msra.mxu0 0.0
    %2662 = vmatpush.msra.mxu0 0.0
    %2663 = vmatpush.msra.mxu0 0.0
    %2664 = vmatpush.msra.mxu0 0.0
    %2665 = vmatpush.msra.mxu0 0.0
    %2666 = vmatpush.msra.mxu0 0.0
    %2667 = vmatpush.msra.mxu0 0.0
    %2668 = vmatpush.msra.mxu0 0.0
    %2669 = vmatpush.msra.mxu0 0.0
    %2670 = vmatpush.msra.mxu0 0.0
    %2671 = vmatpush.msra.mxu0 0.0
    %2672 = vmatpush.msra.mxu0 0.0
    %2673 = vmatpush.msra.mxu0 %v1987
    %2674 = vmatpush.msra.mxu0 %v1986
    %2675 = vmatpush.msra.mxu0 %v1985
    %2676 = vmatpush.msra.mxu0 %v1984
    %2677 = vmatmul.f32.gmra.mxu0 %v2615
    %v2678 = vpop.f32.mrf.mxu0
    %v2679 = vadd.f32 0.0, %v2678
    %2680 = vdwg.mxu0
    %v2681 = vadd.f32 %v2660, %v2679
    %v2682 = vld [vmem:[%s1088] sm:$0x3]
    %2683 = vmatpush.msra.mxu0 0.0
    %2684 = vmatpush.msra.mxu0 0.0
    %2685 = vmatpush.msra.mxu0 0.0
    %2686 = vmatpush.msra.mxu0 0.0
    %2687 = vmatpush.msra.mxu0 0.0
    %2688 = vmatpush.msra.mxu0 0.0
    %2689 = vmatpush.msra.mxu0 0.0
    %2690 = vmatpush.msra.mxu0 0.0
    %2691 = vmatpush.msra.mxu0 0.0
    %2692 = vmatpush.msra.mxu0 0.0
    %2693 = vmatpush.msra.mxu0 0.0
    %2694 = vmatpush.msra.mxu0 0.0
    %2695 = vmatpush.msra.mxu0 %v1992
    %2696 = vmatpush.msra.mxu0 %v1991
    %2697 = vmatpush.msra.mxu0 %v1990
    %2698 = vmatpush.msra.mxu0 %v1989
    %2699 = vmatmul.f32.gmra.mxu0 %v2615
    %v2700 = vpop.f32.mrf.mxu0
    %v2701 = vadd.f32 0.0, %v2700
    %2702 = vdwg.mxu0
    %v2703 = vadd.f32 %v2682, %v2701
    %v2704 = vxor.u32 %v2637, 2147483648
    %v2705 = vmul.f32 %v2704, 1.442695
    %v2706 = vpow.pop %v2705
    %v2707 = vadd.f32 %v2706, 1.0
    %v2708 = vrcp.pop %v2707
    %v2709 = vmul.f32 %v2707, %v2708
    %v2710 = vsub.f32 1.0, %v2709
    %v2711 = vmul.f32 %v2708, %v2710
    %v2712 = vadd.f32 %v2708, %v2711
    %vm2713 = vweird.f32 %v2707
    %vm2714 = vweird.f32 %v2708
    %vm2715 = vmor %vm2713, %vm2714
    %v2716 = vsel %vm2715, %v2708, %v2712
    %v2717 = vand.u32 2147483647, %v2707
    %vm2718 = vcmp.eq.f32.partialorder %v2717, 8.507059e+37
    %v2719 = vand.u32 %v2707, 2147483648
    %v2720 = vor.u32 1.1754944e-38, %v2719
    %v2721 = vsel %vm2718, %v2720, %v2716
    %v2722 = vmul.f32 1.0, %v2721
    %v2723 = vxor.u32 %v2659, 2147483648
    %v2724 = vmul.f32 %v2723, 1.442695
    %v2725 = vpow.pop %v2724
    %v2726 = vadd.f32 %v2725, 1.0
    %v2727 = vrcp.pop %v2726
    %v2728 = vmul.f32 %v2726, %v2727
    %v2729 = vsub.f32 1.0, %v2728
    %v2730 = vmul.f32 %v2727, %v2729
    %v2731 = vadd.f32 %v2727, %v2730
    %vm2732 = vweird.f32 %v2726
    %vm2733 = vweird.f32 %v2727
    %vm2734 = vmor %vm2732, %vm2733
    %v2735 = vsel %vm2734, %v2727, %v2731
    %v2736 = vand.u32 2147483647, %v2726
    %vm2737 = vcmp.eq.f32.partialorder %v2736, 8.507059e+37
    %v2738 = vand.u32 %v2726, 2147483648
    %v2739 = vor.u32 1.1754944e-38, %v2738
    %v2740 = vsel %vm2737, %v2739, %v2735
    %v2741 = vmul.f32 1.0, %v2740
    %v2742 = vtanh.pop %v2681
    %v2743 = vxor.u32 %v2703, 2147483648
    %v2744 = vmul.f32 %v2743, 1.442695
    %v2745 = vpow.pop %v2744
    %v2746 = vadd.f32 %v2745, 1.0
    %v2747 = vrcp.pop %v2746
    %v2748 = vmul.f32 %v2746, %v2747
    %v2749 = vsub.f32 1.0, %v2748
    %v2750 = vmul.f32 %v2747, %v2749
    %v2751 = vadd.f32 %v2747, %v2750
    %vm2752 = vweird.f32 %v2746
    %vm2753 = vweird.f32 %v2747
    %vm2754 = vmor %vm2752, %vm2753
    %v2755 = vsel %vm2754, %v2747, %v2751
    %v2756 = vand.u32 2147483647, %v2746
    %vm2757 = vcmp.eq.f32.partialorder %v2756, 8.507059e+37
    %v2758 = vand.u32 %v2746, 2147483648
    %v2759 = vor.u32 1.1754944e-38, %v2758
    %v2760 = vsel %vm2757, %v2759, %v2755
    %v2761 = vmul.f32 1.0, %v2760
    %v2762 = vmul.f32 %v2741, %v2608
    %v2763 = vmul.f32 %v2722, %v2742
    %v2764 = vadd.f32 %v2762, %v2763
    %v2765 = vtanh.pop %v2764
    %v2766 = vmul.f32 %v2761, %v2765
    %s2767 = scalar_lea.vmem [#allocation7], 8
    %2768 = vst.msk [vmem:[%s2767] sm:$0x3] %vm125, %v2766
    %v2769 = vld [vmem:[%s1176] sm:$0x3]
    %v2771 = vsel %vm83, %v2766, 0
    %2773 = vmatpush.msra.mxu0 0.0
    %2774 = vmatpush.msra.mxu0 0.0
    %2775 = vmatpush.msra.mxu0 0.0
    %2776 = vmatpush.msra.mxu0 0.0
    %2777 = vmatpush.msra.mxu0 0.0
    %2778 = vmatpush.msra.mxu0 0.0
    %2779 = vmatpush.msra.mxu0 0.0
    %2780 = vmatpush.msra.mxu0 0.0
    %2781 = vmatpush.msra.mxu0 0.0
    %2782 = vmatpush.msra.mxu0 0.0
    %2783 = vmatpush.msra.mxu0 0.0
    %2784 = vmatpush.msra.mxu0 0.0
    %2785 = vmatpush.msra.mxu0 %v1977
    %2786 = vmatpush.msra.mxu0 %v1976
    %2787 = vmatpush.msra.mxu0 %v1975
    %2788 = vmatpush.msra.mxu0 %v1974
    %2789 = vmatmul.f32.gmra.mxu0 %v2771
    %v2790 = vpop.f32.mrf.mxu0
    %v2791 = vadd.f32 0.0, %v2790
    %2792 = vdwg.mxu0
    %v2793 = vadd.f32 %v2769, %v2791
    %v2794 = vld [vmem:[%s1202] sm:$0x3]
    %2795 = vmatpush.msra.mxu0 0.0
    %2796 = vmatpush.msra.mxu0 0.0
    %2797 = vmatpush.msra.mxu0 0.0
    %2798 = vmatpush.msra.mxu0 0.0
    %2799 = vmatpush.msra.mxu0 0.0
    %2800 = vmatpush.msra.mxu0 0.0
    %2801 = vmatpush.msra.mxu0 0.0
    %2802 = vmatpush.msra.mxu0 0.0
    %2803 = vmatpush.msra.mxu0 0.0
    %2804 = vmatpush.msra.mxu0 0.0
    %2805 = vmatpush.msra.mxu0 0.0
    %2806 = vmatpush.msra.mxu0 0.0
    %2807 = vmatpush.msra.mxu0 %v1982
    %2808 = vmatpush.msra.mxu0 %v1981
    %2809 = vmatpush.msra.mxu0 %v1980
    %2810 = vmatpush.msra.mxu0 %v1979
    %2811 = vmatmul.f32.gmra.mxu0 %v2771
    %v2812 = vpop.f32.mrf.mxu0
    %v2813 = vadd.f32 0.0, %v2812
    %2814 = vdwg.mxu0
    %v2815 = vadd.f32 %v2794, %v2813
    %v2816 = vld [vmem:[%s1225] sm:$0x3]
    %2817 = vmatpush.msra.mxu0 0.0
    %2818 = vmatpush.msra.mxu0 0.0
    %2819 = vmatpush.msra.mxu0 0.0
    %2820 = vmatpush.msra.mxu0 0.0
    %2821 = vmatpush.msra.mxu0 0.0
    %2822 = vmatpush.msra.mxu0 0.0
    %2823 = vmatpush.msra.mxu0 0.0
    %2824 = vmatpush.msra.mxu0 0.0
    %2825 = vmatpush.msra.mxu0 0.0
    %2826 = vmatpush.msra.mxu0 0.0
    %2827 = vmatpush.msra.mxu0 0.0
    %2828 = vmatpush.msra.mxu0 0.0
    %2829 = vmatpush.msra.mxu0 %v1987
    %2830 = vmatpush.msra.mxu0 %v1986
    %2831 = vmatpush.msra.mxu0 %v1985
    %2832 = vmatpush.msra.mxu0 %v1984
    %2833 = vmatmul.f32.gmra.mxu0 %v2771
    %v2834 = vpop.f32.mrf.mxu0
    %v2835 = vadd.f32 0.0, %v2834
    %2836 = vdwg.mxu0
    %v2837 = vadd.f32 %v2816, %v2835
    %v2838 = vld [vmem:[%s1248] sm:$0x3]
    %2839 = vmatpush.msra.mxu0 0.0
    %2840 = vmatpush.msra.mxu0 0.0
    %2841 = vmatpush.msra.mxu0 0.0
    %2842 = vmatpush.msra.mxu0 0.0
    %2843 = vmatpush.msra.mxu0 0.0
    %2844 = vmatpush.msra.mxu0 0.0
    %2845 = vmatpush.msra.mxu0 0.0
    %2846 = vmatpush.msra.mxu0 0.0
    %2847 = vmatpush.msra.mxu0 0.0
    %2848 = vmatpush.msra.mxu0 0.0
    %2849 = vmatpush.msra.mxu0 0.0
    %2850 = vmatpush.msra.mxu0 0.0
    %2851 = vmatpush.msra.mxu0 %v1992
    %2852 = vmatpush.msra.mxu0 %v1991
    %2853 = vmatpush.msra.mxu0 %v1990
    %2854 = vmatpush.msra.mxu0 %v1989
    %2855 = vmatmul.f32.gmra.mxu0 %v2771
    %v2856 = vpop.f32.mrf.mxu0
    %v2857 = vadd.f32 0.0, %v2856
    %2858 = vdwg.mxu0
    %v2859 = vadd.f32 %v2838, %v2857
    %v2860 = vxor.u32 %v2793, 2147483648
    %v2861 = vmul.f32 %v2860, 1.442695
    %v2862 = vpow.pop %v2861
    %v2863 = vadd.f32 %v2862, 1.0
    %v2864 = vrcp.pop %v2863
    %v2865 = vmul.f32 %v2863, %v2864
    %v2866 = vsub.f32 1.0, %v2865
    %v2867 = vmul.f32 %v2864, %v2866
    %v2868 = vadd.f32 %v2864, %v2867
    %vm2869 = vweird.f32 %v2863
    %vm2870 = vweird.f32 %v2864
    %vm2871 = vmor %vm2869, %vm2870
    %v2872 = vsel %vm2871, %v2864, %v2868
    %v2873 = vand.u32 2147483647, %v2863
    %vm2874 = vcmp.eq.f32.partialorder %v2873, 8.507059e+37
    %v2875 = vand.u32 %v2863, 2147483648
    %v2876 = vor.u32 1.1754944e-38, %v2875
    %v2877 = vsel %vm2874, %v2876, %v2872
    %v2878 = vmul.f32 1.0, %v2877
    %v2879 = vxor.u32 %v2815, 2147483648
    %v2880 = vmul.f32 %v2879, 1.442695
    %v2881 = vpow.pop %v2880
    %v2882 = vadd.f32 %v2881, 1.0
    %v2883 = vrcp.pop %v2882
    %v2884 = vmul.f32 %v2882, %v2883
    %v2885 = vsub.f32 1.0, %v2884
    %v2886 = vmul.f32 %v2883, %v2885
    %v2887 = vadd.f32 %v2883, %v2886
    %vm2888 = vweird.f32 %v2882
    %vm2889 = vweird.f32 %v2883
    %vm2890 = vmor %vm2888, %vm2889
    %v2891 = vsel %vm2890, %v2883, %v2887
    %v2892 = vand.u32 2147483647, %v2882
    %vm2893 = vcmp.eq.f32.partialorder %v2892, 8.507059e+37
    %v2894 = vand.u32 %v2882, 2147483648
    %v2895 = vor.u32 1.1754944e-38, %v2894
    %v2896 = vsel %vm2893, %v2895, %v2891
    %v2897 = vmul.f32 1.0, %v2896
    %v2898 = vtanh.pop %v2837
    %v2899 = vxor.u32 %v2859, 2147483648
    %v2900 = vmul.f32 %v2899, 1.442695
    %v2901 = vpow.pop %v2900
    %v2902 = vadd.f32 %v2901, 1.0
    %v2903 = vrcp.pop %v2902
    %v2904 = vmul.f32 %v2902, %v2903
    %v2905 = vsub.f32 1.0, %v2904
    %v2906 = vmul.f32 %v2903, %v2905
    %v2907 = vadd.f32 %v2903, %v2906
    %vm2908 = vweird.f32 %v2902
    %vm2909 = vweird.f32 %v2903
    %vm2910 = vmor %vm2908, %vm2909
    %v2911 = vsel %vm2910, %v2903, %v2907
    %v2912 = vand.u32 2147483647, %v2902
    %vm2913 = vcmp.eq.f32.partialorder %v2912, 8.507059e+37
    %v2914 = vand.u32 %v2902, 2147483648
    %v2915 = vor.u32 1.1754944e-38, %v2914
    %v2916 = vsel %vm2913, %v2915, %v2911
    %v2917 = vmul.f32 1.0, %v2916
    %v2918 = vmul.f32 %v2897, %v2764
    %v2919 = vmul.f32 %v2878, %v2898
    %v2920 = vadd.f32 %v2918, %v2919
    %v2921 = vtanh.pop %v2920
    %v2922 = vmul.f32 %v2917, %v2921
    %s2923 = scalar_lea.vmem [#allocation7], 10
    %2924 = vst.msk [vmem:[%s2923] sm:$0x3] %vm125, %v2922
    %v2925 = vld [vmem:[%s1336] sm:$0x3]
    %v2927 = vsel %vm83, %v2922, 0
    %2929 = vmatpush.msra.mxu0 0.0
    %2930 = vmatpush.msra.mxu0 0.0
    %2931 = vmatpush.msra.mxu0 0.0
    %2932 = vmatpush.msra.mxu0 0.0
    %2933 = vmatpush.msra.mxu0 0.0
    %2934 = vmatpush.msra.mxu0 0.0
    %2935 = vmatpush.msra.mxu0 0.0
    %2936 = vmatpush.msra.mxu0 0.0
    %2937 = vmatpush.msra.mxu0 0.0
    %2938 = vmatpush.msra.mxu0 0.0
    %2939 = vmatpush.msra.mxu0 0.0
    %2940 = vmatpush.msra.mxu0 0.0
    %2941 = vmatpush.msra.mxu0 %v1977
    %2942 = vmatpush.msra.mxu0 %v1976
    %2943 = vmatpush.msra.mxu0 %v1975
    %2944 = vmatpush.msra.mxu0 %v1974
    %2945 = vmatmul.f32.gmra.mxu0 %v2927
    %v2946 = vpop.f32.mrf.mxu0
    %v2947 = vadd.f32 0.0, %v2946
    %2948 = vdwg.mxu0
    %v2949 = vadd.f32 %v2925, %v2947
    %v2950 = vld [vmem:[%s1362] sm:$0x3]
    %2951 = vmatpush.msra.mxu0 0.0
    %2952 = vmatpush.msra.mxu0 0.0
    %2953 = vmatpush.msra.mxu0 0.0
    %2954 = vmatpush.msra.mxu0 0.0
    %2955 = vmatpush.msra.mxu0 0.0
    %2956 = vmatpush.msra.mxu0 0.0
    %2957 = vmatpush.msra.mxu0 0.0
    %2958 = vmatpush.msra.mxu0 0.0
    %2959 = vmatpush.msra.mxu0 0.0
    %2960 = vmatpush.msra.mxu0 0.0
    %2961 = vmatpush.msra.mxu0 0.0
    %2962 = vmatpush.msra.mxu0 0.0
    %2963 = vmatpush.msra.mxu0 %v1982
    %2964 = vmatpush.msra.mxu0 %v1981
    %2965 = vmatpush.msra.mxu0 %v1980
    %2966 = vmatpush.msra.mxu0 %v1979
    %2967 = vmatmul.f32.gmra.mxu0 %v2927
    %v2968 = vpop.f32.mrf.mxu0
    %v2969 = vadd.f32 0.0, %v2968
    %2970 = vdwg.mxu0
    %v2971 = vadd.f32 %v2950, %v2969
    %v2972 = vld [vmem:[%s1385] sm:$0x3]
    %2973 = vmatpush.msra.mxu0 0.0
    %2974 = vmatpush.msra.mxu0 0.0
    %2975 = vmatpush.msra.mxu0 0.0
    %2976 = vmatpush.msra.mxu0 0.0
    %2977 = vmatpush.msra.mxu0 0.0
    %2978 = vmatpush.msra.mxu0 0.0
    %2979 = vmatpush.msra.mxu0 0.0
    %2980 = vmatpush.msra.mxu0 0.0
    %2981 = vmatpush.msra.mxu0 0.0
    %2982 = vmatpush.msra.mxu0 0.0
    %2983 = vmatpush.msra.mxu0 0.0
    %2984 = vmatpush.msra.mxu0 0.0
    %2985 = vmatpush.msra.mxu0 %v1987
    %2986 = vmatpush.msra.mxu0 %v1986
    %2987 = vmatpush.msra.mxu0 %v1985
    %2988 = vmatpush.msra.mxu0 %v1984
    %2989 = vmatmul.f32.gmra.mxu0 %v2927
    %v2990 = vpop.f32.mrf.mxu0
    %v2991 = vadd.f32 0.0, %v2990
    %2992 = vdwg.mxu0
    %v2993 = vadd.f32 %v2972, %v2991
    %v2994 = vld [vmem:[%s1408] sm:$0x3]
    %2995 = vmatpush.msra.mxu0 0.0
    %2996 = vmatpush.msra.mxu0 0.0
    %2997 = vmatpush.msra.mxu0 0.0
    %2998 = vmatpush.msra.mxu0 0.0
    %2999 = vmatpush.msra.mxu0 0.0
    %3000 = vmatpush.msra.mxu0 0.0
    %3001 = vmatpush.msra.mxu0 0.0
    %3002 = vmatpush.msra.mxu0 0.0
    %3003 = vmatpush.msra.mxu0 0.0
    %3004 = vmatpush.msra.mxu0 0.0
    %3005 = vmatpush.msra.mxu0 0.0
    %3006 = vmatpush.msra.mxu0 0.0
    %3007 = vmatpush.msra.mxu0 %v1992
    %3008 = vmatpush.msra.mxu0 %v1991
    %3009 = vmatpush.msra.mxu0 %v1990
    %3010 = vmatpush.msra.mxu0 %v1989
    %3011 = vmatmul.f32.gmra.mxu0 %v2927
    %v3012 = vpop.f32.mrf.mxu0
    %v3013 = vadd.f32 0.0, %v3012
    %3014 = vdwg.mxu0
    %v3015 = vadd.f32 %v2994, %v3013
    %v3016 = vxor.u32 %v2949, 2147483648
    %v3017 = vmul.f32 %v3016, 1.442695
    %v3018 = vpow.pop %v3017
    %v3019 = vadd.f32 %v3018, 1.0
    %v3020 = vrcp.pop %v3019
    %v3021 = vmul.f32 %v3019, %v3020
    %v3022 = vsub.f32 1.0, %v3021
    %v3023 = vmul.f32 %v3020, %v3022
    %v3024 = vadd.f32 %v3020, %v3023
    %vm3025 = vweird.f32 %v3019
    %vm3026 = vweird.f32 %v3020
    %vm3027 = vmor %vm3025, %vm3026
    %v3028 = vsel %vm3027, %v3020, %v3024
    %v3029 = vand.u32 2147483647, %v3019
    %vm3030 = vcmp.eq.f32.partialorder %v3029, 8.507059e+37
    %v3031 = vand.u32 %v3019, 2147483648
    %v3032 = vor.u32 1.1754944e-38, %v3031
    %v3033 = vsel %vm3030, %v3032, %v3028
    %v3034 = vmul.f32 1.0, %v3033
    %v3035 = vxor.u32 %v2971, 2147483648
    %v3036 = vmul.f32 %v3035, 1.442695
    %v3037 = vpow.pop %v3036
    %v3038 = vadd.f32 %v3037, 1.0
    %v3039 = vrcp.pop %v3038
    %v3040 = vmul.f32 %v3038, %v3039
    %v3041 = vsub.f32 1.0, %v3040
    %v3042 = vmul.f32 %v3039, %v3041
    %v3043 = vadd.f32 %v3039, %v3042
    %vm3044 = vweird.f32 %v3038
    %vm3045 = vweird.f32 %v3039
    %vm3046 = vmor %vm3044, %vm3045
    %v3047 = vsel %vm3046, %v3039, %v3043
    %v3048 = vand.u32 2147483647, %v3038
    %vm3049 = vcmp.eq.f32.partialorder %v3048, 8.507059e+37
    %v3050 = vand.u32 %v3038, 2147483648
    %v3051 = vor.u32 1.1754944e-38, %v3050
    %v3052 = vsel %vm3049, %v3051, %v3047
    %v3053 = vmul.f32 1.0, %v3052
    %v3054 = vtanh.pop %v2993
    %v3055 = vxor.u32 %v3015, 2147483648
    %v3056 = vmul.f32 %v3055, 1.442695
    %v3057 = vpow.pop %v3056
    %v3058 = vadd.f32 %v3057, 1.0
    %v3059 = vrcp.pop %v3058
    %v3060 = vmul.f32 %v3058, %v3059
    %v3061 = vsub.f32 1.0, %v3060
    %v3062 = vmul.f32 %v3059, %v3061
    %v3063 = vadd.f32 %v3059, %v3062
    %vm3064 = vweird.f32 %v3058
    %vm3065 = vweird.f32 %v3059
    %vm3066 = vmor %vm3064, %vm3065
    %v3067 = vsel %vm3066, %v3059, %v3063
    %v3068 = vand.u32 2147483647, %v3058
    %vm3069 = vcmp.eq.f32.partialorder %v3068, 8.507059e+37
    %v3070 = vand.u32 %v3058, 2147483648
    %v3071 = vor.u32 1.1754944e-38, %v3070
    %v3072 = vsel %vm3069, %v3071, %v3067
    %v3073 = vmul.f32 1.0, %v3072
    %v3074 = vmul.f32 %v3053, %v2920
    %v3075 = vmul.f32 %v3034, %v3054
    %v3076 = vadd.f32 %v3074, %v3075
    %v3077 = vtanh.pop %v3076
    %v3078 = vmul.f32 %v3073, %v3077
    %s3079 = scalar_lea.vmem [#allocation7], 12
    %3080 = vst.msk [vmem:[%s3079] sm:$0x3] %vm125, %v3078
    %v3081 = vld [vmem:[%s1496] sm:$0x3]
    %v3083 = vsel %vm83, %v3078, 0
    %3085 = vmatpush.msra.mxu0 0.0
    %3086 = vmatpush.msra.mxu0 0.0
    %3087 = vmatpush.msra.mxu0 0.0
    %3088 = vmatpush.msra.mxu0 0.0
    %3089 = vmatpush.msra.mxu0 0.0
    %3090 = vmatpush.msra.mxu0 0.0
    %3091 = vmatpush.msra.mxu0 0.0
    %3092 = vmatpush.msra.mxu0 0.0
    %3093 = vmatpush.msra.mxu0 0.0
    %3094 = vmatpush.msra.mxu0 0.0
    %3095 = vmatpush.msra.mxu0 0.0
    %3096 = vmatpush.msra.mxu0 0.0
    %3097 = vmatpush.msra.mxu0 %v1977
    %3098 = vmatpush.msra.mxu0 %v1976
    %3099 = vmatpush.msra.mxu0 %v1975
    %3100 = vmatpush.msra.mxu0 %v1974
    %3101 = vmatmul.f32.gmra.mxu0 %v3083
    %v3102 = vpop.f32.mrf.mxu0
    %v3103 = vadd.f32 0.0, %v3102
    %3104 = vdwg.mxu0
    %v3105 = vadd.f32 %v3081, %v3103
    %v3106 = vld [vmem:[%s1522] sm:$0x3]
    %3107 = vmatpush.msra.mxu0 0.0
    %3108 = vmatpush.msra.mxu0 0.0
    %3109 = vmatpush.msra.mxu0 0.0
    %3110 = vmatpush.msra.mxu0 0.0
    %3111 = vmatpush.msra.mxu0 0.0
    %3112 = vmatpush.msra.mxu0 0.0
    %3113 = vmatpush.msra.mxu0 0.0
    %3114 = vmatpush.msra.mxu0 0.0
    %3115 = vmatpush.msra.mxu0 0.0
    %3116 = vmatpush.msra.mxu0 0.0
    %3117 = vmatpush.msra.mxu0 0.0
    %3118 = vmatpush.msra.mxu0 0.0
    %3119 = vmatpush.msra.mxu0 %v1982
    %3120 = vmatpush.msra.mxu0 %v1981
    %3121 = vmatpush.msra.mxu0 %v1980
    %3122 = vmatpush.msra.mxu0 %v1979
    %3123 = vmatmul.f32.gmra.mxu0 %v3083
    %v3124 = vpop.f32.mrf.mxu0
    %v3125 = vadd.f32 0.0, %v3124
    %3126 = vdwg.mxu0
    %v3127 = vadd.f32 %v3106, %v3125
    %v3128 = vld [vmem:[%s1545] sm:$0x3]
    %3129 = vmatpush.msra.mxu0 0.0
    %3130 = vmatpush.msra.mxu0 0.0
    %3131 = vmatpush.msra.mxu0 0.0
    %3132 = vmatpush.msra.mxu0 0.0
    %3133 = vmatpush.msra.mxu0 0.0
    %3134 = vmatpush.msra.mxu0 0.0
    %3135 = vmatpush.msra.mxu0 0.0
    %3136 = vmatpush.msra.mxu0 0.0
    %3137 = vmatpush.msra.mxu0 0.0
    %3138 = vmatpush.msra.mxu0 0.0
    %3139 = vmatpush.msra.mxu0 0.0
    %3140 = vmatpush.msra.mxu0 0.0
    %3141 = vmatpush.msra.mxu0 %v1987
    %3142 = vmatpush.msra.mxu0 %v1986
    %3143 = vmatpush.msra.mxu0 %v1985
    %3144 = vmatpush.msra.mxu0 %v1984
    %3145 = vmatmul.f32.gmra.mxu0 %v3083
    %v3146 = vpop.f32.mrf.mxu0
    %v3147 = vadd.f32 0.0, %v3146
    %3148 = vdwg.mxu0
    %v3149 = vadd.f32 %v3128, %v3147
    %v3150 = vld [vmem:[%s1568] sm:$0x3]
    %3151 = vmatpush.msra.mxu0 0.0
    %3152 = vmatpush.msra.mxu0 0.0
    %3153 = vmatpush.msra.mxu0 0.0
    %3154 = vmatpush.msra.mxu0 0.0
    %3155 = vmatpush.msra.mxu0 0.0
    %3156 = vmatpush.msra.mxu0 0.0
    %3157 = vmatpush.msra.mxu0 0.0
    %3158 = vmatpush.msra.mxu0 0.0
    %3159 = vmatpush.msra.mxu0 0.0
    %3160 = vmatpush.msra.mxu0 0.0
    %3161 = vmatpush.msra.mxu0 0.0
    %3162 = vmatpush.msra.mxu0 0.0
    %3163 = vmatpush.msra.mxu0 %v1992
    %3164 = vmatpush.msra.mxu0 %v1991
    %3165 = vmatpush.msra.mxu0 %v1990
    %3166 = vmatpush.msra.mxu0 %v1989
    %3167 = vmatmul.f32.gmra.mxu0 %v3083
    %v3168 = vpop.f32.mrf.mxu0
    %v3169 = vadd.f32 0.0, %v3168
    %3170 = vdwg.mxu0
    %v3171 = vadd.f32 %v3150, %v3169
    %v3172 = vxor.u32 %v3105, 2147483648
    %v3173 = vmul.f32 %v3172, 1.442695
    %v3174 = vpow.pop %v3173
    %v3175 = vadd.f32 %v3174, 1.0
    %v3176 = vrcp.pop %v3175
    %v3177 = vmul.f32 %v3175, %v3176
    %v3178 = vsub.f32 1.0, %v3177
    %v3179 = vmul.f32 %v3176, %v3178
    %v3180 = vadd.f32 %v3176, %v3179
    %vm3181 = vweird.f32 %v3175
    %vm3182 = vweird.f32 %v3176
    %vm3183 = vmor %vm3181, %vm3182
    %v3184 = vsel %vm3183, %v3176, %v3180
    %v3185 = vand.u32 2147483647, %v3175
    %vm3186 = vcmp.eq.f32.partialorder %v3185, 8.507059e+37
    %v3187 = vand.u32 %v3175, 2147483648
    %v3188 = vor.u32 1.1754944e-38, %v3187
    %v3189 = vsel %vm3186, %v3188, %v3184
    %v3190 = vmul.f32 1.0, %v3189
    %v3191 = vxor.u32 %v3127, 2147483648
    %v3192 = vmul.f32 %v3191, 1.442695
    %v3193 = vpow.pop %v3192
    %v3194 = vadd.f32 %v3193, 1.0
    %v3195 = vrcp.pop %v3194
    %v3196 = vmul.f32 %v3194, %v3195
    %v3197 = vsub.f32 1.0, %v3196
    %v3198 = vmul.f32 %v3195, %v3197
    %v3199 = vadd.f32 %v3195, %v3198
    %vm3200 = vweird.f32 %v3194
    %vm3201 = vweird.f32 %v3195
    %vm3202 = vmor %vm3200, %vm3201
    %v3203 = vsel %vm3202, %v3195, %v3199
    %v3204 = vand.u32 2147483647, %v3194
    %vm3205 = vcmp.eq.f32.partialorder %v3204, 8.507059e+37
    %v3206 = vand.u32 %v3194, 2147483648
    %v3207 = vor.u32 1.1754944e-38, %v3206
    %v3208 = vsel %vm3205, %v3207, %v3203
    %v3209 = vmul.f32 1.0, %v3208
    %v3210 = vtanh.pop %v3149
    %v3211 = vxor.u32 %v3171, 2147483648
    %v3212 = vmul.f32 %v3211, 1.442695
    %v3213 = vpow.pop %v3212
    %v3214 = vadd.f32 %v3213, 1.0
    %v3215 = vrcp.pop %v3214
    %v3216 = vmul.f32 %v3214, %v3215
    %v3217 = vsub.f32 1.0, %v3216
    %v3218 = vmul.f32 %v3215, %v3217
    %v3219 = vadd.f32 %v3215, %v3218
    %vm3220 = vweird.f32 %v3214
    %vm3221 = vweird.f32 %v3215
    %vm3222 = vmor %vm3220, %vm3221
    %v3223 = vsel %vm3222, %v3215, %v3219
    %v3224 = vand.u32 2147483647, %v3214
    %vm3225 = vcmp.eq.f32.partialorder %v3224, 8.507059e+37
    %v3226 = vand.u32 %v3214, 2147483648
    %v3227 = vor.u32 1.1754944e-38, %v3226
    %v3228 = vsel %vm3225, %v3227, %v3223
    %v3229 = vmul.f32 1.0, %v3228
    %v3230 = vmul.f32 %v3209, %v3076
    %v3231 = vmul.f32 %v3190, %v3210
    %v3232 = vadd.f32 %v3230, %v3231
    %v3233 = vtanh.pop %v3232
    %v3234 = vmul.f32 %v3229, %v3233
    %s3235 = scalar_lea.vmem [#allocation7], 14
    %3236 = vst.msk [vmem:[%s3235] sm:$0x3] %vm125, %v3234
    %v3237 = vld [vmem:[#allocation7] sm:$0x3]
    %v3238 = vld [vmem:[#allocation7 + $0x2] sm:$0x3]
    %v3239 = vld [vmem:[#allocation7 + $0x4] sm:$0x3]
    %v3240 = vld [vmem:[#allocation7 + $0x6] sm:$0x3]
    %v3241 = vld [vmem:[#allocation7 + $0x8] sm:$0x3]
    %v3242 = vld [vmem:[#allocation7 + $0xa] sm:$0x3]
    %v3243 = vld [vmem:[#allocation7 + $0xc] sm:$0x3]
    %v3244 = vld [vmem:[#allocation7 + $0xe] sm:$0x3]
    %v3245 = vld [vmem:[%s1] sm:$0x3]
    %v3246 = vld [vmem:[%s1 + $0x2] sm:$0x3]
    %v3247 = vld [vmem:[%s1 + $0x4] sm:$0x3]
    %v3248 = vld [vmem:[%s1 + $0x6] sm:$0x3]
    %v3249 = vld [vmem:[%s1 + $0x8] sm:$0x3]
    %v3250 = vld [vmem:[%s1 + $0xa] sm:$0x3]
    %v3251 = vld [vmem:[%s1 + $0xc] sm:$0x3]
    %v3252 = vld [vmem:[%s1 + $0xe] sm:$0x3]
    %v3253 = vld [vmem:[%s8] sm:$0xff]
    %v3254 = vld [vmem:[%s8 + $0x8] sm:$0xff]
    %v3255 = vld [vmem:[%s8 + $0x10] sm:$0xff]
    %v3256 = vld [vmem:[%s8 + $0x18] sm:$0xff]
    %v3257 = vld [vmem:[%s9] sm:$0xff]
    %v3258 = vld [vmem:[%s9 + $0x8] sm:$0xff]
    %v3259 = vld [vmem:[%s9 + $0x10] sm:$0xff]
    %v3260 = vld [vmem:[%s9 + $0x18] sm:$0xff]
    %v3261 = vld [vmem:[%s10] sm:$0xff]
    %v3262 = vld [vmem:[%s10 + $0x8] sm:$0xff]
    %v3263 = vld [vmem:[%s10 + $0x10] sm:$0xff]
    %v3264 = vld [vmem:[%s10 + $0x18] sm:$0xff]
    %v3273 = vrot.slane %v3238, 7
    %vm3274 = vcmask 1041409
    %v3275 = vsel %vm3274, %v3273, %v3237
    %v3276 = vrot.slane %v3239, 6
    %vm3277 = vcmask 1042434
    %v3278 = vsel %vm3277, %v3276, %v3275
    %v3279 = vrot.slane %v3240, 5
    %vm3280 = vcmask 1043459
    %v3281 = vsel %vm3280, %v3279, %v3278
    %v3282 = vrot.slane %v3241, 4
    %vm3283 = vcmask 1044484
    %v3284 = vsel %vm3283, %v3282, %v3281
    %v3285 = vrot.slane %v3242, 3
    %vm3286 = vcmask 1045509
    %v3287 = vsel %vm3286, %v3285, %v3284
    %v3288 = vrot.slane %v3243, 2
    %vm3289 = vcmask 1046534
    %v3290 = vsel %vm3289, %v3288, %v3287
    %v3291 = vrot.slane %v3244, 1
    %vm3292 = vcmask 1047559
    %v3293 = vsel %vm3292, %v3291, %v3290
    %v3294 = vsel %vm83, %v3293, 0
    %3296 = vmatpush.msra.mxu0 0.0
    %3297 = vmatpush.msra.mxu0 0.0
    %3298 = vmatpush.msra.mxu0 0.0
    %3299 = vmatpush.msra.mxu0 0.0
    %3300 = vmatpush.msra.mxu0 0.0
    %3301 = vmatpush.msra.mxu0 0.0
    %3302 = vmatpush.msra.mxu0 0.0
    %3303 = vmatpush.msra.mxu0 0.0
    %3304 = vmatpush.msra.mxu0 0.0
    %3305 = vmatpush.msra.mxu0 0.0
    %3306 = vmatpush.msra.mxu0 0.0
    %3307 = vmatpush.msra.mxu0 0.0
    %3308 = vmatpush.msra.mxu0 %v3256
    %3309 = vmatpush.msra.mxu0 %v3255
    %3310 = vmatpush.msra.mxu0 %v3254
    %3311 = vmatpush.msra.mxu0 %v3253
    %3312 = vmatmul.f32.gmra.mxu0 %v3294
    %v3313 = vpop.f32.mrf.mxu0
    %v3314 = vadd.f32 0.0, %v3313
    %3315 = vdwg.mxu0
    %v3324 = vrot.slane %v3246, 7
    %v3325 = vsel %vm3274, %v3324, %v3245
    %v3326 = vrot.slane %v3247, 6
    %v3327 = vsel %vm3277, %v3326, %v3325
    %v3328 = vrot.slane %v3248, 5
    %v3329 = vsel %vm3280, %v3328, %v3327
    %v3330 = vrot.slane %v3249, 4
    %v3331 = vsel %vm3283, %v3330, %v3329
    %v3332 = vrot.slane %v3250, 3
    %v3333 = vsel %vm3286, %v3332, %v3331
    %v3334 = vrot.slane %v3251, 2
    %v3335 = vsel %vm3289, %v3334, %v3333
    %v3336 = vrot.slane %v3252, 1
    %v3337 = vsel %vm3292, %v3336, %v3335
    %v3339 = vsel %vm83, %v3314, 0
    %v3341 = vsel %vm83, %v3337, 0
    %3343 = vmatpush.xpose.msra.mxu0 0.0
    %3344 = vmatpush.xpose.msra.mxu0 0.0
    %3345 = vmatpush.xpose.msra.mxu0 0.0
    %3346 = vmatpush.xpose.msra.mxu0 0.0
    %3347 = vmatpush.xpose.msra.mxu0 0.0
    %3348 = vmatpush.xpose.msra.mxu0 0.0
    %3349 = vmatpush.xpose.msra.mxu0 0.0
    %3350 = vmatpush.xpose.msra.mxu0 0.0
    %3351 = vmatpush.xpose.msra.mxu0 0.0
    %3352 = vmatpush.xpose.msra.mxu0 0.0
    %3353 = vmatpush.xpose.msra.mxu0 0.0
    %3354 = vmatpush.xpose.msra.mxu0 0.0
    %3355 = vmatpush.xpose.msra.mxu0 0.0
    %3356 = vmatpush.xpose.msra.mxu0 0.0
    %3357 = vmatpush.xpose.msra.mxu0 0.0
    %3358 = vmatpush.xpose.msra.mxu0 %v3341
    %3359 = vmatmul.f32.gmra.mxu0 %v3339
    %v3360 = vpop.f32.mrf.mxu0
    %v3361 = vadd.f32 0.0, %v3360
    %3362 = vdwg.mxu0
    %vm3363 = vcmask 64512
    %v3364 = vsel %vm3363, %v3361, -inf
    %3365 = vmax.xlane.f32.xlu0 %v3364
    %v3366 = vpop.xlane.xlu0 %3365
    %v3367 = vsub.f32 %v3361, %v3366
    %v3368 = vmul.f32 %v3367, 1.442695
    %v3369 = vpow.pop %v3368
    %v3370 = vsel %vm3363, %v3369, 0.0
    %3371 = vadd.xlane.f32.xlu0 %v3370
    %v3372 = vpop.xlane.xlu0 %3371
    %v3373 = vrcp.pop %v3372
    %v3374 = vmul.f32 %v3372, %v3373
    %v3375 = vsub.f32 2.0, %v3374
    %v3376 = vmul.f32 %v3373, %v3375
    %v3377 = vmul.f32 %v3369, %v3376
    %v3380 = vsel %vm3363, %v3377, 0
    %3382 = vmatpush.msra.mxu0 0.0
    %3383 = vmatpush.msra.mxu0 0.0
    %3384 = vmatpush.msra.mxu0 0.0
    %3385 = vmatpush.msra.mxu0 0.0
    %3386 = vmatpush.msra.mxu0 0.0
    %3387 = vmatpush.msra.mxu0 0.0
    %3388 = vmatpush.msra.mxu0 0.0
    %3389 = vmatpush.msra.mxu0 0.0
    %3390 = vmatpush.msra.mxu0 0.0
    %3391 = vmatpush.msra.mxu0 0.0
    %3392 = vmatpush.msra.mxu0 0.0
    %3393 = vmatpush.msra.mxu0 0.0
    %3394 = vmatpush.msra.mxu0 0.0
    %3395 = vmatpush.msra.mxu0 0.0
    %3396 = vmatpush.msra.mxu0 0.0
    %3397 = vmatpush.msra.mxu0 %v3337
    %3398 = vmatmul.f32.gmra.mxu0 %v3380
    %v3399 = vpop.f32.mrf.mxu0
    %v3400 = vadd.f32 0.0, %v3399
    %3401 = vdwg.mxu0
    %3402 = vmatpush.msra.mxu0 0.0
    %3403 = vmatpush.msra.mxu0 0.0
    %3404 = vmatpush.msra.mxu0 0.0
    %3405 = vmatpush.msra.mxu0 0.0
    %3406 = vmatpush.msra.mxu0 0.0
    %3407 = vmatpush.msra.mxu0 0.0
    %3408 = vmatpush.msra.mxu0 0.0
    %3409 = vmatpush.msra.mxu0 0.0
    %3410 = vmatpush.msra.mxu0 0.0
    %3411 = vmatpush.msra.mxu0 0.0
    %3412 = vmatpush.msra.mxu0 0.0
    %3413 = vmatpush.msra.mxu0 0.0
    %3414 = vmatpush.msra.mxu0 %v3264
    %3415 = vmatpush.msra.mxu0 %v3263
    %3416 = vmatpush.msra.mxu0 %v3262
    %3417 = vmatpush.msra.mxu0 %v3261
    %3418 = vmatmul.f32.gmra.mxu0 %v3294
    %v3419 = vpop.f32.mrf.mxu0
    %v3420 = vadd.f32 0.0, %v3419
    %3421 = vdwg.mxu0
    %v3423 = vsel %vm83, %v3400, 0
    %3425 = vmatpush.msra.mxu0 0.0
    %3426 = vmatpush.msra.mxu0 0.0
    %3427 = vmatpush.msra.mxu0 0.0
    %3428 = vmatpush.msra.mxu0 0.0
    %3429 = vmatpush.msra.mxu0 0.0
    %3430 = vmatpush.msra.mxu0 0.0
    %3431 = vmatpush.msra.mxu0 0.0
    %3432 = vmatpush.msra.mxu0 0.0
    %3433 = vmatpush.msra.mxu0 0.0
    %3434 = vmatpush.msra.mxu0 0.0
    %3435 = vmatpush.msra.mxu0 0.0
    %3436 = vmatpush.msra.mxu0 0.0
    %3437 = vmatpush.msra.mxu0 %v3260
    %3438 = vmatpush.msra.mxu0 %v3259
    %3439 = vmatpush.msra.mxu0 %v3258
    %3440 = vmatpush.msra.mxu0 %v3257
    %3441 = vmatmul.f32.gmra.mxu0 %v3423
    %v3442 = vpop.f32.mrf.mxu0
    %v3443 = vadd.f32 %v3420, %v3442
    %3444 = vdwg.mxu0
    %v3445 = vtanh.pop %v3443
    %v3446 = vrot.slane %v3237, 1
    %v3447 = vsel %vm3274, %v3238, %v3446
    %v3448 = vrot.slane %v3239, 7
    %v3449 = vsel %vm3277, %v3448, %v3447
    %v3450 = vrot.slane %v3240, 6
    %v3451 = vsel %vm3280, %v3450, %v3449
    %v3452 = vrot.slane %v3241, 5
    %v3453 = vsel %vm3283, %v3452, %v3451
    %v3454 = vrot.slane %v3242, 4
    %v3455 = vsel %vm3286, %v3454, %v3453
    %v3456 = vrot.slane %v3243, 3
    %v3457 = vsel %vm3289, %v3456, %v3455
    %v3458 = vrot.slane %v3244, 2
    %v3459 = vsel %vm3292, %v3458, %v3457
    %v3460 = vsel %vm83, %v3459, 0
    %3462 = vmatpush.msra.mxu0 0.0
    %3463 = vmatpush.msra.mxu0 0.0
    %3464 = vmatpush.msra.mxu0 0.0
    %3465 = vmatpush.msra.mxu0 0.0
    %3466 = vmatpush.msra.mxu0 0.0
    %3467 = vmatpush.msra.mxu0 0.0
    %3468 = vmatpush.msra.mxu0 0.0
    %3469 = vmatpush.msra.mxu0 0.0
    %3470 = vmatpush.msra.mxu0 0.0
    %3471 = vmatpush.msra.mxu0 0.0
    %3472 = vmatpush.msra.mxu0 0.0
    %3473 = vmatpush.msra.mxu0 0.0
    %3474 = vmatpush.msra.mxu0 %v3256
    %3475 = vmatpush.msra.mxu0 %v3255
    %3476 = vmatpush.msra.mxu0 %v3254
    %3477 = vmatpush.msra.mxu0 %v3253
    %3478 = vmatmul.f32.gmra.mxu0 %v3460
    %v3479 = vpop.f32.mrf.mxu0
    %v3480 = vadd.f32 0.0, %v3479
    %3481 = vdwg.mxu0
    %v3482 = vrot.slane %v3245, 1
    %v3483 = vsel %vm3274, %v3246, %v3482
    %v3484 = vrot.slane %v3247, 7
    %v3485 = vsel %vm3277, %v3484, %v3483
    %v3486 = vrot.slane %v3248, 6
    %v3487 = vsel %vm3280, %v3486, %v3485
    %v3488 = vrot.slane %v3249, 5
    %v3489 = vsel %vm3283, %v3488, %v3487
    %v3490 = vrot.slane %v3250, 4
    %v3491 = vsel %vm3286, %v3490, %v3489
    %v3492 = vrot.slane %v3251, 3
    %v3493 = vsel %vm3289, %v3492, %v3491
    %v3494 = vrot.slane %v3252, 2
    %v3495 = vsel %vm3292, %v3494, %v3493
    %v3497 = vsel %vm83, %v3480, 0
    %v3499 = vsel %vm83, %v3495, 0
    %3501 = vmatpush.xpose.msra.mxu0 0.0
    %3502 = vmatpush.xpose.msra.mxu0 0.0
    %3503 = vmatpush.xpose.msra.mxu0 0.0
    %3504 = vmatpush.xpose.msra.mxu0 0.0
    %3505 = vmatpush.xpose.msra.mxu0 0.0
    %3506 = vmatpush.xpose.msra.mxu0 0.0
    %3507 = vmatpush.xpose.msra.mxu0 0.0
    %3508 = vmatpush.xpose.msra.mxu0 0.0
    %3509 = vmatpush.xpose.msra.mxu0 0.0
    %3510 = vmatpush.xpose.msra.mxu0 0.0
    %3511 = vmatpush.xpose.msra.mxu0 0.0
    %3512 = vmatpush.xpose.msra.mxu0 0.0
    %3513 = vmatpush.xpose.msra.mxu0 0.0
    %3514 = vmatpush.xpose.msra.mxu0 0.0
    %3515 = vmatpush.xpose.msra.mxu0 0.0
    %3516 = vmatpush.xpose.msra.mxu0 %v3499
    %3517 = vmatmul.f32.gmra.mxu0 %v3497
    %v3518 = vpop.f32.mrf.mxu0
    %v3519 = vadd.f32 0.0, %v3518
    %3520 = vdwg.mxu0
    %v3521 = vsel %vm3363, %v3519, -inf
    %3522 = vmax.xlane.f32.xlu0 %v3521
    %v3523 = vpop.xlane.xlu0 %3522
    %v3524 = vsub.f32 %v3519, %v3523
    %v3525 = vmul.f32 %v3524, 1.442695
    %v3526 = vpow.pop %v3525
    %v3527 = vsel %vm3363, %v3526, 0.0
    %3528 = vadd.xlane.f32.xlu0 %v3527
    %v3529 = vpop.xlane.xlu0 %3528
    %v3530 = vrcp.pop %v3529
    %v3531 = vmul.f32 %v3529, %v3530
    %v3532 = vsub.f32 2.0, %v3531
    %v3533 = vmul.f32 %v3530, %v3532
    %v3534 = vmul.f32 %v3526, %v3533
    %v3537 = vsel %vm3363, %v3534, 0
    %3539 = vmatpush.msra.mxu0 0.0
    %3540 = vmatpush.msra.mxu0 0.0
    %3541 = vmatpush.msra.mxu0 0.0
    %3542 = vmatpush.msra.mxu0 0.0
    %3543 = vmatpush.msra.mxu0 0.0
    %3544 = vmatpush.msra.mxu0 0.0
    %3545 = vmatpush.msra.mxu0 0.0
    %3546 = vmatpush.msra.mxu0 0.0
    %3547 = vmatpush.msra.mxu0 0.0
    %3548 = vmatpush.msra.mxu0 0.0
    %3549 = vmatpush.msra.mxu0 0.0
    %3550 = vmatpush.msra.mxu0 0.0
    %3551 = vmatpush.msra.mxu0 0.0
    %3552 = vmatpush.msra.mxu0 0.0
    %3553 = vmatpush.msra.mxu0 0.0
    %3554 = vmatpush.msra.mxu0 %v3495
    %3555 = vmatmul.f32.gmra.mxu0 %v3537
    %v3556 = vpop.f32.mrf.mxu0
    %v3557 = vadd.f32 0.0, %v3556
    %3558 = vdwg.mxu0
    %3559 = vmatpush.msra.mxu0 0.0
    %3560 = vmatpush.msra.mxu0 0.0
    %3561 = vmatpush.msra.mxu0 0.0
    %3562 = vmatpush.msra.mxu0 0.0
    %3563 = vmatpush.msra.mxu0 0.0
    %3564 = vmatpush.msra.mxu0 0.0
    %3565 = vmatpush.msra.mxu0 0.0
    %3566 = vmatpush.msra.mxu0 0.0
    %3567 = vmatpush.msra.mxu0 0.0
    %3568 = vmatpush.msra.mxu0 0.0
    %3569 = vmatpush.msra.mxu0 0.0
    %3570 = vmatpush.msra.mxu0 0.0
    %3571 = vmatpush.msra.mxu0 %v3264
    %3572 = vmatpush.msra.mxu0 %v3263
    %3573 = vmatpush.msra.mxu0 %v3262
    %3574 = vmatpush.msra.mxu0 %v3261
    %3575 = vmatmul.f32.gmra.mxu0 %v3460
    %v3576 = vpop.f32.mrf.mxu0
    %v3577 = vadd.f32 0.0, %v3576
    %3578 = vdwg.mxu0
    %v3580 = vsel %vm83, %v3557, 0
    %3582 = vmatpush.msra.mxu0 0.0
    %3583 = vmatpush.msra.mxu0 0.0
    %3584 = vmatpush.msra.mxu0 0.0
    %3585 = vmatpush.msra.mxu0 0.0
    %3586 = vmatpush.msra.mxu0 0.0
    %3587 = vmatpush.msra.mxu0 0.0
    %3588 = vmatpush.msra.mxu0 0.0
    %3589 = vmatpush.msra.mxu0 0.0
    %3590 = vmatpush.msra.mxu0 0.0
    %3591 = vmatpush.msra.mxu0 0.0
    %3592 = vmatpush.msra.mxu0 0.0
    %3593 = vmatpush.msra.mxu0 0.0
    %3594 = vmatpush.msra.mxu0 %v3260
    %3595 = vmatpush.msra.mxu0 %v3259
    %3596 = vmatpush.msra.mxu0 %v3258
    %3597 = vmatpush.msra.mxu0 %v3257
    %3598 = vmatmul.f32.gmra.mxu0 %v3580
    %v3599 = vpop.f32.mrf.mxu0
    %v3600 = vadd.f32 %v3577, %v3599
    %3601 = vdwg.mxu0
    %v3602 = vtanh.pop %v3600
    %v3604 = vrot.slane %v3445, 1
    %v3605 = vrot.slane %v3445, 2
    %v3606 = vrot.slane %v3445, 3
    %v3607 = vrot.slane %v3445, 4
    %v3608 = vrot.slane %v3445, 5
    %v3609 = vrot.slane %v3445, 6
    %v3610 = vrot.slane %v3445, 7
    %v3619 = vrot.slane %v3602, 1
    %v3620 = vrot.slane %v3602, 2
    %v3621 = vrot.slane %v3602, 3
    %v3622 = vrot.slane %v3602, 4
    %v3623 = vrot.slane %v3602, 5
    %v3624 = vrot.slane %v3602, 6
    %v3625 = vrot.slane %v3602, 7
    %v3626 = vperm.slane %v3602, 0
    %v3627 = vperm.slane %v3619, 0
    %v3628 = vperm.slane %v3620, 0
    %v3629 = vperm.slane %v3621, 0
    %v3630 = vperm.slane %v3622, 0
    %v3631 = vperm.slane %v3623, 0
    %v3632 = vperm.slane %v3624, 0
    %v3633 = vperm.slane %v3625, 0
    %vm3642 = vcmask 1040384
    %v3643 = vsel %vm3642, %v3445, %v3626
    %v3644 = vsel %vm3642, %v3604, %v3627
    %v3645 = vsel %vm3642, %v3605, %v3628
    %v3646 = vsel %vm3642, %v3606, %v3629
    %v3647 = vsel %vm3642, %v3607, %v3630
    %v3648 = vsel %vm3642, %v3608, %v3631
    %v3649 = vsel %vm3642, %v3609, %v3632
    %v3650 = vsel %vm3642, %v3610, %v3633
    %3651 = vst.msk [vmem:[#allocation8] sm:$0x3] %vm125, %v3643
    %3652 = vst.msk [vmem:[#allocation8 + $0x2] sm:$0x3] %vm125, %v3644
    %3653 = vst.msk [vmem:[#allocation8 + $0x4] sm:$0x3] %vm125, %v3645
    %3654 = vst.msk [vmem:[#allocation8 + $0x6] sm:$0x3] %vm125, %v3646
    %3655 = vst.msk [vmem:[#allocation8 + $0x8] sm:$0x3] %vm125, %v3647
    %3656 = vst.msk [vmem:[#allocation8 + $0xa] sm:$0x3] %vm125, %v3648
    %3657 = vst.msk [vmem:[#allocation8 + $0xc] sm:$0x3] %vm125, %v3649
    %3658 = vst.msk [vmem:[#allocation8 + $0xe] sm:$0x3] %vm125, %v3650
    %v3659 = vrot.slane %v3377, 1
    %v3660 = vrot.slane %v3377, 2
    %v3661 = vrot.slane %v3377, 3
    %v3662 = vrot.slane %v3377, 4
    %v3663 = vrot.slane %v3377, 5
    %v3664 = vrot.slane %v3377, 6
    %v3665 = vrot.slane %v3377, 7
    %v3673 = vrot.slane %v3534, 1
    %v3674 = vrot.slane %v3534, 2
    %v3675 = vrot.slane %v3534, 3
    %v3676 = vrot.slane %v3534, 4
    %v3677 = vrot.slane %v3534, 5
    %v3678 = vrot.slane %v3534, 6
    %v3679 = vrot.slane %v3534, 7
    %v3680 = vperm.slane %v3534, 0
    %v3681 = vperm.slane %v3673, 0
    %v3682 = vperm.slane %v3674, 0
    %v3683 = vperm.slane %v3675, 0
    %v3684 = vperm.slane %v3676, 0
    %v3685 = vperm.slane %v3677, 0
    %v3686 = vperm.slane %v3678, 0
    %v3687 = vperm.slane %v3679, 0
    %v3696 = vsel %vm3642, %v3377, %v3680
    %v3697 = vsel %vm3642, %v3659, %v3681
    %v3698 = vsel %vm3642, %v3660, %v3682
    %v3699 = vsel %vm3642, %v3661, %v3683
    %v3700 = vsel %vm3642, %v3662, %v3684
    %v3701 = vsel %vm3642, %v3663, %v3685
    %v3702 = vsel %vm3642, %v3664, %v3686
    %v3703 = vsel %vm3642, %v3665, %v3687
    %vm3704 = vcmask 58368
    %3705 = vst.msk [vmem:[#allocation10] sm:$0x3] %vm3704, %v3696
    %3706 = vst.msk [vmem:[#allocation10 + $0x2] sm:$0x3] %vm3704, %v3697
    %3707 = vst.msk [vmem:[#allocation10 + $0x4] sm:$0x3] %vm3704, %v3698
    %3708 = vst.msk [vmem:[#allocation10 + $0x6] sm:$0x3] %vm3704, %v3699
    %3709 = vst.msk [vmem:[#allocation10 + $0x8] sm:$0x3] %vm3704, %v3700
    %3710 = vst.msk [vmem:[#allocation10 + $0xa] sm:$0x3] %vm3704, %v3701
    %3711 = vst.msk [vmem:[#allocation10 + $0xc] sm:$0x3] %vm3704, %v3702
    %3712 = vst.msk [vmem:[#allocation10 + $0xe] sm:$0x3] %vm3704, %v3703
    // Predicated region
    $region46: #{rnn_decoder_forward.1} parent=1 // pred_check
      _
    $region47: #{rnn_decoder_forward.1} parent=1 // pred_check_branch
      %3714 = sbr.rel (0) target = $region49
    $region48: #{rnn_decoder_forward.1} parent=1 // pred_region
      %3716 = vsyncadd [#allocation9], 0
      %s3717 = sshll.u32 [#allocation8], 4
      %s3718 = int_to_ptr.vmem [resolvable:$true] %s3717
      %s3719 = sshll.u32 %s11, 4
      %s3720 = int_to_ptr.hbm [resolvable:$true] %s3719
      %3725 = dma.vmem_to_hbm [thread:$0]  %s3718, 256, %s3720, [#allocation9], 32, 32, 2
    $region49: #{rnn_decoder_forward.1} parent=1 // pred_fallthru
      _
    // Predicated region
    $region50: #{rnn_decoder_forward.1} parent=1 // pred_check
      _
    $region51: #{rnn_decoder_forward.1} parent=1 // pred_check_branch
      %3727 = sbr.rel (0) target = $region53
    $region52: #{rnn_decoder_forward.1} parent=1 // pred_region
      %3729 = vsyncadd [#allocation11], 0
      %s3730 = sshll.u32 [#allocation10], 4
      %s3731 = int_to_ptr.vmem [resolvable:$true] %s3730
      %s3732 = sshll.u32 %s12, 4
      %s3733 = int_to_ptr.hbm [resolvable:$true] %s3732
      %3738 = dma.vmem_to_hbm [thread:$0]  %s3731, 256, %s3733, [#allocation11], 32, 32, 2
    $region53: #{rnn_decoder_forward.1} parent=1 // pred_fallthru
      _
    // Predicated region
    $region54: #{rnn_decoder_forward.1} parent=1 // pred_check
      _
    $region55: #{rnn_decoder_forward.1} parent=1 // pred_check_branch
      %3740 = sbr.rel (0) target = $region57
    $region56: #{rnn_decoder_forward.1} parent=1 // pred_region
      %3742 = dma.done [#allocation9], 256
    $region57: #{rnn_decoder_forward.1} parent=1 // pred_fallthru
      _
    // Predicated region
    $region58: #{rnn_decoder_forward.1} parent=1 // pred_check
      _
    $region59: #{rnn_decoder_forward.1} parent=1 // pred_check_branch
      %3744 = sbr.rel (0) target = $region61
    $region60: #{rnn_decoder_forward.1} parent=1 // pred_region
      %3746 = dma.done [#allocation11], 256
    $region61: #{rnn_decoder_forward.1} parent=1 // pred_fallthru
      _
    %3747 = vsyncpa [#allocation9], 1
    %3748 = vsyncpa [#allocation11], 1

</llo_original>
